<compile_context>
chip_gen: v7x
topology: tpu7x:2x2x1
jax: 0.10.0
libtpu: 0.0.40
codegen_flags: <defaults>
</compile_context>

<pallas_src>
from functools import partial

import jax
import jax.numpy as jnp
from jax.experimental import pallas as pl
from jax.experimental.pallas import tpu as pltpu

_ALIGN = 256   # base node-row alignment; all row/reduction tiles are multiples of it
_LANE = 128


def _round_up(v, m):
    return (v + m - 1) // m * m


def _pick_tiles(np_):
    """Row tile (tn) and reduction tile (tk) for the padded node count np_."""
    tk = 512 if np_ % 512 == 0 else 256
    tn = 256
    for cand in (1024, 512):
        # keep >= 2 row tiles so the "parallel" row axis can shard across both
        # TensorCores on v7x-style megacore parts.
        if np_ % cand == 0 and np_ // cand >= 2:
            tn = cand
            break
    return tn, tk


def _vmem_limit(block_bytes, scratch_bytes=0):
    """Scoped-VMEM budget: double-buffered blocks + scratch + generous headroom."""
    est = 2 * sum(block_bytes) + scratch_bytes
    return int(min(2 * est + (16 << 20), 56 << 20))   # cap below v7x's 64 MiB/TC


# ------------------------------ Pallas kernels ------------------------------

def _linear_kernel(x_ref, w_ref, b_ref, o_ref, *, relu):
    # bf16 MXU matmul with f32 accumulation; operands are zero-padded to lanes.
    y = jnp.dot(x_ref[...].astype(jnp.bfloat16), w_ref[...],
                preferred_element_type=jnp.float32)
    y = y + b_ref[...]
    if relu:
        y = jnp.maximum(y, 0.0)
    o_ref[...] = y


def linear_tiled(x, w_bf16, b, *, relu, tn):
    """y = x @ w + b (optional relu), tiled over rows. x:(Np,Fp) w:(Fp,Op) b:(Op,)."""
    n, f = x.shape
    o = w_bf16.shape[1]
    blocks = [tn * f * 4, f * o * 2, o * 4, tn * o * 4]
    return pl.pallas_call(
        partial(_linear_kernel, relu=relu),
        out_shape=jax.ShapeDtypeStruct((n, o), jnp.float32),
        grid_spec=pltpu.PrefetchScalarGridSpec(
            num_scalar_prefetch=0,
            grid=(n // tn,),
            in_specs=[
                pl.BlockSpec((tn, f), lambda i: (i, 0)),
                pl.BlockSpec((f, o), lambda i: (0, 0)),
                pl.BlockSpec((1, o), lambda i: (0, 0)),
            ],
            out_specs=pl.BlockSpec((tn, o), lambda i: (i, 0)),
        ),
        compiler_params=pltpu.CompilerParams(
            dimension_semantics=("parallel",),
            vmem_limit_bytes=_vmem_limit(blocks)),
    )(x, w_bf16, b.reshape(1, -1))


def _g2_prep_kernel(x_ref, w_ref, ns_ref, r_ref, *, s_in_pad, s_lane):
    """Build the bf16 slab  R = [ dinv * (X W_conv) | X (with ||x||^2 packed) ]."""
    x = x_ref[...]                                          # (tn, Hp) f32, pad lanes = 0
    ns = ns_ref[...]
    dinv = ns[:, 0:1]                                       # D^-1/2 of (A + I)
    z = dinv * jnp.dot(x.astype(jnp.bfloat16), w_ref[...],
                       preferred_element_type=jnp.float32)  # dinv * (X W_conv)
    s = jnp.sum(x * x, axis=1, keepdims=True)               # ||x_j||^2 (f32)
    if s_in_pad:
        # Pack ||x||^2 into a zero-padded lane of the X section -> no extra width.
        lane = jax.lax.broadcasted_iota(jnp.int32, x.shape, 1)
        xs = jnp.where(lane == s_lane, s, x)
        r = jnp.concatenate([z, xs], axis=1)
    else:
        # nhid is an exact multiple of 128: keep a dedicated 128-lane group.
        lane = jax.lax.broadcasted_iota(jnp.int32, (x.shape[0], _LANE), 1)
        s_slab = jnp.where(lane == 0, s, 0.0)
        r = jnp.concatenate([z, x, s_slab], axis=1)
    r_ref[...] = r.astype(jnp.bfloat16)


def g2_prep(x, w_conv_bf16, node_stats, *, hp, wr, tn, s_in_pad, s_lane):
    n = x.shape[0]
    blocks = [tn * hp * 4, hp * hp * 2, tn * 8 * 4, tn * wr * 2]
    return pl.pallas_call(
        partial(_g2_prep_kernel, s_in_pad=s_in_pad, s_lane=s_lane),
        out_shape=jax.ShapeDtypeStruct((n, wr), jnp.bfloat16),
        grid_spec=pltpu.PrefetchScalarGridSpec(
            num_scalar_prefetch=0,
            grid=(n // tn,),
            in_specs=[
                pl.BlockSpec((tn, hp), lambda i: (i, 0)),
                pl.BlockSpec((hp, hp), lambda i: (0, 0)),
                pl.BlockSpec((tn, 8), lambda i: (i, 0)),
            ],
            out_specs=pl.BlockSpec((tn, wr), lambda i: (i, 0)),
        ),
        compiler_params=pltpu.CompilerParams(
            dimension_semantics=("parallel",),
            vmem_limit_bytes=_vmem_limit(blocks)),
    )(x, w_conv_bf16, node_stats)


def _g2_layer_kernel(a_ref, rk_ref, x_ref, ns_ref, b_ref, o_ref, acc_ref, *, hp, s_col):
    k = pl.program_id(1)

    @pl.when(k == 0)
    def _():
        acc_ref[...] = jnp.zeros_like(acc_ref)

    # (A + I) is streamed as int8 (exact 0/1/2); cast on the VPU (hidden under the
    # DMA shadow) right before the bf16 MXU matmul — portable across v5e/v6e/v7x.
    a_bf16 = a_ref[...].astype(jnp.float32).astype(jnp.bfloat16)
    acc_ref[...] += jnp.dot(a_bf16, rk_ref[...], preferred_element_type=jnp.float32)

    @pl.when(k == pl.num_programs(1) - 1)
    def _():
        acc = acc_ref[...]                              # (tn, Wr) f32
        x = x_ref[...]                                  # (tn, Hp) f32
        ns = ns_ref[...]                                # (tn, 8)  f32
        dinv = ns[:, 0:1]                               # D^-1/2 of (A+I)
        deg = ns[:, 1:2]                                # out-degree (row scatter dim)
        invd = ns[:, 2:3]                               # 1/deg (0 if deg == 0)

        az = acc[:, 0:hp]                               # (A+I) @ (dinv * X W_conv)
        ax = acc[:, hp:2 * hp]                          # (A+I) @ X
        a_s = acc[:, s_col:s_col + 1]                   # (A+I) @ ||x||^2 (single column)

        # GCNConv + ReLU:  relu( D^-1/2 (A+I) D^-1/2 (X W) + b )
        x_agg = jnp.maximum(dinv * az + b_ref[...], 0.0)

        # G2 gate (p = 2), self-loop removed analytically:
        #   sum_j A_ij ||x_i - x_j||^2
        #     = (deg_i + 1)||x_i||^2 + ((A+I)||x||^2)_i - 2 x_i . ((A+I) X)_i
        # NOTE: expanded form with a bf16 slab can leave small cancellation noise;
        # clamp at 0 before the scatter-mean / tanh.
        si = jnp.sum(x * x, axis=1, keepdims=True)
        xax = jnp.sum(x * ax, axis=1, keepdims=True)
        gg = (deg + 1.0) * si + a_s - 2.0 * xax
        gg = jnp.maximum(gg, 0.0) * invd                # scatter-mean over row index
        tau = jnp.tanh(gg)

        o_ref[...] = (1.0 - tau) * x + tau * x_agg


def g2_layer(a_sl_i8, r_slab, x, node_stats, b_conv, *, hp, wr, tn, tk, s_col):
    n = x.shape[0]
    blocks = [tn * tk * 1, tk * wr * 2, tn * hp * 4, tn * 8 * 4, hp * 4, tn * hp * 4]
    scratch = tn * wr * 4
    return pl.pallas_call(
        partial(_g2_layer_kernel, hp=hp, s_col=s_col),
        out_shape=jax.ShapeDtypeStruct((n, hp), jnp.float32),
        grid_spec=pltpu.PrefetchScalarGridSpec(
            num_scalar_prefetch=0,
            grid=(n // tn, n // tk),
            in_specs=[
                pl.BlockSpec((tn, tk), lambda i, k: (i, k)),    # (A+I) tile, int8
                pl.BlockSpec((tk, wr), lambda i, k: (k, 0)),    # R slab (reduction axis)
                pl.BlockSpec((tn, hp), lambda i, k: (i, 0)),    # X rows (f32)
                pl.BlockSpec((tn, 8), lambda i, k: (i, 0)),     # per-node scalars
                pl.BlockSpec((1, hp), lambda i, k: (0, 0)),     # conv bias
            ],
            out_specs=pl.BlockSpec((tn, hp), lambda i, k: (i, 0)),
            scratch_shapes=[pltpu.VMEM((tn, wr), jnp.float32)],
        ),
        compiler_params=pltpu.CompilerParams(
            dimension_semantics=("parallel", "arbitrary"),
            vmem_limit_bytes=_vmem_limit(blocks, scratch)),
    )(a_sl_i8, r_slab, x, node_stats, b_conv.reshape(1, -1))


# ------------------------------ model wrapper --------------------------------

def g2_gnn_forward(x, edge_index, params, *, nlayers, p=2.0):
    if p != 2.0:
        # TODO(synk): general p != 2 needs the per-edge |x_i - x_j|^p formulation.
        raise NotImplementedError("only the default p=2.0 gate is implemented")

    n, f = x.shape
    h = params["w_enc"].shape[1]
    c = params["w_dec"].shape[1]

    np_ = _round_up(n, _ALIGN)
    tn, tk = _pick_tiles(np_)
    fp = _round_up(f, _LANE)
    hp = _round_up(h, _LANE)
    cp = _round_up(c, _LANE)

    if h % _LANE == 0:
        wr, s_in_pad, s_lane, s_col = 2 * hp + _LANE, False, 0, 2 * hp
    else:
        # ||x||^2 rides in the first zero-padded lane of the X section.
        wr, s_in_pad, s_lane, s_col = 2 * hp, True, h, hp + h

    # ---- graph prep (plain JAX glue; densify once, in int8) ----
    # NOTE: densifying edge_index collapses duplicate edges (simple-graph
    # assumption, as in the reference experiments).  For directed graphs PyG's
    # source->target flow corresponds to aggregating along A^T; the reference
    # graphs use symmetric edge_index so A == A^T here.
    row, col = edge_index[0], edge_index[1]
    a_i8 = jnp.zeros((np_, np_), jnp.int8).at[row, col].set(1)
    a_sl_i8 = a_i8 + jnp.eye(np_, dtype=jnp.int8)            # exact 0/1/2 values

    deg_raw = jnp.sum(a_i8, axis=1, dtype=jnp.int32).astype(jnp.float32)
    inv_deg = jnp.where(deg_raw > 0, 1.0 / deg_raw, 0.0)     # scatter-mean denominator
    dinv = jax.lax.rsqrt(deg_raw + 1.0)                      # D^-1/2 of (A + I)

    node_stats = jnp.zeros((np_, 8), jnp.float32)
    node_stats = node_stats.at[:, 0].set(dinv)
    node_stats = node_stats.at[:, 1].set(deg_raw)
    node_stats = node_stats.at[:, 2].set(inv_deg)

    # ---- pad parameters / inputs to lane-dense shapes (zero padding is inert) ----
    def pad2(m, r, cc):
        return jnp.zeros((r, cc), jnp.float32).at[:m.shape[0], :m.shape[1]].set(m)

    def pad1(v, ln):
        return jnp.zeros((ln,), jnp.float32).at[:v.shape[0]].set(v)

    x_p = pad2(x, np_, fp)
    w_enc = pad2(params["w_enc"], fp, hp).astype(jnp.bfloat16)
    b_enc = pad1(params["b_enc"], hp)
    w_conv = pad2(params["w_conv"], hp, hp).astype(jnp.bfloat16)
    b_conv = pad1(params["b_conv"], hp)
    w_dec = pad2(params["w_dec"], hp, cp).astype(jnp.bfloat16)
    b_dec = pad1(params["b_dec"], cp)

    # dropout(drop_in=0.0) -> identity
    X = linear_tiled(x_p, w_enc, b_enc, relu=True, tn=tn)    # (Np, Hp) f32

    for _ in range(nlayers):
        r_slab = g2_prep(X, w_conv, node_stats, hp=hp, wr=wr, tn=tn,
                         s_in_pad=s_in_pad, s_lane=s_lane)   # bf16 matmul operand
        X = g2_layer(a_sl_i8, r_slab, X, node_stats, b_conv,
                     hp=hp, wr=wr, tn=tn, tk=tk, s_col=s_col)

    # dropout(drop=0.0) -> identity
    out = linear_tiled(X, w_dec, b_dec, relu=False, tn=tn)   # (Np, Cp)
    return out[:n, :c]


# ----------------------------------- main -------------------------------------

if __name__ == "__main__":
    key = jax.random.PRNGKey(0)
    N, NFEAT, NHID, NCLASS, NLAYERS = 16, 32, 32, 8, 2
    P = 2.0

    ks = jax.random.split(key, 8)
    x = jax.random.normal(ks[0], (N, NFEAT), jnp.float32)

    # deterministic small undirected ring graph (edges in both directions)
    src = jnp.arange(N, dtype=jnp.int32)
    dst = (src + 1) % N
    edge_index = jnp.stack([jnp.concatenate([src, dst]),
                            jnp.concatenate([dst, src])])    # (2, 2N)

    params = {
        "w_enc": jax.random.normal(ks[1], (NFEAT, NHID), jnp.float32) / jnp.sqrt(NFEAT),
        "b_enc": 0.1 * jax.random.normal(ks[2], (NHID,), jnp.float32),
        "w_conv": jax.random.normal(ks[3], (NHID, NHID), jnp.float32) / jnp.sqrt(NHID),
        "b_conv": 0.1 * jax.random.normal(ks[4], (NHID,), jnp.float32),
        "w_dec": jax.random.normal(ks[5], (NHID, NCLASS), jnp.float32) / jnp.sqrt(NHID),
        "b_dec": 0.1 * jax.random.normal(ks[6], (NCLASS,), jnp.float32),
    }

    fwd = jax.jit(partial(g2_gnn_forward, nlayers=NLAYERS, p=P))
    out = fwd(x, edge_index, params)
    out = jax.block_until_ready(out)
    assert out.shape == (N, NCLASS) and out.dtype == jnp.float32
    assert bool(jnp.all(jnp.isfinite(out)))
    print("KERNEL_OK")
</pallas_src>

<mosaic_0001>
module attributes {stable_mosaic.version = 11 : i64} {
  func.func @_linear_kernel(%arg0: i32, %arg1: memref<256x128xf32, #tpu.memory_space<vmem>>, %arg2: memref<128x128xbf16, #tpu.memory_space<vmem>>, %arg3: memref<1x128xf32, #tpu.memory_space<vmem>>, %arg4: memref<256x128xf32, #tpu.memory_space<vmem>>) attributes {dimension_semantics = [#tpu.dimension_semantics<parallel>], iteration_bounds = array<i64: 1>, scalar_prefetch = 0 : i64, scratch_operands = 0 : i64, tpu.core_type = #tpu.core_type<tc>, window_params = [{transform_indices = @transform_0, window_bounds = array<i64: 256, 128>}, {pipeline_mode = #tpu.pipeline_mode<synchronous>, transform_indices = @transform_1, window_bounds = array<i64: 128, 128>}, {pipeline_mode = #tpu.pipeline_mode<synchronous>, transform_indices = @transform_2, window_bounds = array<i64: 1, 128>}, {transform_indices = @transform_3, window_bounds = array<i64: 256, 128>}]} {
    %c0 = arith.constant 0 : index
    %c0_0 = arith.constant 0 : index
    %0 = vector.load %arg1[%c0, %c0_0] : memref<256x128xf32, #tpu.memory_space<vmem>>, vector<256x128xf32>
    %1 = arith.truncf %0 : vector<256x128xf32> to vector<256x128xbf16>
    %c0_1 = arith.constant 0 : index
    %c0_2 = arith.constant 0 : index
    %2 = vector.load %arg2[%c0_1, %c0_2] : memref<128x128xbf16, #tpu.memory_space<vmem>>, vector<128x128xbf16>
    %cst = arith.constant dense<0.000000e+00> : vector<256x128xf32>
    %3 = tpu.matmul %1, %2, %cst {dimension_numbers = #tpu.dot_dimension_numbers<[1], [0], [0], [1], [0, 0, 1, 1], [], []>} : vector<256x128xbf16>, vector<128x128xbf16>, vector<256x128xf32> -> vector<256x128xf32>
    %c0_3 = arith.constant 0 : index
    %c0_4 = arith.constant 0 : index
    %4 = vector.load %arg3[%c0_3, %c0_4] : memref<1x128xf32, #tpu.memory_space<vmem>>, vector<1x128xf32>
    %5 = vector.broadcast %4 : vector<1x128xf32> to vector<256x128xf32>
    %6 = arith.addf %3, %5 : vector<256x128xf32>
    %cst_5 = arith.constant 0.000000e+00 : f32
    %7 = vector.broadcast %cst_5 : f32 to vector<256x128xf32>
    %8 = arith.maximumf %6, %7 : vector<256x128xf32>
    %c0_6 = arith.constant 0 : index
    %c0_7 = arith.constant 0 : index
    %9 = vector.load %arg4[%c0_6, %c0_7] : memref<256x128xf32, #tpu.memory_space<vmem>>, vector<256x128xf32>
    tpu.vector_store %arg4[%c0_6, %c0_7], %8 {strides = array<i32>} : memref<256x128xf32, #tpu.memory_space<vmem>>, vector<256x128xf32>,
    return
  }
  func.func @transform_0(%arg0: i32) -> (i32, i32) {
    %c0_i32 = arith.constant 0 : i32
    %c0_i32_0 = arith.constant 0 : i32
    return %arg0, %c0_i32 : i32, i32
  }
  func.func @transform_1(%arg0: i32) -> (i32, i32) {
    %c0_i32 = arith.constant 0 : i32
    %c0_i32_0 = arith.constant 0 : i32
    %c0_i32_1 = arith.constant 0 : i32
    return %c0_i32, %c0_i32_0 : i32, i32
  }
  func.func @transform_2(%arg0: i32) -> (i32, i32) {
    %c0_i32 = arith.constant 0 : i32
    %c0_i32_0 = arith.constant 0 : i32
    %c0_i32_1 = arith.constant 0 : i32
    return %c0_i32, %c0_i32_0 : i32, i32
  }
  func.func @transform_3(%arg0: i32) -> (i32, i32) {
    %c0_i32 = arith.constant 0 : i32
    %c0_i32_0 = arith.constant 0 : i32
    return %arg0, %c0_i32 : i32, i32
  }
}

module attributes {stable_mosaic.version = 11 : i64} {
  func.func @_g2_prep_kernel(%arg0: i32, %arg1: memref<256x128xf32, #tpu.memory_space<vmem>>, %arg2: memref<128x128xbf16, #tpu.memory_space<vmem>>, %arg3: memref<256x8xf32, #tpu.memory_space<vmem>>, %arg4: memref<256x256xbf16, #tpu.memory_space<vmem>>) attributes {dimension_semantics = [#tpu.dimension_semantics<parallel>], iteration_bounds = array<i64: 1>, scalar_prefetch = 0 : i64, scratch_operands = 0 : i64, tpu.core_type = #tpu.core_type<tc>, window_params = [{transform_indices = @transform_0, window_bounds = array<i64: 256, 128>}, {pipeline_mode = #tpu.pipeline_mode<synchronous>, transform_indices = @transform_1, window_bounds = array<i64: 128, 128>}, {transform_indices = @transform_2, window_bounds = array<i64: 256, 8>}, {transform_indices = @transform_3, window_bounds = array<i64: 256, 256>}]} {
    %c0 = arith.constant 0 : index
    %c0_0 = arith.constant 0 : index
    %0 = vector.load %arg1[%c0, %c0_0] : memref<256x128xf32, #tpu.memory_space<vmem>>, vector<256x128xf32>
    %c0_1 = arith.constant 0 : index
    %c0_2 = arith.constant 0 : index
    %1 = vector.load %arg3[%c0_1, %c0_2] : memref<256x8xf32, #tpu.memory_space<vmem>>, vector<256x8xf32>
    %2 = vector.extract_strided_slice %1 {offsets = [0, 0], sizes = [256, 1], strides = [1, 1]} : vector<256x8xf32> to vector<256x1xf32>
    %3 = arith.truncf %0 : vector<256x128xf32> to vector<256x128xbf16>
    %c0_3 = arith.constant 0 : index
    %c0_4 = arith.constant 0 : index
    %4 = vector.load %arg2[%c0_3, %c0_4] : memref<128x128xbf16, #tpu.memory_space<vmem>>, vector<128x128xbf16>
    %cst = arith.constant dense<0.000000e+00> : vector<256x128xf32>
    %5 = tpu.matmul %3, %4, %cst {dimension_numbers = #tpu.dot_dimension_numbers<[1], [0], [0], [1], [0, 0, 1, 1], [], []>} : vector<256x128xbf16>, vector<128x128xbf16>, vector<256x128xf32> -> vector<256x128xf32>
    %6 = vector.broadcast %2 : vector<256x1xf32> to vector<256x128xf32>
    %7 = arith.mulf %6, %5 : vector<256x128xf32>
    %8 = arith.mulf %0, %0 : vector<256x128xf32>
    %cst_5 = arith.constant dense<0.000000e+00> : vector<256xf32>
    %9 = vector.multi_reduction <add>, %8, %cst_5 [1] : vector<256x128xf32> to vector<256xf32>
    %10 = vector.shape_cast %9 : vector<256xf32> to vector<256x1xf32>
    %11 = tpu.iota {dimensions = array<i32: 1>} : vector<256x128xi32>
    %c32_i32 = arith.constant 32 : i32
    %12 = vector.broadcast %c32_i32 : i32 to vector<256x128xi32>
    %13 = arith.cmpi eq, %11, %12 : vector<256x128xi32>
    %14 = vector.shape_cast %10 : vector<256x1xf32> to vector<256x1xf32>
    %15 = vector.broadcast %14 : vector<256x1xf32> to vector<256x128xf32>
    %16 = arith.select %13, %15, %0 : vector<256x128xi1>, vector<256x128xf32>
    %17 = tpu.concatenate %7, %16 in 1 : vector<256x128xf32>, vector<256x128xf32> -> vector<256x256xf32>
    %18 = arith.truncf %17 : vector<256x256xf32> to vector<256x256xbf16>
    %c0_6 = arith.constant 0 : index
    %c0_7 = arith.constant 0 : index
    %19 = vector.load %arg4[%c0_6, %c0_7] : memref<256x256xbf16, #tpu.memory_space<vmem>>, vector<256x256xbf16>
    tpu.vector_store %arg4[%c0_6, %c0_7], %18 {strides = array<i32>} : memref<256x256xbf16, #tpu.memory_space<vmem>>, vector<256x256xbf16>,
    return
  }
  func.func @transform_0(%arg0: i32) -> (i32, i32) {
    %c0_i32 = arith.constant 0 : i32
    %c0_i32_0 = arith.constant 0 : i32
    return %arg0, %c0_i32 : i32, i32
  }
  func.func @transform_1(%arg0: i32) -> (i32, i32) {
    %c0_i32 = arith.constant 0 : i32
    %c0_i32_0 = arith.constant 0 : i32
    %c0_i32_1 = arith.constant 0 : i32
    return %c0_i32, %c0_i32_0 : i32, i32
  }
  func.func @transform_2(%arg0: i32) -> (i32, i32) {
    %c0_i32 = arith.constant 0 : i32
    %c0_i32_0 = arith.constant 0 : i32
    return %arg0, %c0_i32 : i32, i32
  }
  func.func @transform_3(%arg0: i32) -> (i32, i32) {
    %c0_i32 = arith.constant 0 : i32
    %c0_i32_0 = arith.constant 0 : i32
    return %arg0, %c0_i32 : i32, i32
  }
}

module attributes {stable_mosaic.version = 11 : i64} {
  func.func @_g2_layer_kernel(%arg0: i32, %arg1: i32, %arg2: memref<256x256xi8, #tpu.memory_space<vmem>>, %arg3: memref<256x256xbf16, #tpu.memory_space<vmem>>, %arg4: memref<256x128xf32, #tpu.memory_space<vmem>>, %arg5: memref<256x8xf32, #tpu.memory_space<vmem>>, %arg6: memref<1x128xf32, #tpu.memory_space<vmem>>, %arg7: memref<256x128xf32, #tpu.memory_space<vmem>>, %arg8: memref<256x256xf32, #tpu.memory_space<vmem>>) attributes {dimension_semantics = [#tpu.dimension_semantics<parallel>, #tpu.dimension_semantics<arbitrary>], iteration_bounds = array<i64: 1, 1>, scalar_prefetch = 0 : i64, scratch_operands = 1 : i64, tpu.core_type = #tpu.core_type<tc>, window_params = [{transform_indices = @transform_0, window_bounds = array<i64: 256, 256>}, {transform_indices = @transform_1, window_bounds = array<i64: 256, 256>}, {transform_indices = @transform_2, window_bounds = array<i64: 256, 128>}, {transform_indices = @transform_3, window_bounds = array<i64: 256, 8>}, {pipeline_mode = #tpu.pipeline_mode<synchronous>, transform_indices = @transform_4, window_bounds = array<i64: 1, 128>}, {transform_indices = @transform_5, window_bounds = array<i64: 256, 128>}]} {
    %c0_i32 = arith.constant 0 : i32
    %0 = arith.cmpi eq, %arg1, %c0_i32 : i32
    %1 = arith.extui %0 : i1 to i32
    %c0_i32_0 = arith.constant 0 : i32
    %2 = arith.cmpi ne, %1, %c0_i32_0 : i32
    scf.if %2 {
      %cst_10 = arith.constant 0.000000e+00 : f32
      %14 = vector.broadcast %cst_10 : f32 to vector<256x256xf32>
      %c0_11 = arith.constant 0 : index
      %c0_12 = arith.constant 0 : index
      %15 = vector.load %arg8[%c0_11, %c0_12] : memref<256x256xf32, #tpu.memory_space<vmem>>, vector<256x256xf32>
      tpu.vector_store %arg8[%c0_11, %c0_12], %14 {strides = array<i32>} : memref<256x256xf32, #tpu.memory_space<vmem>>, vector<256x256xf32>,
    } else {
    }
    %c0 = arith.constant 0 : index
    %c0_1 = arith.constant 0 : index
    %3 = vector.load %arg2[%c0, %c0_1] : memref<256x256xi8, #tpu.memory_space<vmem>>, vector<256x256xi8>
    %4 = arith.sitofp %3 : vector<256x256xi8> to vector<256x256xf32>
    %5 = arith.truncf %4 : vector<256x256xf32> to vector<256x256xbf16>
    %c0_2 = arith.constant 0 : index
    %c0_3 = arith.constant 0 : index
    %6 = vector.load %arg8[%c0_2, %c0_3] : memref<256x256xf32, #tpu.memory_space<vmem>>, vector<256x256xf32>
    %c0_4 = arith.constant 0 : index
    %c0_5 = arith.constant 0 : index
    %7 = vector.load %arg3[%c0_4, %c0_5] : memref<256x256xbf16, #tpu.memory_space<vmem>>, vector<256x256xbf16>
    %cst = arith.constant dense<0.000000e+00> : vector<256x256xf32>
    %8 = tpu.matmul %5, %7, %cst {dimension_numbers = #tpu.dot_dimension_numbers<[1], [0], [0], [1], [0, 0, 1, 1], [], []>} : vector<256x256xbf16>, vector<256x256xbf16>, vector<256x256xf32> -> vector<256x256xf32>
    %9 = arith.addf %6, %8 : vector<256x256xf32>
    %c0_6 = arith.constant 0 : index
    %c0_7 = arith.constant 0 : index
    %10 = vector.load %arg8[%c0_6, %c0_7] : memref<256x256xf32, #tpu.memory_space<vmem>>, vector<256x256xf32>
    tpu.vector_store %arg8[%c0_6, %c0_7], %9 {strides = array<i32>} : memref<256x256xf32, #tpu.memory_space<vmem>>, vector<256x256xf32>,
    %c0_i32_8 = arith.constant 0 : i32
    %11 = arith.cmpi eq, %arg1, %c0_i32_8 : i32
    %12 = arith.extui %11 : i1 to i32
    %c0_i32_9 = arith.constant 0 : i32
    %13 = arith.cmpi ne, %12, %c0_i32_9 : i32
    scf.if %13 {
      %c0_10 = arith.constant 0 : index
      %c0_11 = arith.constant 0 : index
      %14 = vector.load %arg8[%c0_10, %c0_11] : memref<256x256xf32, #tpu.memory_space<vmem>>, vector<256x256xf32>
      %c0_12 = arith.constant 0 : index
      %c0_13 = arith.constant 0 : index
      %15 = vector.load %arg4[%c0_12, %c0_13] : memref<256x128xf32, #tpu.memory_space<vmem>>, vector<256x128xf32>
      %c0_14 = arith.constant 0 : index
      %c0_15 = arith.constant 0 : index
      %16 = vector.load %arg5[%c0_14, %c0_15] : memref<256x8xf32, #tpu.memory_space<vmem>>, vector<256x8xf32>
      %17 = vector.extract_strided_slice %16 {offsets = [0, 0], sizes = [256, 1], strides = [1, 1]} : vector<256x8xf32> to vector<256x1xf32>
      %18 = vector.extract_strided_slice %16 {offsets = [0, 1], sizes = [256, 1], strides = [1, 1]} : vector<256x8xf32> to vector<256x1xf32>
      %19 = vector.extract_strided_slice %16 {offsets = [0, 2], sizes = [256, 1], strides = [1, 1]} : vector<256x8xf32> to vector<256x1xf32>
      %20 = vector.extract_strided_slice %14 {offsets = [0, 0], sizes = [256, 128], strides = [1, 1]} : vector<256x256xf32> to vector<256x128xf32>
      %21 = vector.extract_strided_slice %14 {offsets = [0, 128], sizes = [256, 128], strides = [1, 1]} : vector<256x256xf32> to vector<256x128xf32>
      %22 = vector.extract_strided_slice %14 {offsets = [0, 160], sizes = [256, 1], strides = [1, 1]} : vector<256x256xf32> to vector<256x1xf32>
      %23 = vector.broadcast %17 : vector<256x1xf32> to vector<256x128xf32>
      %24 = arith.mulf %23, %20 : vector<256x128xf32>
      %c0_16 = arith.constant 0 : index
      %c0_17 = arith.constant 0 : index
      %25 = vector.load %arg6[%c0_16, %c0_17] : memref<1x128xf32, #tpu.memory_space<vmem>>, vector<1x128xf32>
      %26 = vector.broadcast %25 : vector<1x128xf32> to vector<256x128xf32>
      %27 = arith.addf %24, %26 : vector<256x128xf32>
      %cst_18 = arith.constant 0.000000e+00 : f32
      %28 = vector.broadcast %cst_18 : f32 to vector<256x128xf32>
      %29 = arith.maximumf %27, %28 : vector<256x128xf32>
      %30 = arith.mulf %15, %15 : vector<256x128xf32>
      %cst_19 = arith.constant dense<0.000000e+00> : vector<256xf32>
      %31 = vector.multi_reduction <add>, %30, %cst_19 [1] : vector<256x128xf32> to vector<256xf32>
      %32 = vector.shape_cast %31 : vector<256xf32> to vector<256x1xf32>
      %33 = arith.mulf %15, %21 : vector<256x128xf32>
      %cst_20 = arith.constant dense<0.000000e+00> : vector<256xf32>
      %34 = vector.multi_reduction <add>, %33, %cst_20 [1] : vector<256x128xf32> to vector<256xf32>
      %35 = vector.shape_cast %34 : vector<256xf32> to vector<256x1xf32>
      %cst_21 = arith.constant 1.000000e+00 : f32
      %36 = vector.broadcast %cst_21 : f32 to vector<256x1xf32>
      %37 = arith.addf %18, %36 : vector<256x1xf32>
      %38 = arith.mulf %37, %32 : vector<256x1xf32>
      %39 = arith.addf %38, %22 : vector<256x1xf32>
      %cst_22 = arith.constant 2.000000e+00 : f32
      %40 = vector.broadcast %cst_22 : f32 to vector<256x1xf32>
      %41 = arith.mulf %40, %35 : vector<256x1xf32>
      %42 = arith.subf %39, %41 : vector<256x1xf32>
      %cst_23 = arith.constant 0.000000e+00 : f32
      %43 = vector.broadcast %cst_23 : f32 to vector<256x1xf32>
      %44 = arith.maximumf %42, %43 : vector<256x1xf32>
      %45 = arith.mulf %44, %19 : vector<256x1xf32>
      %46 = math.tanh %45 : vector<256x1xf32>
      %cst_24 = arith.constant 1.000000e+00 : f32
      %47 = vector.broadcast %cst_24 : f32 to vector<256x1xf32>
      %48 = arith.subf %47, %46 : vector<256x1xf32>
      %49 = vector.broadcast %48 : vector<256x1xf32> to vector<256x128xf32>
      %50 = arith.mulf %49, %15 : vector<256x128xf32>
      %51 = vector.broadcast %46 : vector<256x1xf32> to vector<256x128xf32>
      %52 = arith.mulf %51, %29 : vector<256x128xf32>
      %53 = arith.addf %50, %52 : vector<256x128xf32>
      %c0_25 = arith.constant 0 : index
      %c0_26 = arith.constant 0 : index
      %54 = vector.load %arg7[%c0_25, %c0_26] : memref<256x128xf32, #tpu.memory_space<vmem>>, vector<256x128xf32>
      tpu.vector_store %arg7[%c0_25, %c0_26], %53 {strides = array<i32>} : memref<256x128xf32, #tpu.memory_space<vmem>>, vector<256x128xf32>,
    } else {
    }
    return
  }
  func.func @transform_0(%arg0: i32, %arg1: i32) -> (i32, i32) {
    %c0_i32 = arith.constant 0 : i32
    return %arg0, %arg1 : i32, i32
  }
  func.func @transform_1(%arg0: i32, %arg1: i32) -> (i32, i32) {
    %c0_i32 = arith.constant 0 : i32
    %c0_i32_0 = arith.constant 0 : i32
    return %arg1, %c0_i32 : i32, i32
  }
  func.func @transform_2(%arg0: i32, %arg1: i32) -> (i32, i32) {
    %c0_i32 = arith.constant 0 : i32
    %c0_i32_0 = arith.constant 0 : i32
    return %arg0, %c0_i32 : i32, i32
  }
  func.func @transform_3(%arg0: i32, %arg1: i32) -> (i32, i32) {
    %c0_i32 = arith.constant 0 : i32
    %c0_i32_0 = arith.constant 0 : i32
    return %arg0, %c0_i32 : i32, i32
  }
  func.func @transform_4(%arg0: i32, %arg1: i32) -> (i32, i32) {
    %c0_i32 = arith.constant 0 : i32
    %c0_i32_0 = arith.constant 0 : i32
    %c0_i32_1 = arith.constant 0 : i32
    return %c0_i32, %c0_i32_0 : i32, i32
  }
  func.func @transform_5(%arg0: i32, %arg1: i32) -> (i32, i32) {
    %c0_i32 = arith.constant 0 : i32
    %c0_i32_0 = arith.constant 0 : i32
    return %arg0, %c0_i32 : i32, i32
  }
}

module attributes {stable_mosaic.version = 11 : i64} {
  func.func @_linear_kernel(%arg0: i32, %arg1: memref<256x128xf32, #tpu.memory_space<vmem>>, %arg2: memref<128x128xbf16, #tpu.memory_space<vmem>>, %arg3: memref<1x128xf32, #tpu.memory_space<vmem>>, %arg4: memref<256x128xf32, #tpu.memory_space<vmem>>) attributes {dimension_semantics = [#tpu.dimension_semantics<parallel>], iteration_bounds = array<i64: 1>, scalar_prefetch = 0 : i64, scratch_operands = 0 : i64, tpu.core_type = #tpu.core_type<tc>, window_params = [{transform_indices = @transform_0, window_bounds = array<i64: 256, 128>}, {pipeline_mode = #tpu.pipeline_mode<synchronous>, transform_indices = @transform_1, window_bounds = array<i64: 128, 128>}, {pipeline_mode = #tpu.pipeline_mode<synchronous>, transform_indices = @transform_2, window_bounds = array<i64: 1, 128>}, {transform_indices = @transform_3, window_bounds = array<i64: 256, 128>}]} {
    %c0 = arith.constant 0 : index
    %c0_0 = arith.constant 0 : index
    %0 = vector.load %arg1[%c0, %c0_0] : memref<256x128xf32, #tpu.memory_space<vmem>>, vector<256x128xf32>
    %1 = arith.truncf %0 : vector<256x128xf32> to vector<256x128xbf16>
    %c0_1 = arith.constant 0 : index
    %c0_2 = arith.constant 0 : index
    %2 = vector.load %arg2[%c0_1, %c0_2] : memref<128x128xbf16, #tpu.memory_space<vmem>>, vector<128x128xbf16>
    %cst = arith.constant dense<0.000000e+00> : vector<256x128xf32>
    %3 = tpu.matmul %1, %2, %cst {dimension_numbers = #tpu.dot_dimension_numbers<[1], [0], [0], [1], [0, 0, 1, 1], [], []>} : vector<256x128xbf16>, vector<128x128xbf16>, vector<256x128xf32> -> vector<256x128xf32>
    %c0_3 = arith.constant 0 : index
    %c0_4 = arith.constant 0 : index
    %4 = vector.load %arg3[%c0_3, %c0_4] : memref<1x128xf32, #tpu.memory_space<vmem>>, vector<1x128xf32>
    %5 = vector.broadcast %4 : vector<1x128xf32> to vector<256x128xf32>
    %6 = arith.addf %3, %5 : vector<256x128xf32>
    %c0_5 = arith.constant 0 : index
    %c0_6 = arith.constant 0 : index
    %7 = vector.load %arg4[%c0_5, %c0_6] : memref<256x128xf32, #tpu.memory_space<vmem>>, vector<256x128xf32>
    tpu.vector_store %arg4[%c0_5, %c0_6], %6 {strides = array<i32>} : memref<256x128xf32, #tpu.memory_space<vmem>>, vector<256x128xf32>,
    return
  }
  func.func @transform_0(%arg0: i32) -> (i32, i32) {
    %c0_i32 = arith.constant 0 : i32
    %c0_i32_0 = arith.constant 0 : i32
    return %arg0, %c0_i32 : i32, i32
  }
  func.func @transform_1(%arg0: i32) -> (i32, i32) {
    %c0_i32 = arith.constant 0 : i32
    %c0_i32_0 = arith.constant 0 : i32
    %c0_i32_1 = arith.constant 0 : i32
    return %c0_i32, %c0_i32_0 : i32, i32
  }
  func.func @transform_2(%arg0: i32) -> (i32, i32) {
    %c0_i32 = arith.constant 0 : i32
    %c0_i32_0 = arith.constant 0 : i32
    %c0_i32_1 = arith.constant 0 : i32
    return %c0_i32, %c0_i32_0 : i32, i32
  }
  func.func @transform_3(%arg0: i32) -> (i32, i32) {
    %c0_i32 = arith.constant 0 : i32
    %c0_i32_0 = arith.constant 0 : i32
    return %arg0, %c0_i32 : i32, i32
  }
}

</mosaic_0001>

<llo_original>
// kernel: g2_gnn_forward.6
$region0: #{g2_gnn_forward.6}
  #allocation0 [shape = 'u32[]', space=smem, size = 0x4, offset = 0x4, fixed_abs, tag = 'smem constant byte address 0x4 - core index']
  #allocation1 [shape = 'u32[144,128]{1,0:T(1,128)}', space=vmem, size = 0x12000, scoped, tag = 'internal scratch']
  %s0 = inlined_call_operand.vmem [shape: f32[256,128], index: 0, kind: input, shape index: {}]
  %s1 = inlined_call_operand.vmem [shape: bf16[128,128], index: 1, kind: input, shape index: {}]
  %s2 = inlined_call_operand.vmem [shape: f32[1,128], index: 2, kind: input, shape index: {}]
  %s3 = inlined_call_operand.vmem [shape: f32[256,128], index: 3, kind: output, shape index: {}]
  %s4 = sld [smem:[#allocation0]]
  $region22: #{g2_gnn_forward.6} parent=0
    _
  %s6 = ssub.s32 1, %s4
  %s7 = scalar_select 0, %s6, %s4
  // Predicated region
  $region2: #{g2_gnn_forward.6} parent=0 // pred_check
    _
  $region3: #{g2_gnn_forward.6} parent=0 // pred_check_branch
    %9 = sbr.rel (0) target = $region5
  $region4: #{g2_gnn_forward.6} parent=0 // pred_region
    _
  $region5: #{g2_gnn_forward.6} parent=0 // pred_fallthru
    _
  // Predicated region
  $region6: #{g2_gnn_forward.6} parent=0 // pred_check
    _
  $region7: #{g2_gnn_forward.6} parent=0 // pred_check_branch
    %11 = sbr.rel (0) target = $region9
  $region8: #{g2_gnn_forward.6} parent=0 // pred_region
    _
  $region9: #{g2_gnn_forward.6} parent=0 // pred_fallthru
    _
  // Predicated region
  $region10: #{g2_gnn_forward.6} parent=0 // pred_check
    _
  $region11: #{g2_gnn_forward.6} parent=0 // pred_check_branch
    %13 = sbr.rel (0) target = $region13
  $region12: #{g2_gnn_forward.6} parent=0 // pred_region
    _
  $region13: #{g2_gnn_forward.6} parent=0 // pred_fallthru
    _
  %v15 = vld [vmem:[%s0] sm:$0xff]
  %v16 = vld [vmem:[%s0 + $0x8] sm:$0xff]
  %v17 = vld [vmem:[%s0 + $0x10] sm:$0xff]
  %v18 = vld [vmem:[%s0 + $0x18] sm:$0xff]
  %v19 = vld [vmem:[%s0 + $0x20] sm:$0xff]
  %v20 = vld [vmem:[%s0 + $0x28] sm:$0xff]
  %v21 = vld [vmem:[%s0 + $0x30] sm:$0xff]
  %v22 = vld [vmem:[%s0 + $0x38] sm:$0xff]
  %v23 = vld [vmem:[%s0 + $0x40] sm:$0xff]
  %v24 = vld [vmem:[%s0 + $0x48] sm:$0xff]
  %v25 = vld [vmem:[%s0 + $0x50] sm:$0xff]
  %v26 = vld [vmem:[%s0 + $0x58] sm:$0xff]
  %v27 = vld [vmem:[%s0 + $0x60] sm:$0xff]
  %v28 = vld [vmem:[%s0 + $0x68] sm:$0xff]
  %v29 = vld [vmem:[%s0 + $0x70] sm:$0xff]
  %v30 = vld [vmem:[%s0 + $0x78] sm:$0xff]
  %v31 = vld [vmem:[%s0 + $0x80] sm:$0xff]
  %v32 = vld [vmem:[%s0 + $0x88] sm:$0xff]
  %v33 = vld [vmem:[%s0 + $0x90] sm:$0xff]
  %v34 = vld [vmem:[%s0 + $0x98] sm:$0xff]
  %v35 = vld [vmem:[%s0 + $0xa0] sm:$0xff]
  %v36 = vld [vmem:[%s0 + $0xa8] sm:$0xff]
  %v37 = vld [vmem:[%s0 + $0xb0] sm:$0xff]
  %v38 = vld [vmem:[%s0 + $0xb8] sm:$0xff]
  %v39 = vld [vmem:[%s0 + $0xc0] sm:$0xff]
  %v40 = vld [vmem:[%s0 + $0xc8] sm:$0xff]
  %v41 = vld [vmem:[%s0 + $0xd0] sm:$0xff]
  %v42 = vld [vmem:[%s0 + $0xd8] sm:$0xff]
  %v43 = vld [vmem:[%s0 + $0xe0] sm:$0xff]
  %v44 = vld [vmem:[%s0 + $0xe8] sm:$0xff]
  %v45 = vld [vmem:[%s0 + $0xf0] sm:$0xff]
  %v46 = vld [vmem:[%s0 + $0xf8] sm:$0xff]
  %v47 = vpack.c.bf16 %v16, %v15
  %v48 = vpack.c.bf16 %v18, %v17
  %v49 = vpack.c.bf16 %v20, %v19
  %v50 = vpack.c.bf16 %v22, %v21
  %v51 = vpack.c.bf16 %v24, %v23
  %v52 = vpack.c.bf16 %v26, %v25
  %v53 = vpack.c.bf16 %v28, %v27
  %v54 = vpack.c.bf16 %v30, %v29
  %v55 = vpack.c.bf16 %v32, %v31
  %v56 = vpack.c.bf16 %v34, %v33
  %v57 = vpack.c.bf16 %v36, %v35
  %v58 = vpack.c.bf16 %v38, %v37
  %v59 = vpack.c.bf16 %v40, %v39
  %v60 = vpack.c.bf16 %v42, %v41
  %v61 = vpack.c.bf16 %v44, %v43
  %v62 = vpack.c.bf16 %v46, %v45
  %v63 = vld [vmem:[%s1] sm:$0xf]
  %v64 = vld [vmem:[%s1 + $0x4] sm:$0xf]
  %v65 = vld [vmem:[%s1 + $0x8] sm:$0xf]
  %v66 = vld [vmem:[%s1 + $0xc] sm:$0xf]
  %v67 = vld [vmem:[%s1 + $0x10] sm:$0xf]
  %v68 = vld [vmem:[%s1 + $0x14] sm:$0xf]
  %v69 = vld [vmem:[%s1 + $0x18] sm:$0xf]
  %v70 = vld [vmem:[%s1 + $0x1c] sm:$0xf]
  %v71 = vld [vmem:[%s1 + $0x20] sm:$0xf]
  %v72 = vld [vmem:[%s1 + $0x24] sm:$0xf]
  %v73 = vld [vmem:[%s1 + $0x28] sm:$0xf]
  %v74 = vld [vmem:[%s1 + $0x2c] sm:$0xf]
  %v75 = vld [vmem:[%s1 + $0x30] sm:$0xf]
  %v76 = vld [vmem:[%s1 + $0x34] sm:$0xf]
  %v77 = vld [vmem:[%s1 + $0x38] sm:$0xf]
  %v78 = vld [vmem:[%s1 + $0x3c] sm:$0xf]
  %v79 = vld [vmem:[%s2] sm:$0x1]
  %v81 = vlaneseq
  %v82 = vshrl.u32 %v81, 7
  %v83 = vsub.s32 0, %v82
  %v84 = vrot.slane %v79, %v83
  %v102 = vunpack.c.l.b16 %v63
  %v103 = vunpack.c.l.b16 %v64
  %v104 = vunpack.c.l.b16 %v65
  %v105 = vunpack.c.l.b16 %v66
  %v106 = vunpack.c.l.b16 %v67
  %v107 = vunpack.c.l.b16 %v68
  %v108 = vunpack.c.l.b16 %v69
  %v109 = vunpack.c.l.b16 %v70
  %v110 = vunpack.c.l.b16 %v71
  %v111 = vunpack.c.l.b16 %v72
  %v112 = vunpack.c.l.b16 %v73
  %v113 = vunpack.c.l.b16 %v74
  %v114 = vunpack.c.l.b16 %v75
  %v115 = vunpack.c.l.b16 %v76
  %v116 = vunpack.c.l.b16 %v77
  %v117 = vunpack.c.l.b16 %v78
  %v118 = vpack.c.b16 %v103, %v102
  %v119 = vpack.c.b16 %v105, %v104
  %v120 = vpack.c.b16 %v107, %v106
  %v121 = vpack.c.b16 %v109, %v108
  %v122 = vpack.c.b16 %v111, %v110
  %v123 = vpack.c.b16 %v113, %v112
  %v124 = vpack.c.b16 %v115, %v114
  %v125 = vpack.c.b16 %v117, %v116
  %134 = vmatprep.subr.bf16.mxu0 0
  %135 = vmatpush1.bf16.msra.mxu0 %v118
  %136 = vmatprep.subr.bf16.mxu0 0
  %137 = vmatpush1.bf16.msra.mxu0 %v119
  %138 = vmatprep.subr.bf16.mxu0 0
  %139 = vmatpush1.bf16.msra.mxu0 %v120
  %140 = vmatprep.subr.bf16.mxu0 0
  %141 = vmatpush1.bf16.msra.mxu0 %v121
  %142 = vmatprep.subr.bf16.mxu0 0
  %143 = vmatpush1.bf16.msra.mxu0 %v122
  %144 = vmatprep.subr.bf16.mxu0 0
  %145 = vmatpush1.bf16.msra.mxu0 %v123
  %146 = vmatprep.subr.bf16.mxu0 0
  %147 = vmatpush1.bf16.msra.mxu0 %v124
  %148 = vmatprep.subr.bf16.mxu0 0
  %149 = vmatpush1.bf16.msra.mxu0 %v125
  %150 = vmatprep.subr.bf16.mxu0 0
  %151 = vmatpush1.bf16.msra.mxu0 0
  %152 = vmatprep.subr.bf16.mxu0 0
  %153 = vmatpush1.bf16.msra.mxu0 0
  %154 = vmatprep.subr.bf16.mxu0 0
  %155 = vmatpush1.bf16.msra.mxu0 0
  %156 = vmatprep.subr.bf16.mxu0 0
  %157 = vmatpush1.bf16.msra.mxu0 0
  %158 = vmatprep.subr.bf16.mxu0 0
  %159 = vmatpush1.bf16.msra.mxu0 0
  %160 = vmatprep.subr.bf16.mxu0 0
  %161 = vmatpush1.bf16.msra.mxu0 0
  %162 = vmatprep.subr.bf16.mxu0 0
  %163 = vmatpush1.bf16.msra.mxu0 0
  %164 = vmatprep.subr.bf16.mxu0 0
  %165 = vmatpush1.bf16.msra.mxu0 0
  %166 = vmatprep.mubr.bf16.mxu0 0
  %167 = vmatmul.mubr.bf16.gmra.mrb[0].mxu0 %v47
  %v168 = vpop.f32.mrb[0].mxu0
  %v169 = vadd.f32 %v84, %v168
  %v170 = vpop.f32.mrb[0].mxu0
  %v171 = vpop.f32.mrb[0].mxu0
  %v172 = vadd.f32 %v84, %v171
  %v173 = vpop.f32.mrb[0].mxu0
  %174 = vmatprep.mubr.bf16.mxu0 0
  %175 = vmatmul.mubr.bf16.gmra.mrb[0].mxu0 %v48
  %v176 = vpop.f32.mrb[0].mxu0
  %v177 = vadd.f32 %v84, %v176
  %v178 = vpop.f32.mrb[0].mxu0
  %v179 = vpop.f32.mrb[0].mxu0
  %v180 = vadd.f32 %v84, %v179
  %v181 = vpop.f32.mrb[0].mxu0
  %182 = vmatprep.mubr.bf16.mxu0 0
  %183 = vmatmul.mubr.bf16.gmra.mrb[0].mxu0 %v49
  %v184 = vpop.f32.mrb[0].mxu0
  %v185 = vadd.f32 %v84, %v184
  %v186 = vpop.f32.mrb[0].mxu0
  %v187 = vpop.f32.mrb[0].mxu0
  %v188 = vadd.f32 %v84, %v187
  %v189 = vpop.f32.mrb[0].mxu0
  %190 = vmatprep.mubr.bf16.mxu0 0
  %191 = vmatmul.mubr.bf16.gmra.mrb[0].mxu0 %v50
  %v192 = vpop.f32.mrb[0].mxu0
  %v193 = vadd.f32 %v84, %v192
  %v194 = vpop.f32.mrb[0].mxu0
  %v195 = vpop.f32.mrb[0].mxu0
  %v196 = vadd.f32 %v84, %v195
  %v197 = vpop.f32.mrb[0].mxu0
  %198 = vmatprep.mubr.bf16.mxu0 0
  %199 = vmatmul.mubr.bf16.gmra.mrb[0].mxu0 %v51
  %v200 = vpop.f32.mrb[0].mxu0
  %v201 = vadd.f32 %v84, %v200
  %v202 = vpop.f32.mrb[0].mxu0
  %v203 = vpop.f32.mrb[0].mxu0
  %v204 = vadd.f32 %v84, %v203
  %v205 = vpop.f32.mrb[0].mxu0
  %206 = vmatprep.mubr.bf16.mxu0 0
  %207 = vmatmul.mubr.bf16.gmra.mrb[0].mxu0 %v52
  %v208 = vpop.f32.mrb[0].mxu0
  %v209 = vadd.f32 %v84, %v208
  %v210 = vpop.f32.mrb[0].mxu0
  %v211 = vpop.f32.mrb[0].mxu0
  %v212 = vadd.f32 %v84, %v211
  %v213 = vpop.f32.mrb[0].mxu0
  %214 = vmatprep.mubr.bf16.mxu0 0
  %215 = vmatmul.mubr.bf16.gmra.mrb[0].mxu0 %v53
  %v216 = vpop.f32.mrb[0].mxu0
  %v217 = vadd.f32 %v84, %v216
  %v218 = vpop.f32.mrb[0].mxu0
  %v219 = vpop.f32.mrb[0].mxu0
  %v220 = vadd.f32 %v84, %v219
  %v221 = vpop.f32.mrb[0].mxu0
  %222 = vmatprep.mubr.bf16.mxu0 0
  %223 = vmatmul.mubr.bf16.gmra.mrb[0].mxu0 %v54
  %v224 = vpop.f32.mrb[0].mxu0
  %v225 = vadd.f32 %v84, %v224
  %v226 = vpop.f32.mrb[0].mxu0
  %v227 = vpop.f32.mrb[0].mxu0
  %v228 = vadd.f32 %v84, %v227
  %v229 = vpop.f32.mrb[0].mxu0
  %230 = vmatprep.mubr.bf16.mxu0 0
  %231 = vmatmul.mubr.bf16.gmra.mrb[0].mxu0 %v55
  %v232 = vpop.f32.mrb[0].mxu0
  %v233 = vadd.f32 %v84, %v232
  %v234 = vpop.f32.mrb[0].mxu0
  %v235 = vpop.f32.mrb[0].mxu0
  %v236 = vadd.f32 %v84, %v235
  %v237 = vpop.f32.mrb[0].mxu0
  %238 = vmatprep.mubr.bf16.mxu0 0
  %239 = vmatmul.mubr.bf16.gmra.mrb[0].mxu0 %v56
  %v240 = vpop.f32.mrb[0].mxu0
  %v241 = vadd.f32 %v84, %v240
  %v242 = vpop.f32.mrb[0].mxu0
  %v243 = vpop.f32.mrb[0].mxu0
  %v244 = vadd.f32 %v84, %v243
  %v245 = vpop.f32.mrb[0].mxu0
  %246 = vmatprep.mubr.bf16.mxu0 0
  %247 = vmatmul.mubr.bf16.gmra.mrb[0].mxu0 %v57
  %v248 = vpop.f32.mrb[0].mxu0
  %v249 = vadd.f32 %v84, %v248
  %v250 = vpop.f32.mrb[0].mxu0
  %v251 = vpop.f32.mrb[0].mxu0
  %v252 = vadd.f32 %v84, %v251
  %v253 = vpop.f32.mrb[0].mxu0
  %254 = vmatprep.mubr.bf16.mxu0 0
  %255 = vmatmul.mubr.bf16.gmra.mrb[0].mxu0 %v58
  %v256 = vpop.f32.mrb[0].mxu0
  %v257 = vadd.f32 %v84, %v256
  %v258 = vpop.f32.mrb[0].mxu0
  %v259 = vpop.f32.mrb[0].mxu0
  %v260 = vadd.f32 %v84, %v259
  %v261 = vpop.f32.mrb[0].mxu0
  %262 = vmatprep.mubr.bf16.mxu0 0
  %263 = vmatmul.mubr.bf16.gmra.mrb[0].mxu0 %v59
  %v264 = vpop.f32.mrb[0].mxu0
  %v265 = vadd.f32 %v84, %v264
  %v266 = vpop.f32.mrb[0].mxu0
  %v267 = vpop.f32.mrb[0].mxu0
  %v268 = vadd.f32 %v84, %v267
  %v269 = vpop.f32.mrb[0].mxu0
  %270 = vmatprep.mubr.bf16.mxu0 0
  %271 = vmatmul.mubr.bf16.gmra.mrb[0].mxu0 %v60
  %v272 = vpop.f32.mrb[0].mxu0
  %v273 = vadd.f32 %v84, %v272
  %v274 = vpop.f32.mrb[0].mxu0
  %v275 = vpop.f32.mrb[0].mxu0
  %v276 = vadd.f32 %v84, %v275
  %v277 = vpop.f32.mrb[0].mxu0
  %278 = vmatprep.mubr.bf16.mxu0 0
  %279 = vmatmul.mubr.bf16.gmra.mrb[0].mxu0 %v61
  %v280 = vpop.f32.mrb[0].mxu0
  %v281 = vadd.f32 %v84, %v280
  %v282 = vpop.f32.mrb[0].mxu0
  %v283 = vpop.f32.mrb[0].mxu0
  %v284 = vadd.f32 %v84, %v283
  %v285 = vpop.f32.mrb[0].mxu0
  %286 = vmatprep.mubr.bf16.mxu0 0
  %287 = vmatmul.mubr.bf16.gmra.mrb[0].mxu0 %v62
  %v288 = vpop.f32.mrb[0].mxu0
  %v289 = vadd.f32 %v84, %v288
  %v290 = vpop.f32.mrb[0].mxu0
  %v291 = vpop.f32.mrb[0].mxu0
  %v292 = vadd.f32 %v84, %v291
  %v293 = vpop.f32.mrb[0].mxu0
  %294 = vdwg.mxu0
  %v295 = vmax.f32 %v169, 0.0
  %v296 = vmax.f32 %v172, 0.0
  %v297 = vmax.f32 %v177, 0.0
  %v298 = vmax.f32 %v180, 0.0
  %v299 = vmax.f32 %v185, 0.0
  %v300 = vmax.f32 %v188, 0.0
  %v301 = vmax.f32 %v193, 0.0
  %v302 = vmax.f32 %v196, 0.0
  %v303 = vmax.f32 %v201, 0.0
  %v304 = vmax.f32 %v204, 0.0
  %v305 = vmax.f32 %v209, 0.0
  %v306 = vmax.f32 %v212, 0.0
  %v307 = vmax.f32 %v217, 0.0
  %v308 = vmax.f32 %v220, 0.0
  %v309 = vmax.f32 %v225, 0.0
  %v310 = vmax.f32 %v228, 0.0
  %v311 = vmax.f32 %v233, 0.0
  %v312 = vmax.f32 %v236, 0.0
  %v313 = vmax.f32 %v241, 0.0
  %v314 = vmax.f32 %v244, 0.0
  %v315 = vmax.f32 %v249, 0.0
  %v316 = vmax.f32 %v252, 0.0
  %v317 = vmax.f32 %v257, 0.0
  %v318 = vmax.f32 %v260, 0.0
  %v319 = vmax.f32 %v265, 0.0
  %v320 = vmax.f32 %v268, 0.0
  %v321 = vmax.f32 %v273, 0.0
  %v322 = vmax.f32 %v276, 0.0
  %v323 = vmax.f32 %v281, 0.0
  %v324 = vmax.f32 %v284, 0.0
  %v325 = vmax.f32 %v289, 0.0
  %v326 = vmax.f32 %v292, 0.0
  %327 = vst [vmem:[%s3] sm:$0xff] %v295
  %328 = vst [vmem:[%s3 + $0x8] sm:$0xff] %v296
  %329 = vst [vmem:[%s3 + $0x10] sm:$0xff] %v297
  %330 = vst [vmem:[%s3 + $0x18] sm:$0xff] %v298
  %331 = vst [vmem:[%s3 + $0x20] sm:$0xff] %v299
  %332 = vst [vmem:[%s3 + $0x28] sm:$0xff] %v300
  %333 = vst [vmem:[%s3 + $0x30] sm:$0xff] %v301
  %334 = vst [vmem:[%s3 + $0x38] sm:$0xff] %v302
  %335 = vst [vmem:[%s3 + $0x40] sm:$0xff] %v303
  %336 = vst [vmem:[%s3 + $0x48] sm:$0xff] %v304
  %337 = vst [vmem:[%s3 + $0x50] sm:$0xff] %v305
  %338 = vst [vmem:[%s3 + $0x58] sm:$0xff] %v306
  %339 = vst [vmem:[%s3 + $0x60] sm:$0xff] %v307
  %340 = vst [vmem:[%s3 + $0x68] sm:$0xff] %v308
  %341 = vst [vmem:[%s3 + $0x70] sm:$0xff] %v309
  %342 = vst [vmem:[%s3 + $0x78] sm:$0xff] %v310
  %343 = vst [vmem:[%s3 + $0x80] sm:$0xff] %v311
  %344 = vst [vmem:[%s3 + $0x88] sm:$0xff] %v312
  %345 = vst [vmem:[%s3 + $0x90] sm:$0xff] %v313
  %346 = vst [vmem:[%s3 + $0x98] sm:$0xff] %v314
  %347 = vst [vmem:[%s3 + $0xa0] sm:$0xff] %v315
  %348 = vst [vmem:[%s3 + $0xa8] sm:$0xff] %v316
  %349 = vst [vmem:[%s3 + $0xb0] sm:$0xff] %v317
  %350 = vst [vmem:[%s3 + $0xb8] sm:$0xff] %v318
  %351 = vst [vmem:[%s3 + $0xc0] sm:$0xff] %v319
  %352 = vst [vmem:[%s3 + $0xc8] sm:$0xff] %v320
  %353 = vst [vmem:[%s3 + $0xd0] sm:$0xff] %v321
  %354 = vst [vmem:[%s3 + $0xd8] sm:$0xff] %v322
  %355 = vst [vmem:[%s3 + $0xe0] sm:$0xff] %v323
  %356 = vst [vmem:[%s3 + $0xe8] sm:$0xff] %v324
  %357 = vst [vmem:[%s3 + $0xf0] sm:$0xff] %v325
  %358 = vst [vmem:[%s3 + $0xf8] sm:$0xff] %v326
  // Predicated region
  $region14: #{g2_gnn_forward.6} parent=0 // pred_check
    _
  $region15: #{g2_gnn_forward.6} parent=0 // pred_check_branch
    %360 = sbr.rel (0) target = $region17
  $region16: #{g2_gnn_forward.6} parent=0 // pred_region
    _
  $region17: #{g2_gnn_forward.6} parent=0 // pred_fallthru
    _
  // Predicated region
  $region18: #{g2_gnn_forward.6} parent=0 // pred_check
    _
  $region19: #{g2_gnn_forward.6} parent=0 // pred_check_branch
    %362 = sbr.rel (0) target = $region21
  $region20: #{g2_gnn_forward.6} parent=0 // pred_region
    _
  $region21: #{g2_gnn_forward.6} parent=0 // pred_fallthru
    _

// kernel: g2_gnn_forward.7
$region0: #{g2_gnn_forward.7}
  #allocation0 [shape = 'u32[]', space=smem, size = 0x4, offset = 0x4, fixed_abs, tag = 'smem constant byte address 0x4 - core index']
  #allocation1 [shape = 'u32[144,128]{1,0:T(1,128)}', space=vmem, size = 0x12000, scoped, tag = 'internal scratch']
  %s0 = inlined_call_operand.vmem [shape: f32[256,128], index: 0, kind: input, shape index: {}]
  %s1 = inlined_call_operand.vmem [shape: bf16[128,128], index: 1, kind: input, shape index: {}]
  %s2 = inlined_call_operand.vmem [shape: f32[256,8], index: 2, kind: input, shape index: {}]
  %s3 = inlined_call_operand.vmem [shape: bf16[256,256], index: 3, kind: output, shape index: {}]
  %s4 = sld [smem:[#allocation0]]
  $region22: #{g2_gnn_forward.7} parent=0
    _
  %s6 = ssub.s32 1, %s4
  %s7 = scalar_select 0, %s6, %s4
  // Predicated region
  $region2: #{g2_gnn_forward.7} parent=0 // pred_check
    _
  $region3: #{g2_gnn_forward.7} parent=0 // pred_check_branch
    %9 = sbr.rel (0) target = $region5
  $region4: #{g2_gnn_forward.7} parent=0 // pred_region
    _
  $region5: #{g2_gnn_forward.7} parent=0 // pred_fallthru
    _
  // Predicated region
  $region6: #{g2_gnn_forward.7} parent=0 // pred_check
    _
  $region7: #{g2_gnn_forward.7} parent=0 // pred_check_branch
    %11 = sbr.rel (0) target = $region9
  $region8: #{g2_gnn_forward.7} parent=0 // pred_region
    _
  $region9: #{g2_gnn_forward.7} parent=0 // pred_fallthru
    _
  // Predicated region
  $region10: #{g2_gnn_forward.7} parent=0 // pred_check
    _
  $region11: #{g2_gnn_forward.7} parent=0 // pred_check_branch
    %13 = sbr.rel (0) target = $region13
  $region12: #{g2_gnn_forward.7} parent=0 // pred_region
    _
  $region13: #{g2_gnn_forward.7} parent=0 // pred_fallthru
    _
  %v15 = vld [vmem:[%s0] sm:$0xff]
  %v16 = vld [vmem:[%s0 + $0x8] sm:$0xff]
  %v17 = vld [vmem:[%s0 + $0x10] sm:$0xff]
  %v18 = vld [vmem:[%s0 + $0x18] sm:$0xff]
  %v19 = vld [vmem:[%s0 + $0x20] sm:$0xff]
  %v20 = vld [vmem:[%s0 + $0x28] sm:$0xff]
  %v21 = vld [vmem:[%s0 + $0x30] sm:$0xff]
  %v22 = vld [vmem:[%s0 + $0x38] sm:$0xff]
  %v23 = vld [vmem:[%s0 + $0x40] sm:$0xff]
  %v24 = vld [vmem:[%s0 + $0x48] sm:$0xff]
  %v25 = vld [vmem:[%s0 + $0x50] sm:$0xff]
  %v26 = vld [vmem:[%s0 + $0x58] sm:$0xff]
  %v27 = vld [vmem:[%s0 + $0x60] sm:$0xff]
  %v28 = vld [vmem:[%s0 + $0x68] sm:$0xff]
  %v29 = vld [vmem:[%s0 + $0x70] sm:$0xff]
  %v30 = vld [vmem:[%s0 + $0x78] sm:$0xff]
  %v31 = vld [vmem:[%s0 + $0x80] sm:$0xff]
  %v32 = vld [vmem:[%s0 + $0x88] sm:$0xff]
  %v33 = vld [vmem:[%s0 + $0x90] sm:$0xff]
  %v34 = vld [vmem:[%s0 + $0x98] sm:$0xff]
  %v35 = vld [vmem:[%s0 + $0xa0] sm:$0xff]
  %v36 = vld [vmem:[%s0 + $0xa8] sm:$0xff]
  %v37 = vld [vmem:[%s0 + $0xb0] sm:$0xff]
  %v38 = vld [vmem:[%s0 + $0xb8] sm:$0xff]
  %v39 = vld [vmem:[%s0 + $0xc0] sm:$0xff]
  %v40 = vld [vmem:[%s0 + $0xc8] sm:$0xff]
  %v41 = vld [vmem:[%s0 + $0xd0] sm:$0xff]
  %v42 = vld [vmem:[%s0 + $0xd8] sm:$0xff]
  %v43 = vld [vmem:[%s0 + $0xe0] sm:$0xff]
  %v44 = vld [vmem:[%s0 + $0xe8] sm:$0xff]
  %v45 = vld [vmem:[%s0 + $0xf0] sm:$0xff]
  %v46 = vld [vmem:[%s0 + $0xf8] sm:$0xff]
  %v47 = vld [vmem:[%s2] sm:$0xff]
  %v48 = vld [vmem:[%s2 + $0x8] sm:$0xff]
  %v49 = vld [vmem:[%s2 + $0x10] sm:$0xff]
  %v50 = vld [vmem:[%s2 + $0x18] sm:$0xff]
  %v51 = vld [vmem:[%s2 + $0x20] sm:$0xff]
  %v52 = vld [vmem:[%s2 + $0x28] sm:$0xff]
  %v53 = vld [vmem:[%s2 + $0x30] sm:$0xff]
  %v54 = vld [vmem:[%s2 + $0x38] sm:$0xff]
  %v55 = vld [vmem:[%s2 + $0x40] sm:$0xff]
  %v56 = vld [vmem:[%s2 + $0x48] sm:$0xff]
  %v57 = vld [vmem:[%s2 + $0x50] sm:$0xff]
  %v58 = vld [vmem:[%s2 + $0x58] sm:$0xff]
  %v59 = vld [vmem:[%s2 + $0x60] sm:$0xff]
  %v60 = vld [vmem:[%s2 + $0x68] sm:$0xff]
  %v61 = vld [vmem:[%s2 + $0x70] sm:$0xff]
  %v62 = vld [vmem:[%s2 + $0x78] sm:$0xff]
  %v63 = vld [vmem:[%s2 + $0x80] sm:$0xff]
  %v64 = vld [vmem:[%s2 + $0x88] sm:$0xff]
  %v65 = vld [vmem:[%s2 + $0x90] sm:$0xff]
  %v66 = vld [vmem:[%s2 + $0x98] sm:$0xff]
  %v67 = vld [vmem:[%s2 + $0xa0] sm:$0xff]
  %v68 = vld [vmem:[%s2 + $0xa8] sm:$0xff]
  %v69 = vld [vmem:[%s2 + $0xb0] sm:$0xff]
  %v70 = vld [vmem:[%s2 + $0xb8] sm:$0xff]
  %v71 = vld [vmem:[%s2 + $0xc0] sm:$0xff]
  %v72 = vld [vmem:[%s2 + $0xc8] sm:$0xff]
  %v73 = vld [vmem:[%s2 + $0xd0] sm:$0xff]
  %v74 = vld [vmem:[%s2 + $0xd8] sm:$0xff]
  %v75 = vld [vmem:[%s2 + $0xe0] sm:$0xff]
  %v76 = vld [vmem:[%s2 + $0xe8] sm:$0xff]
  %v77 = vld [vmem:[%s2 + $0xf0] sm:$0xff]
  %v78 = vld [vmem:[%s2 + $0xf8] sm:$0xff]
  %v79 = vpack.c.bf16 %v16, %v15
  %v80 = vpack.c.bf16 %v18, %v17
  %v81 = vpack.c.bf16 %v20, %v19
  %v82 = vpack.c.bf16 %v22, %v21
  %v83 = vpack.c.bf16 %v24, %v23
  %v84 = vpack.c.bf16 %v26, %v25
  %v85 = vpack.c.bf16 %v28, %v27
  %v86 = vpack.c.bf16 %v30, %v29
  %v87 = vpack.c.bf16 %v32, %v31
  %v88 = vpack.c.bf16 %v34, %v33
  %v89 = vpack.c.bf16 %v36, %v35
  %v90 = vpack.c.bf16 %v38, %v37
  %v91 = vpack.c.bf16 %v40, %v39
  %v92 = vpack.c.bf16 %v42, %v41
  %v93 = vpack.c.bf16 %v44, %v43
  %v94 = vpack.c.bf16 %v46, %v45
  %v95 = vld [vmem:[%s1] sm:$0xf]
  %v96 = vld [vmem:[%s1 + $0x4] sm:$0xf]
  %v97 = vld [vmem:[%s1 + $0x8] sm:$0xf]
  %v98 = vld [vmem:[%s1 + $0xc] sm:$0xf]
  %v99 = vld [vmem:[%s1 + $0x10] sm:$0xf]
  %v100 = vld [vmem:[%s1 + $0x14] sm:$0xf]
  %v101 = vld [vmem:[%s1 + $0x18] sm:$0xf]
  %v102 = vld [vmem:[%s1 + $0x1c] sm:$0xf]
  %v103 = vld [vmem:[%s1 + $0x20] sm:$0xf]
  %v104 = vld [vmem:[%s1 + $0x24] sm:$0xf]
  %v105 = vld [vmem:[%s1 + $0x28] sm:$0xf]
  %v106 = vld [vmem:[%s1 + $0x2c] sm:$0xf]
  %v107 = vld [vmem:[%s1 + $0x30] sm:$0xf]
  %v108 = vld [vmem:[%s1 + $0x34] sm:$0xf]
  %v109 = vld [vmem:[%s1 + $0x38] sm:$0xf]
  %v110 = vld [vmem:[%s1 + $0x3c] sm:$0xf]
  %v127 = vunpack.c.l.b16 %v95
  %v128 = vunpack.c.l.b16 %v96
  %v129 = vunpack.c.l.b16 %v97
  %v130 = vunpack.c.l.b16 %v98
  %v131 = vunpack.c.l.b16 %v99
  %v132 = vunpack.c.l.b16 %v100
  %v133 = vunpack.c.l.b16 %v101
  %v134 = vunpack.c.l.b16 %v102
  %v135 = vunpack.c.l.b16 %v103
  %v136 = vunpack.c.l.b16 %v104
  %v137 = vunpack.c.l.b16 %v105
  %v138 = vunpack.c.l.b16 %v106
  %v139 = vunpack.c.l.b16 %v107
  %v140 = vunpack.c.l.b16 %v108
  %v141 = vunpack.c.l.b16 %v109
  %v142 = vunpack.c.l.b16 %v110
  %v143 = vpack.c.b16 %v128, %v127
  %v144 = vpack.c.b16 %v130, %v129
  %v145 = vpack.c.b16 %v132, %v131
  %v146 = vpack.c.b16 %v134, %v133
  %v147 = vpack.c.b16 %v136, %v135
  %v148 = vpack.c.b16 %v138, %v137
  %v149 = vpack.c.b16 %v140, %v139
  %v150 = vpack.c.b16 %v142, %v141
  %159 = vmatprep.subr.bf16.mxu0 0
  %160 = vmatpush1.bf16.msra.mxu0 %v143
  %161 = vmatprep.subr.bf16.mxu0 0
  %162 = vmatpush1.bf16.msra.mxu0 %v144
  %163 = vmatprep.subr.bf16.mxu0 0
  %164 = vmatpush1.bf16.msra.mxu0 %v145
  %165 = vmatprep.subr.bf16.mxu0 0
  %166 = vmatpush1.bf16.msra.mxu0 %v146
  %167 = vmatprep.subr.bf16.mxu0 0
  %168 = vmatpush1.bf16.msra.mxu0 %v147
  %169 = vmatprep.subr.bf16.mxu0 0
  %170 = vmatpush1.bf16.msra.mxu0 %v148
  %171 = vmatprep.subr.bf16.mxu0 0
  %172 = vmatpush1.bf16.msra.mxu0 %v149
  %173 = vmatprep.subr.bf16.mxu0 0
  %174 = vmatpush1.bf16.msra.mxu0 %v150
  %175 = vmatprep.subr.bf16.mxu0 0
  %176 = vmatpush1.bf16.msra.mxu0 0
  %177 = vmatprep.subr.bf16.mxu0 0
  %178 = vmatpush1.bf16.msra.mxu0 0
  %179 = vmatprep.subr.bf16.mxu0 0
  %180 = vmatpush1.bf16.msra.mxu0 0
  %181 = vmatprep.subr.bf16.mxu0 0
  %182 = vmatpush1.bf16.msra.mxu0 0
  %183 = vmatprep.subr.bf16.mxu0 0
  %184 = vmatpush1.bf16.msra.mxu0 0
  %185 = vmatprep.subr.bf16.mxu0 0
  %186 = vmatpush1.bf16.msra.mxu0 0
  %187 = vmatprep.subr.bf16.mxu0 0
  %188 = vmatpush1.bf16.msra.mxu0 0
  %189 = vmatprep.subr.bf16.mxu0 0
  %190 = vmatpush1.bf16.msra.mxu0 0
  %191 = vmatprep.mubr.bf16.mxu0 0
  %192 = vmatmul.mubr.bf16.gmra.mrb[0].mxu0 %v79
  %v193 = vpop.f32.mrb[0].mxu0
  %v194 = vadd.f32 0.0, %v193
  %v195 = vpop.f32.mrb[0].mxu0
  %v196 = vpop.f32.mrb[0].mxu0
  %v197 = vadd.f32 0.0, %v196
  %v198 = vpop.f32.mrb[0].mxu0
  %199 = vmatprep.mubr.bf16.mxu0 0
  %200 = vmatmul.mubr.bf16.gmra.mrb[0].mxu0 %v80
  %v201 = vpop.f32.mrb[0].mxu0
  %v202 = vadd.f32 0.0, %v201
  %v203 = vpop.f32.mrb[0].mxu0
  %v204 = vpop.f32.mrb[0].mxu0
  %v205 = vadd.f32 0.0, %v204
  %v206 = vpop.f32.mrb[0].mxu0
  %207 = vmatprep.mubr.bf16.mxu0 0
  %208 = vmatmul.mubr.bf16.gmra.mrb[0].mxu0 %v81
  %v209 = vpop.f32.mrb[0].mxu0
  %v210 = vadd.f32 0.0, %v209
  %v211 = vpop.f32.mrb[0].mxu0
  %v212 = vpop.f32.mrb[0].mxu0
  %v213 = vadd.f32 0.0, %v212
  %v214 = vpop.f32.mrb[0].mxu0
  %215 = vmatprep.mubr.bf16.mxu0 0
  %216 = vmatmul.mubr.bf16.gmra.mrb[0].mxu0 %v82
  %v217 = vpop.f32.mrb[0].mxu0
  %v218 = vadd.f32 0.0, %v217
  %v219 = vpop.f32.mrb[0].mxu0
  %v220 = vpop.f32.mrb[0].mxu0
  %v221 = vadd.f32 0.0, %v220
  %v222 = vpop.f32.mrb[0].mxu0
  %223 = vmatprep.mubr.bf16.mxu0 0
  %224 = vmatmul.mubr.bf16.gmra.mrb[0].mxu0 %v83
  %v225 = vpop.f32.mrb[0].mxu0
  %v226 = vadd.f32 0.0, %v225
  %v227 = vpop.f32.mrb[0].mxu0
  %v228 = vpop.f32.mrb[0].mxu0
  %v229 = vadd.f32 0.0, %v228
  %v230 = vpop.f32.mrb[0].mxu0
  %231 = vmatprep.mubr.bf16.mxu0 0
  %232 = vmatmul.mubr.bf16.gmra.mrb[0].mxu0 %v84
  %v233 = vpop.f32.mrb[0].mxu0
  %v234 = vadd.f32 0.0, %v233
  %v235 = vpop.f32.mrb[0].mxu0
  %v236 = vpop.f32.mrb[0].mxu0
  %v237 = vadd.f32 0.0, %v236
  %v238 = vpop.f32.mrb[0].mxu0
  %239 = vmatprep.mubr.bf16.mxu0 0
  %240 = vmatmul.mubr.bf16.gmra.mrb[0].mxu0 %v85
  %v241 = vpop.f32.mrb[0].mxu0
  %v242 = vadd.f32 0.0, %v241
  %v243 = vpop.f32.mrb[0].mxu0
  %v244 = vpop.f32.mrb[0].mxu0
  %v245 = vadd.f32 0.0, %v244
  %v246 = vpop.f32.mrb[0].mxu0
  %247 = vmatprep.mubr.bf16.mxu0 0
  %248 = vmatmul.mubr.bf16.gmra.mrb[0].mxu0 %v86
  %v249 = vpop.f32.mrb[0].mxu0
  %v250 = vadd.f32 0.0, %v249
  %v251 = vpop.f32.mrb[0].mxu0
  %v252 = vpop.f32.mrb[0].mxu0
  %v253 = vadd.f32 0.0, %v252
  %v254 = vpop.f32.mrb[0].mxu0
  %255 = vmatprep.mubr.bf16.mxu0 0
  %256 = vmatmul.mubr.bf16.gmra.mrb[0].mxu0 %v87
  %v257 = vpop.f32.mrb[0].mxu0
  %v258 = vadd.f32 0.0, %v257
  %v259 = vpop.f32.mrb[0].mxu0
  %v260 = vpop.f32.mrb[0].mxu0
  %v261 = vadd.f32 0.0, %v260
  %v262 = vpop.f32.mrb[0].mxu0
  %263 = vmatprep.mubr.bf16.mxu0 0
  %264 = vmatmul.mubr.bf16.gmra.mrb[0].mxu0 %v88
  %v265 = vpop.f32.mrb[0].mxu0
  %v266 = vadd.f32 0.0, %v265
  %v267 = vpop.f32.mrb[0].mxu0
  %v268 = vpop.f32.mrb[0].mxu0
  %v269 = vadd.f32 0.0, %v268
  %v270 = vpop.f32.mrb[0].mxu0
  %271 = vmatprep.mubr.bf16.mxu0 0
  %272 = vmatmul.mubr.bf16.gmra.mrb[0].mxu0 %v89
  %v273 = vpop.f32.mrb[0].mxu0
  %v274 = vadd.f32 0.0, %v273
  %v275 = vpop.f32.mrb[0].mxu0
  %v276 = vpop.f32.mrb[0].mxu0
  %v277 = vadd.f32 0.0, %v276
  %v278 = vpop.f32.mrb[0].mxu0
  %279 = vmatprep.mubr.bf16.mxu0 0
  %280 = vmatmul.mubr.bf16.gmra.mrb[0].mxu0 %v90
  %v281 = vpop.f32.mrb[0].mxu0
  %v282 = vadd.f32 0.0, %v281
  %v283 = vpop.f32.mrb[0].mxu0
  %v284 = vpop.f32.mrb[0].mxu0
  %v285 = vadd.f32 0.0, %v284
  %v286 = vpop.f32.mrb[0].mxu0
  %287 = vmatprep.mubr.bf16.mxu0 0
  %288 = vmatmul.mubr.bf16.gmra.mrb[0].mxu0 %v91
  %v289 = vpop.f32.mrb[0].mxu0
  %v290 = vadd.f32 0.0, %v289
  %v291 = vpop.f32.mrb[0].mxu0
  %v292 = vpop.f32.mrb[0].mxu0
  %v293 = vadd.f32 0.0, %v292
  %v294 = vpop.f32.mrb[0].mxu0
  %295 = vmatprep.mubr.bf16.mxu0 0
  %296 = vmatmul.mubr.bf16.gmra.mrb[0].mxu0 %v92
  %v297 = vpop.f32.mrb[0].mxu0
  %v298 = vadd.f32 0.0, %v297
  %v299 = vpop.f32.mrb[0].mxu0
  %v300 = vpop.f32.mrb[0].mxu0
  %v301 = vadd.f32 0.0, %v300
  %v302 = vpop.f32.mrb[0].mxu0
  %303 = vmatprep.mubr.bf16.mxu0 0
  %304 = vmatmul.mubr.bf16.gmra.mrb[0].mxu0 %v93
  %v305 = vpop.f32.mrb[0].mxu0
  %v306 = vadd.f32 0.0, %v305
  %v307 = vpop.f32.mrb[0].mxu0
  %v308 = vpop.f32.mrb[0].mxu0
  %v309 = vadd.f32 0.0, %v308
  %v310 = vpop.f32.mrb[0].mxu0
  %311 = vmatprep.mubr.bf16.mxu0 0
  %312 = vmatmul.mubr.bf16.gmra.mrb[0].mxu0 %v94
  %v313 = vpop.f32.mrb[0].mxu0
  %v314 = vadd.f32 0.0, %v313
  %v315 = vpop.f32.mrb[0].mxu0
  %v316 = vpop.f32.mrb[0].mxu0
  %v317 = vadd.f32 0.0, %v316
  %v318 = vpop.f32.mrb[0].mxu0
  %319 = vdwg.mxu0
  %321 = vset.pattern.permute.xlu0 0
  %322 = vperm.xlu0 %321, %v47
  %v323 = vpop.permute.xlu0 %322
  %326 = vset.pattern.permute.xlu0 0
  %327 = vperm.xlu0 %326, %v48
  %v328 = vpop.permute.xlu0 %327
  %331 = vset.pattern.permute.xlu0 0
  %332 = vperm.xlu0 %331, %v49
  %v333 = vpop.permute.xlu0 %332
  %336 = vset.pattern.permute.xlu0 0
  %337 = vperm.xlu0 %336, %v50
  %v338 = vpop.permute.xlu0 %337
  %341 = vset.pattern.permute.xlu0 0
  %342 = vperm.xlu0 %341, %v51
  %v343 = vpop.permute.xlu0 %342
  %346 = vset.pattern.permute.xlu0 0
  %347 = vperm.xlu0 %346, %v52
  %v348 = vpop.permute.xlu0 %347
  %351 = vset.pattern.permute.xlu0 0
  %352 = vperm.xlu0 %351, %v53
  %v353 = vpop.permute.xlu0 %352
  %356 = vset.pattern.permute.xlu0 0
  %357 = vperm.xlu0 %356, %v54
  %v358 = vpop.permute.xlu0 %357
  %361 = vset.pattern.permute.xlu0 0
  %362 = vperm.xlu0 %361, %v55
  %v363 = vpop.permute.xlu0 %362
  %366 = vset.pattern.permute.xlu0 0
  %367 = vperm.xlu0 %366, %v56
  %v368 = vpop.permute.xlu0 %367
  %371 = vset.pattern.permute.xlu0 0
  %372 = vperm.xlu0 %371, %v57
  %v373 = vpop.permute.xlu0 %372
  %376 = vset.pattern.permute.xlu0 0
  %377 = vperm.xlu0 %376, %v58
  %v378 = vpop.permute.xlu0 %377
  %381 = vset.pattern.permute.xlu0 0
  %382 = vperm.xlu0 %381, %v59
  %v383 = vpop.permute.xlu0 %382
  %386 = vset.pattern.permute.xlu0 0
  %387 = vperm.xlu0 %386, %v60
  %v388 = vpop.permute.xlu0 %387
  %391 = vset.pattern.permute.xlu0 0
  %392 = vperm.xlu0 %391, %v61
  %v393 = vpop.permute.xlu0 %392
  %396 = vset.pattern.permute.xlu0 0
  %397 = vperm.xlu0 %396, %v62
  %v398 = vpop.permute.xlu0 %397
  %401 = vset.pattern.permute.xlu0 0
  %402 = vperm.xlu0 %401, %v63
  %v403 = vpop.permute.xlu0 %402
  %406 = vset.pattern.permute.xlu0 0
  %407 = vperm.xlu0 %406, %v64
  %v408 = vpop.permute.xlu0 %407
  %411 = vset.pattern.permute.xlu0 0
  %412 = vperm.xlu0 %411, %v65
  %v413 = vpop.permute.xlu0 %412
  %416 = vset.pattern.permute.xlu0 0
  %417 = vperm.xlu0 %416, %v66
  %v418 = vpop.permute.xlu0 %417
  %421 = vset.pattern.permute.xlu0 0
  %422 = vperm.xlu0 %421, %v67
  %v423 = vpop.permute.xlu0 %422
  %426 = vset.pattern.permute.xlu0 0
  %427 = vperm.xlu0 %426, %v68
  %v428 = vpop.permute.xlu0 %427
  %431 = vset.pattern.permute.xlu0 0
  %432 = vperm.xlu0 %431, %v69
  %v433 = vpop.permute.xlu0 %432
  %436 = vset.pattern.permute.xlu0 0
  %437 = vperm.xlu0 %436, %v70
  %v438 = vpop.permute.xlu0 %437
  %441 = vset.pattern.permute.xlu0 0
  %442 = vperm.xlu0 %441, %v71
  %v443 = vpop.permute.xlu0 %442
  %446 = vset.pattern.permute.xlu0 0
  %447 = vperm.xlu0 %446, %v72
  %v448 = vpop.permute.xlu0 %447
  %451 = vset.pattern.permute.xlu0 0
  %452 = vperm.xlu0 %451, %v73
  %v453 = vpop.permute.xlu0 %452
  %456 = vset.pattern.permute.xlu0 0
  %457 = vperm.xlu0 %456, %v74
  %v458 = vpop.permute.xlu0 %457
  %461 = vset.pattern.permute.xlu0 0
  %462 = vperm.xlu0 %461, %v75
  %v463 = vpop.permute.xlu0 %462
  %466 = vset.pattern.permute.xlu0 0
  %467 = vperm.xlu0 %466, %v76
  %v468 = vpop.permute.xlu0 %467
  %471 = vset.pattern.permute.xlu0 0
  %472 = vperm.xlu0 %471, %v77
  %v473 = vpop.permute.xlu0 %472
  %476 = vset.pattern.permute.xlu0 0
  %477 = vperm.xlu0 %476, %v78
  %v478 = vpop.permute.xlu0 %477
  %v480 = vmul.f32 %v323, %v194
  %v481 = vmul.f32 %v328, %v197
  %v482 = vmul.f32 %v333, %v202
  %v483 = vmul.f32 %v338, %v205
  %v484 = vmul.f32 %v343, %v210
  %v485 = vmul.f32 %v348, %v213
  %v486 = vmul.f32 %v353, %v218
  %v487 = vmul.f32 %v358, %v221
  %v488 = vmul.f32 %v363, %v226
  %v489 = vmul.f32 %v368, %v229
  %v490 = vmul.f32 %v373, %v234
  %v491 = vmul.f32 %v378, %v237
  %v492 = vmul.f32 %v383, %v242
  %v493 = vmul.f32 %v388, %v245
  %v494 = vmul.f32 %v393, %v250
  %v495 = vmul.f32 %v398, %v253
  %v496 = vmul.f32 %v403, %v258
  %v497 = vmul.f32 %v408, %v261
  %v498 = vmul.f32 %v413, %v266
  %v499 = vmul.f32 %v418, %v269
  %v500 = vmul.f32 %v423, %v274
  %v501 = vmul.f32 %v428, %v277
  %v502 = vmul.f32 %v433, %v282
  %v503 = vmul.f32 %v438, %v285
  %v504 = vmul.f32 %v443, %v290
  %v505 = vmul.f32 %v448, %v293
  %v506 = vmul.f32 %v453, %v298
  %v507 = vmul.f32 %v458, %v301
  %v508 = vmul.f32 %v463, %v306
  %v509 = vmul.f32 %v468, %v309
  %v510 = vmul.f32 %v473, %v314
  %v511 = vmul.f32 %v478, %v317
  %v512 = vmul.f32 %v15, %v15
  %v513 = vmul.f32 %v16, %v16
  %v514 = vmul.f32 %v17, %v17
  %v515 = vmul.f32 %v18, %v18
  %v516 = vmul.f32 %v19, %v19
  %v517 = vmul.f32 %v20, %v20
  %v518 = vmul.f32 %v21, %v21
  %v519 = vmul.f32 %v22, %v22
  %v520 = vmul.f32 %v23, %v23
  %v521 = vmul.f32 %v24, %v24
  %v522 = vmul.f32 %v25, %v25
  %v523 = vmul.f32 %v26, %v26
  %v524 = vmul.f32 %v27, %v27
  %v525 = vmul.f32 %v28, %v28
  %v526 = vmul.f32 %v29, %v29
  %v527 = vmul.f32 %v30, %v30
  %v528 = vmul.f32 %v31, %v31
  %v529 = vmul.f32 %v32, %v32
  %v530 = vmul.f32 %v33, %v33
  %v531 = vmul.f32 %v34, %v34
  %v532 = vmul.f32 %v35, %v35
  %v533 = vmul.f32 %v36, %v36
  %v534 = vmul.f32 %v37, %v37
  %v535 = vmul.f32 %v38, %v38
  %v536 = vmul.f32 %v39, %v39
  %v537 = vmul.f32 %v40, %v40
  %v538 = vmul.f32 %v41, %v41
  %v539 = vmul.f32 %v42, %v42
  %v540 = vmul.f32 %v43, %v43
  %v541 = vmul.f32 %v44, %v44
  %v542 = vmul.f32 %v45, %v45
  %v543 = vmul.f32 %v46, %v46
  %544 = vadd.xlane.f32.xlu0 %v512
  %v545 = vpop.xlane.xlu0 %544
  %546 = vadd.xlane.f32.xlu0 %v513
  %v547 = vpop.xlane.xlu0 %546
  %548 = vadd.xlane.f32.xlu0 %v514
  %v549 = vpop.xlane.xlu0 %548
  %550 = vadd.xlane.f32.xlu0 %v515
  %v551 = vpop.xlane.xlu0 %550
  %552 = vadd.xlane.f32.xlu0 %v516
  %v553 = vpop.xlane.xlu0 %552
  %554 = vadd.xlane.f32.xlu0 %v517
  %v555 = vpop.xlane.xlu0 %554
  %556 = vadd.xlane.f32.xlu0 %v518
  %v557 = vpop.xlane.xlu0 %556
  %558 = vadd.xlane.f32.xlu0 %v519
  %v559 = vpop.xlane.xlu0 %558
  %560 = vadd.xlane.f32.xlu0 %v520
  %v561 = vpop.xlane.xlu0 %560
  %562 = vadd.xlane.f32.xlu0 %v521
  %v563 = vpop.xlane.xlu0 %562
  %564 = vadd.xlane.f32.xlu0 %v522
  %v565 = vpop.xlane.xlu0 %564
  %566 = vadd.xlane.f32.xlu0 %v523
  %v567 = vpop.xlane.xlu0 %566
  %568 = vadd.xlane.f32.xlu0 %v524
  %v569 = vpop.xlane.xlu0 %568
  %570 = vadd.xlane.f32.xlu0 %v525
  %v571 = vpop.xlane.xlu0 %570
  %572 = vadd.xlane.f32.xlu0 %v526
  %v573 = vpop.xlane.xlu0 %572
  %574 = vadd.xlane.f32.xlu0 %v527
  %v575 = vpop.xlane.xlu0 %574
  %576 = vadd.xlane.f32.xlu0 %v528
  %v577 = vpop.xlane.xlu0 %576
  %578 = vadd.xlane.f32.xlu0 %v529
  %v579 = vpop.xlane.xlu0 %578
  %580 = vadd.xlane.f32.xlu0 %v530
  %v581 = vpop.xlane.xlu0 %580
  %582 = vadd.xlane.f32.xlu0 %v531
  %v583 = vpop.xlane.xlu0 %582
  %584 = vadd.xlane.f32.xlu0 %v532
  %v585 = vpop.xlane.xlu0 %584
  %586 = vadd.xlane.f32.xlu0 %v533
  %v587 = vpop.xlane.xlu0 %586
  %588 = vadd.xlane.f32.xlu0 %v534
  %v589 = vpop.xlane.xlu0 %588
  %590 = vadd.xlane.f32.xlu0 %v535
  %v591 = vpop.xlane.xlu0 %590
  %592 = vadd.xlane.f32.xlu0 %v536
  %v593 = vpop.xlane.xlu0 %592
  %594 = vadd.xlane.f32.xlu0 %v537
  %v595 = vpop.xlane.xlu0 %594
  %596 = vadd.xlane.f32.xlu0 %v538
  %v597 = vpop.xlane.xlu0 %596
  %598 = vadd.xlane.f32.xlu0 %v539
  %v599 = vpop.xlane.xlu0 %598
  %600 = vadd.xlane.f32.xlu0 %v540
  %v601 = vpop.xlane.xlu0 %600
  %602 = vadd.xlane.f32.xlu0 %v541
  %v603 = vpop.xlane.xlu0 %602
  %604 = vadd.xlane.f32.xlu0 %v542
  %v605 = vpop.xlane.xlu0 %604
  %606 = vadd.xlane.f32.xlu0 %v543
  %v607 = vpop.xlane.xlu0 %606
  %v608 = vlaneseq
  %v609 = vand.u32 %v608, 127
  %vm610 = vcmp.eq.s32.totalorder %v609, 32
  %v611 = vsel %vm610, %v545, %v15
  %v612 = vsel %vm610, %v547, %v16
  %v613 = vsel %vm610, %v549, %v17
  %v614 = vsel %vm610, %v551, %v18
  %v615 = vsel %vm610, %v553, %v19
  %v616 = vsel %vm610, %v555, %v20
  %v617 = vsel %vm610, %v557, %v21
  %v618 = vsel %vm610, %v559, %v22
  %v619 = vsel %vm610, %v561, %v23
  %v620 = vsel %vm610, %v563, %v24
  %v621 = vsel %vm610, %v565, %v25
  %v622 = vsel %vm610, %v567, %v26
  %v623 = vsel %vm610, %v569, %v27
  %v624 = vsel %vm610, %v571, %v28
  %v625 = vsel %vm610, %v573, %v29
  %v626 = vsel %vm610, %v575, %v30
  %v627 = vsel %vm610, %v577, %v31
  %v628 = vsel %vm610, %v579, %v32
  %v629 = vsel %vm610, %v581, %v33
  %v630 = vsel %vm610, %v583, %v34
  %v631 = vsel %vm610, %v585, %v35
  %v632 = vsel %vm610, %v587, %v36
  %v633 = vsel %vm610, %v589, %v37
  %v634 = vsel %vm610, %v591, %v38
  %v635 = vsel %vm610, %v593, %v39
  %v636 = vsel %vm610, %v595, %v40
  %v637 = vsel %vm610, %v597, %v41
  %v638 = vsel %vm610, %v599, %v42
  %v639 = vsel %vm610, %v601, %v43
  %v640 = vsel %vm610, %v603, %v44
  %v641 = vsel %vm610, %v605, %v45
  %v642 = vsel %vm610, %v607, %v46
  %v643 = vpack.c.bf16 %v481, %v480
  %v644 = vpack.c.bf16 %v612, %v611
  %v645 = vpack.c.bf16 %v483, %v482
  %v646 = vpack.c.bf16 %v614, %v613
  %v647 = vpack.c.bf16 %v485, %v484
  %v648 = vpack.c.bf16 %v616, %v615
  %v649 = vpack.c.bf16 %v487, %v486
  %v650 = vpack.c.bf16 %v618, %v617
  %v651 = vpack.c.bf16 %v489, %v488
  %v652 = vpack.c.bf16 %v620, %v619
  %v653 = vpack.c.bf16 %v491, %v490
  %v654 = vpack.c.bf16 %v622, %v621
  %v655 = vpack.c.bf16 %v493, %v492
  %v656 = vpack.c.bf16 %v624, %v623
  %v657 = vpack.c.bf16 %v495, %v494
  %v658 = vpack.c.bf16 %v626, %v625
  %v659 = vpack.c.bf16 %v497, %v496
  %v660 = vpack.c.bf16 %v628, %v627
  %v661 = vpack.c.bf16 %v499, %v498
  %v662 = vpack.c.bf16 %v630, %v629
  %v663 = vpack.c.bf16 %v501, %v500
  %v664 = vpack.c.bf16 %v632, %v631
  %v665 = vpack.c.bf16 %v503, %v502
  %v666 = vpack.c.bf16 %v634, %v633
  %v667 = vpack.c.bf16 %v505, %v504
  %v668 = vpack.c.bf16 %v636, %v635
  %v669 = vpack.c.bf16 %v507, %v506
  %v670 = vpack.c.bf16 %v638, %v637
  %v671 = vpack.c.bf16 %v509, %v508
  %v672 = vpack.c.bf16 %v640, %v639
  %v673 = vpack.c.bf16 %v511, %v510
  %v674 = vpack.c.bf16 %v642, %v641
  %v707 = vunpack.c.l.b16 %v643
  %v708 = vunpack.c.l.b16 %v644
  %v709 = vunpack.c.h.b16 %v643
  %v710 = vunpack.c.h.b16 %v644
  %v711 = vunpack.c.l.b16 %v645
  %v712 = vunpack.c.l.b16 %v646
  %v713 = vunpack.c.h.b16 %v645
  %v714 = vunpack.c.h.b16 %v646
  %v715 = vunpack.c.l.b16 %v647
  %v716 = vunpack.c.l.b16 %v648
  %v717 = vunpack.c.h.b16 %v647
  %v718 = vunpack.c.h.b16 %v648
  %v719 = vunpack.c.l.b16 %v649
  %v720 = vunpack.c.l.b16 %v650
  %v721 = vunpack.c.h.b16 %v649
  %v722 = vunpack.c.h.b16 %v650
  %v723 = vunpack.c.l.b16 %v651
  %v724 = vunpack.c.l.b16 %v652
  %v725 = vunpack.c.h.b16 %v651
  %v726 = vunpack.c.h.b16 %v652
  %v727 = vunpack.c.l.b16 %v653
  %v728 = vunpack.c.l.b16 %v654
  %v729 = vunpack.c.h.b16 %v653
  %v730 = vunpack.c.h.b16 %v654
  %v731 = vunpack.c.l.b16 %v655
  %v732 = vunpack.c.l.b16 %v656
  %v733 = vunpack.c.h.b16 %v655
  %v734 = vunpack.c.h.b16 %v656
  %v735 = vunpack.c.l.b16 %v657
  %v736 = vunpack.c.l.b16 %v658
  %v737 = vunpack.c.h.b16 %v657
  %v738 = vunpack.c.h.b16 %v658
  %v739 = vunpack.c.l.b16 %v659
  %v740 = vunpack.c.l.b16 %v660
  %v741 = vunpack.c.h.b16 %v659
  %v742 = vunpack.c.h.b16 %v660
  %v743 = vunpack.c.l.b16 %v661
  %v744 = vunpack.c.l.b16 %v662
  %v745 = vunpack.c.h.b16 %v661
  %v746 = vunpack.c.h.b16 %v662
  %v747 = vunpack.c.l.b16 %v663
  %v748 = vunpack.c.l.b16 %v664
  %v749 = vunpack.c.h.b16 %v663
  %v750 = vunpack.c.h.b16 %v664
  %v751 = vunpack.c.l.b16 %v665
  %v752 = vunpack.c.l.b16 %v666
  %v753 = vunpack.c.h.b16 %v665
  %v754 = vunpack.c.h.b16 %v666
  %v755 = vunpack.c.l.b16 %v667
  %v756 = vunpack.c.l.b16 %v668
  %v757 = vunpack.c.h.b16 %v667
  %v758 = vunpack.c.h.b16 %v668
  %v759 = vunpack.c.l.b16 %v669
  %v760 = vunpack.c.l.b16 %v670
  %v761 = vunpack.c.h.b16 %v669
  %v762 = vunpack.c.h.b16 %v670
  %v763 = vunpack.c.l.b16 %v671
  %v764 = vunpack.c.l.b16 %v672
  %v765 = vunpack.c.h.b16 %v671
  %v766 = vunpack.c.h.b16 %v672
  %v767 = vunpack.c.l.b16 %v673
  %v768 = vunpack.c.l.b16 %v674
  %v769 = vunpack.c.h.b16 %v673
  %v770 = vunpack.c.h.b16 %v674
  %v771 = vpack.c.b16 %v708, %v707
  %v772 = vpack.c.b16 %v710, %v709
  %v773 = vpack.c.b16 %v712, %v711
  %v774 = vpack.c.b16 %v714, %v713
  %v775 = vpack.c.b16 %v716, %v715
  %v776 = vpack.c.b16 %v718, %v717
  %v777 = vpack.c.b16 %v720, %v719
  %v778 = vpack.c.b16 %v722, %v721
  %v779 = vpack.c.b16 %v724, %v723
  %v780 = vpack.c.b16 %v726, %v725
  %v781 = vpack.c.b16 %v728, %v727
  %v782 = vpack.c.b16 %v730, %v729
  %v783 = vpack.c.b16 %v732, %v731
  %v784 = vpack.c.b16 %v734, %v733
  %v785 = vpack.c.b16 %v736, %v735
  %v786 = vpack.c.b16 %v738, %v737
  %v787 = vpack.c.b16 %v740, %v739
  %v788 = vpack.c.b16 %v742, %v741
  %v789 = vpack.c.b16 %v744, %v743
  %v790 = vpack.c.b16 %v746, %v745
  %v791 = vpack.c.b16 %v748, %v747
  %v792 = vpack.c.b16 %v750, %v749
  %v793 = vpack.c.b16 %v752, %v751
  %v794 = vpack.c.b16 %v754, %v753
  %v795 = vpack.c.b16 %v756, %v755
  %v796 = vpack.c.b16 %v758, %v757
  %v797 = vpack.c.b16 %v760, %v759
  %v798 = vpack.c.b16 %v762, %v761
  %v799 = vpack.c.b16 %v764, %v763
  %v800 = vpack.c.b16 %v766, %v765
  %v801 = vpack.c.b16 %v768, %v767
  %v802 = vpack.c.b16 %v770, %v769
  %835 = vst [vmem:[%s3] sm:$0xff] %v771
  %836 = vst [vmem:[%s3 + $0x8] sm:$0xff] %v772
  %837 = vst [vmem:[%s3 + $0x10] sm:$0xff] %v773
  %838 = vst [vmem:[%s3 + $0x18] sm:$0xff] %v774
  %839 = vst [vmem:[%s3 + $0x20] sm:$0xff] %v775
  %840 = vst [vmem:[%s3 + $0x28] sm:$0xff] %v776
  %841 = vst [vmem:[%s3 + $0x30] sm:$0xff] %v777
  %842 = vst [vmem:[%s3 + $0x38] sm:$0xff] %v778
  %843 = vst [vmem:[%s3 + $0x40] sm:$0xff] %v779
  %844 = vst [vmem:[%s3 + $0x48] sm:$0xff] %v780
  %845 = vst [vmem:[%s3 + $0x50] sm:$0xff] %v781
  %846 = vst [vmem:[%s3 + $0x58] sm:$0xff] %v782
  %847 = vst [vmem:[%s3 + $0x60] sm:$0xff] %v783
  %848 = vst [vmem:[%s3 + $0x68] sm:$0xff] %v784
  %849 = vst [vmem:[%s3 + $0x70] sm:$0xff] %v785
  %850 = vst [vmem:[%s3 + $0x78] sm:$0xff] %v786
  %851 = vst [vmem:[%s3 + $0x80] sm:$0xff] %v787
  %852 = vst [vmem:[%s3 + $0x88] sm:$0xff] %v788
  %853 = vst [vmem:[%s3 + $0x90] sm:$0xff] %v789
  %854 = vst [vmem:[%s3 + $0x98] sm:$0xff] %v790
  %855 = vst [vmem:[%s3 + $0xa0] sm:$0xff] %v791
  %856 = vst [vmem:[%s3 + $0xa8] sm:$0xff] %v792
  %857 = vst [vmem:[%s3 + $0xb0] sm:$0xff] %v793
  %858 = vst [vmem:[%s3 + $0xb8] sm:$0xff] %v794
  %859 = vst [vmem:[%s3 + $0xc0] sm:$0xff] %v795
  %860 = vst [vmem:[%s3 + $0xc8] sm:$0xff] %v796
  %861 = vst [vmem:[%s3 + $0xd0] sm:$0xff] %v797
  %862 = vst [vmem:[%s3 + $0xd8] sm:$0xff] %v798
  %863 = vst [vmem:[%s3 + $0xe0] sm:$0xff] %v799
  %864 = vst [vmem:[%s3 + $0xe8] sm:$0xff] %v800
  %865 = vst [vmem:[%s3 + $0xf0] sm:$0xff] %v801
  %866 = vst [vmem:[%s3 + $0xf8] sm:$0xff] %v802
  // Predicated region
  $region14: #{g2_gnn_forward.7} parent=0 // pred_check
    _
  $region15: #{g2_gnn_forward.7} parent=0 // pred_check_branch
    %868 = sbr.rel (0) target = $region17
  $region16: #{g2_gnn_forward.7} parent=0 // pred_region
    _
  $region17: #{g2_gnn_forward.7} parent=0 // pred_fallthru
    _
  // Predicated region
  $region18: #{g2_gnn_forward.7} parent=0 // pred_check
    _
  $region19: #{g2_gnn_forward.7} parent=0 // pred_check_branch
    %870 = sbr.rel (0) target = $region21
  $region20: #{g2_gnn_forward.7} parent=0 // pred_region
    _
  $region21: #{g2_gnn_forward.7} parent=0 // pred_fallthru
    _

// kernel: g2_gnn_forward.11
$region0: #{g2_gnn_forward.11}
  #allocation0 [shape = 'u32[]', space=smem, size = 0x4, offset = 0x4, fixed_abs, tag = 'smem constant byte address 0x4 - core index']
  #allocation1 [shape = 'u32[144,128]{1,0:T(1,128)}', space=vmem, size = 0x12000, scoped, tag = 'internal scratch']
  %s0 = inlined_call_operand.vmem [shape: f32[256,128], index: 0, kind: input, shape index: {}]
  %s1 = inlined_call_operand.vmem [shape: bf16[128,128], index: 1, kind: input, shape index: {}]
  %s2 = inlined_call_operand.vmem [shape: f32[1,128], index: 2, kind: input, shape index: {}]
  %s3 = inlined_call_operand.vmem [shape: f32[256,128], index: 3, kind: output, shape index: {}]
  %s4 = sld [smem:[#allocation0]]
  $region22: #{g2_gnn_forward.11} parent=0
    _
  %s6 = ssub.s32 1, %s4
  %s7 = scalar_select 0, %s6, %s4
  // Predicated region
  $region2: #{g2_gnn_forward.11} parent=0 // pred_check
    _
  $region3: #{g2_gnn_forward.11} parent=0 // pred_check_branch
    %9 = sbr.rel (0) target = $region5
  $region4: #{g2_gnn_forward.11} parent=0 // pred_region
    _
  $region5: #{g2_gnn_forward.11} parent=0 // pred_fallthru
    _
  // Predicated region
  $region6: #{g2_gnn_forward.11} parent=0 // pred_check
    _
  $region7: #{g2_gnn_forward.11} parent=0 // pred_check_branch
    %11 = sbr.rel (0) target = $region9
  $region8: #{g2_gnn_forward.11} parent=0 // pred_region
    _
  $region9: #{g2_gnn_forward.11} parent=0 // pred_fallthru
    _
  // Predicated region
  $region10: #{g2_gnn_forward.11} parent=0 // pred_check
    _
  $region11: #{g2_gnn_forward.11} parent=0 // pred_check_branch
    %13 = sbr.rel (0) target = $region13
  $region12: #{g2_gnn_forward.11} parent=0 // pred_region
    _
  $region13: #{g2_gnn_forward.11} parent=0 // pred_fallthru
    _
  %v15 = vld [vmem:[%s0] sm:$0xff]
  %v16 = vld [vmem:[%s0 + $0x8] sm:$0xff]
  %v17 = vld [vmem:[%s0 + $0x10] sm:$0xff]
  %v18 = vld [vmem:[%s0 + $0x18] sm:$0xff]
  %v19 = vld [vmem:[%s0 + $0x20] sm:$0xff]
  %v20 = vld [vmem:[%s0 + $0x28] sm:$0xff]
  %v21 = vld [vmem:[%s0 + $0x30] sm:$0xff]
  %v22 = vld [vmem:[%s0 + $0x38] sm:$0xff]
  %v23 = vld [vmem:[%s0 + $0x40] sm:$0xff]
  %v24 = vld [vmem:[%s0 + $0x48] sm:$0xff]
  %v25 = vld [vmem:[%s0 + $0x50] sm:$0xff]
  %v26 = vld [vmem:[%s0 + $0x58] sm:$0xff]
  %v27 = vld [vmem:[%s0 + $0x60] sm:$0xff]
  %v28 = vld [vmem:[%s0 + $0x68] sm:$0xff]
  %v29 = vld [vmem:[%s0 + $0x70] sm:$0xff]
  %v30 = vld [vmem:[%s0 + $0x78] sm:$0xff]
  %v31 = vld [vmem:[%s0 + $0x80] sm:$0xff]
  %v32 = vld [vmem:[%s0 + $0x88] sm:$0xff]
  %v33 = vld [vmem:[%s0 + $0x90] sm:$0xff]
  %v34 = vld [vmem:[%s0 + $0x98] sm:$0xff]
  %v35 = vld [vmem:[%s0 + $0xa0] sm:$0xff]
  %v36 = vld [vmem:[%s0 + $0xa8] sm:$0xff]
  %v37 = vld [vmem:[%s0 + $0xb0] sm:$0xff]
  %v38 = vld [vmem:[%s0 + $0xb8] sm:$0xff]
  %v39 = vld [vmem:[%s0 + $0xc0] sm:$0xff]
  %v40 = vld [vmem:[%s0 + $0xc8] sm:$0xff]
  %v41 = vld [vmem:[%s0 + $0xd0] sm:$0xff]
  %v42 = vld [vmem:[%s0 + $0xd8] sm:$0xff]
  %v43 = vld [vmem:[%s0 + $0xe0] sm:$0xff]
  %v44 = vld [vmem:[%s0 + $0xe8] sm:$0xff]
  %v45 = vld [vmem:[%s0 + $0xf0] sm:$0xff]
  %v46 = vld [vmem:[%s0 + $0xf8] sm:$0xff]
  %v47 = vpack.c.bf16 %v16, %v15
  %v48 = vpack.c.bf16 %v18, %v17
  %v49 = vpack.c.bf16 %v20, %v19
  %v50 = vpack.c.bf16 %v22, %v21
  %v51 = vpack.c.bf16 %v24, %v23
  %v52 = vpack.c.bf16 %v26, %v25
  %v53 = vpack.c.bf16 %v28, %v27
  %v54 = vpack.c.bf16 %v30, %v29
  %v55 = vpack.c.bf16 %v32, %v31
  %v56 = vpack.c.bf16 %v34, %v33
  %v57 = vpack.c.bf16 %v36, %v35
  %v58 = vpack.c.bf16 %v38, %v37
  %v59 = vpack.c.bf16 %v40, %v39
  %v60 = vpack.c.bf16 %v42, %v41
  %v61 = vpack.c.bf16 %v44, %v43
  %v62 = vpack.c.bf16 %v46, %v45
  %v63 = vld [vmem:[%s1] sm:$0xf]
  %v64 = vld [vmem:[%s1 + $0x4] sm:$0xf]
  %v65 = vld [vmem:[%s1 + $0x8] sm:$0xf]
  %v66 = vld [vmem:[%s1 + $0xc] sm:$0xf]
  %v67 = vld [vmem:[%s1 + $0x10] sm:$0xf]
  %v68 = vld [vmem:[%s1 + $0x14] sm:$0xf]
  %v69 = vld [vmem:[%s1 + $0x18] sm:$0xf]
  %v70 = vld [vmem:[%s1 + $0x1c] sm:$0xf]
  %v71 = vld [vmem:[%s1 + $0x20] sm:$0xf]
  %v72 = vld [vmem:[%s1 + $0x24] sm:$0xf]
  %v73 = vld [vmem:[%s1 + $0x28] sm:$0xf]
  %v74 = vld [vmem:[%s1 + $0x2c] sm:$0xf]
  %v75 = vld [vmem:[%s1 + $0x30] sm:$0xf]
  %v76 = vld [vmem:[%s1 + $0x34] sm:$0xf]
  %v77 = vld [vmem:[%s1 + $0x38] sm:$0xf]
  %v78 = vld [vmem:[%s1 + $0x3c] sm:$0xf]
  %v79 = vld [vmem:[%s2] sm:$0x1]
  %v81 = vlaneseq
  %v82 = vshrl.u32 %v81, 7
  %v83 = vsub.s32 0, %v82
  %v84 = vrot.slane %v79, %v83
  %v102 = vunpack.c.l.b16 %v63
  %v103 = vunpack.c.l.b16 %v64
  %v104 = vunpack.c.l.b16 %v65
  %v105 = vunpack.c.l.b16 %v66
  %v106 = vunpack.c.l.b16 %v67
  %v107 = vunpack.c.l.b16 %v68
  %v108 = vunpack.c.l.b16 %v69
  %v109 = vunpack.c.l.b16 %v70
  %v110 = vunpack.c.l.b16 %v71
  %v111 = vunpack.c.l.b16 %v72
  %v112 = vunpack.c.l.b16 %v73
  %v113 = vunpack.c.l.b16 %v74
  %v114 = vunpack.c.l.b16 %v75
  %v115 = vunpack.c.l.b16 %v76
  %v116 = vunpack.c.l.b16 %v77
  %v117 = vunpack.c.l.b16 %v78
  %v118 = vpack.c.b16 %v103, %v102
  %v119 = vpack.c.b16 %v105, %v104
  %v120 = vpack.c.b16 %v107, %v106
  %v121 = vpack.c.b16 %v109, %v108
  %v122 = vpack.c.b16 %v111, %v110
  %v123 = vpack.c.b16 %v113, %v112
  %v124 = vpack.c.b16 %v115, %v114
  %v125 = vpack.c.b16 %v117, %v116
  %134 = vmatprep.subr.bf16.mxu0 0
  %135 = vmatpush1.bf16.msra.mxu0 %v118
  %136 = vmatprep.subr.bf16.mxu0 0
  %137 = vmatpush1.bf16.msra.mxu0 %v119
  %138 = vmatprep.subr.bf16.mxu0 0
  %139 = vmatpush1.bf16.msra.mxu0 %v120
  %140 = vmatprep.subr.bf16.mxu0 0
  %141 = vmatpush1.bf16.msra.mxu0 %v121
  %142 = vmatprep.subr.bf16.mxu0 0
  %143 = vmatpush1.bf16.msra.mxu0 %v122
  %144 = vmatprep.subr.bf16.mxu0 0
  %145 = vmatpush1.bf16.msra.mxu0 %v123
  %146 = vmatprep.subr.bf16.mxu0 0
  %147 = vmatpush1.bf16.msra.mxu0 %v124
  %148 = vmatprep.subr.bf16.mxu0 0
  %149 = vmatpush1.bf16.msra.mxu0 %v125
  %150 = vmatprep.subr.bf16.mxu0 0
  %151 = vmatpush1.bf16.msra.mxu0 0
  %152 = vmatprep.subr.bf16.mxu0 0
  %153 = vmatpush1.bf16.msra.mxu0 0
  %154 = vmatprep.subr.bf16.mxu0 0
  %155 = vmatpush1.bf16.msra.mxu0 0
  %156 = vmatprep.subr.bf16.mxu0 0
  %157 = vmatpush1.bf16.msra.mxu0 0
  %158 = vmatprep.subr.bf16.mxu0 0
  %159 = vmatpush1.bf16.msra.mxu0 0
  %160 = vmatprep.subr.bf16.mxu0 0
  %161 = vmatpush1.bf16.msra.mxu0 0
  %162 = vmatprep.subr.bf16.mxu0 0
  %163 = vmatpush1.bf16.msra.mxu0 0
  %164 = vmatprep.subr.bf16.mxu0 0
  %165 = vmatpush1.bf16.msra.mxu0 0
  %166 = vmatprep.mubr.bf16.mxu0 0
  %167 = vmatmul.mubr.bf16.gmra.mrb[0].mxu0 %v47
  %v168 = vpop.f32.mrb[0].mxu0
  %v169 = vadd.f32 %v84, %v168
  %v170 = vpop.f32.mrb[0].mxu0
  %v171 = vpop.f32.mrb[0].mxu0
  %v172 = vadd.f32 %v84, %v171
  %v173 = vpop.f32.mrb[0].mxu0
  %174 = vmatprep.mubr.bf16.mxu0 0
  %175 = vmatmul.mubr.bf16.gmra.mrb[0].mxu0 %v48
  %v176 = vpop.f32.mrb[0].mxu0
  %v177 = vadd.f32 %v84, %v176
  %v178 = vpop.f32.mrb[0].mxu0
  %v179 = vpop.f32.mrb[0].mxu0
  %v180 = vadd.f32 %v84, %v179
  %v181 = vpop.f32.mrb[0].mxu0
  %182 = vmatprep.mubr.bf16.mxu0 0
  %183 = vmatmul.mubr.bf16.gmra.mrb[0].mxu0 %v49
  %v184 = vpop.f32.mrb[0].mxu0
  %v185 = vadd.f32 %v84, %v184
  %v186 = vpop.f32.mrb[0].mxu0
  %v187 = vpop.f32.mrb[0].mxu0
  %v188 = vadd.f32 %v84, %v187
  %v189 = vpop.f32.mrb[0].mxu0
  %190 = vmatprep.mubr.bf16.mxu0 0
  %191 = vmatmul.mubr.bf16.gmra.mrb[0].mxu0 %v50
  %v192 = vpop.f32.mrb[0].mxu0
  %v193 = vadd.f32 %v84, %v192
  %v194 = vpop.f32.mrb[0].mxu0
  %v195 = vpop.f32.mrb[0].mxu0
  %v196 = vadd.f32 %v84, %v195
  %v197 = vpop.f32.mrb[0].mxu0
  %198 = vmatprep.mubr.bf16.mxu0 0
  %199 = vmatmul.mubr.bf16.gmra.mrb[0].mxu0 %v51
  %v200 = vpop.f32.mrb[0].mxu0
  %v201 = vadd.f32 %v84, %v200
  %v202 = vpop.f32.mrb[0].mxu0
  %v203 = vpop.f32.mrb[0].mxu0
  %v204 = vadd.f32 %v84, %v203
  %v205 = vpop.f32.mrb[0].mxu0
  %206 = vmatprep.mubr.bf16.mxu0 0
  %207 = vmatmul.mubr.bf16.gmra.mrb[0].mxu0 %v52
  %v208 = vpop.f32.mrb[0].mxu0
  %v209 = vadd.f32 %v84, %v208
  %v210 = vpop.f32.mrb[0].mxu0
  %v211 = vpop.f32.mrb[0].mxu0
  %v212 = vadd.f32 %v84, %v211
  %v213 = vpop.f32.mrb[0].mxu0
  %214 = vmatprep.mubr.bf16.mxu0 0
  %215 = vmatmul.mubr.bf16.gmra.mrb[0].mxu0 %v53
  %v216 = vpop.f32.mrb[0].mxu0
  %v217 = vadd.f32 %v84, %v216
  %v218 = vpop.f32.mrb[0].mxu0
  %v219 = vpop.f32.mrb[0].mxu0
  %v220 = vadd.f32 %v84, %v219
  %v221 = vpop.f32.mrb[0].mxu0
  %222 = vmatprep.mubr.bf16.mxu0 0
  %223 = vmatmul.mubr.bf16.gmra.mrb[0].mxu0 %v54
  %v224 = vpop.f32.mrb[0].mxu0
  %v225 = vadd.f32 %v84, %v224
  %v226 = vpop.f32.mrb[0].mxu0
  %v227 = vpop.f32.mrb[0].mxu0
  %v228 = vadd.f32 %v84, %v227
  %v229 = vpop.f32.mrb[0].mxu0
  %230 = vmatprep.mubr.bf16.mxu0 0
  %231 = vmatmul.mubr.bf16.gmra.mrb[0].mxu0 %v55
  %v232 = vpop.f32.mrb[0].mxu0
  %v233 = vadd.f32 %v84, %v232
  %v234 = vpop.f32.mrb[0].mxu0
  %v235 = vpop.f32.mrb[0].mxu0
  %v236 = vadd.f32 %v84, %v235
  %v237 = vpop.f32.mrb[0].mxu0
  %238 = vmatprep.mubr.bf16.mxu0 0
  %239 = vmatmul.mubr.bf16.gmra.mrb[0].mxu0 %v56
  %v240 = vpop.f32.mrb[0].mxu0
  %v241 = vadd.f32 %v84, %v240
  %v242 = vpop.f32.mrb[0].mxu0
  %v243 = vpop.f32.mrb[0].mxu0
  %v244 = vadd.f32 %v84, %v243
  %v245 = vpop.f32.mrb[0].mxu0
  %246 = vmatprep.mubr.bf16.mxu0 0
  %247 = vmatmul.mubr.bf16.gmra.mrb[0].mxu0 %v57
  %v248 = vpop.f32.mrb[0].mxu0
  %v249 = vadd.f32 %v84, %v248
  %v250 = vpop.f32.mrb[0].mxu0
  %v251 = vpop.f32.mrb[0].mxu0
  %v252 = vadd.f32 %v84, %v251
  %v253 = vpop.f32.mrb[0].mxu0
  %254 = vmatprep.mubr.bf16.mxu0 0
  %255 = vmatmul.mubr.bf16.gmra.mrb[0].mxu0 %v58
  %v256 = vpop.f32.mrb[0].mxu0
  %v257 = vadd.f32 %v84, %v256
  %v258 = vpop.f32.mrb[0].mxu0
  %v259 = vpop.f32.mrb[0].mxu0
  %v260 = vadd.f32 %v84, %v259
  %v261 = vpop.f32.mrb[0].mxu0
  %262 = vmatprep.mubr.bf16.mxu0 0
  %263 = vmatmul.mubr.bf16.gmra.mrb[0].mxu0 %v59
  %v264 = vpop.f32.mrb[0].mxu0
  %v265 = vadd.f32 %v84, %v264
  %v266 = vpop.f32.mrb[0].mxu0
  %v267 = vpop.f32.mrb[0].mxu0
  %v268 = vadd.f32 %v84, %v267
  %v269 = vpop.f32.mrb[0].mxu0
  %270 = vmatprep.mubr.bf16.mxu0 0
  %271 = vmatmul.mubr.bf16.gmra.mrb[0].mxu0 %v60
  %v272 = vpop.f32.mrb[0].mxu0
  %v273 = vadd.f32 %v84, %v272
  %v274 = vpop.f32.mrb[0].mxu0
  %v275 = vpop.f32.mrb[0].mxu0
  %v276 = vadd.f32 %v84, %v275
  %v277 = vpop.f32.mrb[0].mxu0
  %278 = vmatprep.mubr.bf16.mxu0 0
  %279 = vmatmul.mubr.bf16.gmra.mrb[0].mxu0 %v61
  %v280 = vpop.f32.mrb[0].mxu0
  %v281 = vadd.f32 %v84, %v280
  %v282 = vpop.f32.mrb[0].mxu0
  %v283 = vpop.f32.mrb[0].mxu0
  %v284 = vadd.f32 %v84, %v283
  %v285 = vpop.f32.mrb[0].mxu0
  %286 = vmatprep.mubr.bf16.mxu0 0
  %287 = vmatmul.mubr.bf16.gmra.mrb[0].mxu0 %v62
  %v288 = vpop.f32.mrb[0].mxu0
  %v289 = vadd.f32 %v84, %v288
  %v290 = vpop.f32.mrb[0].mxu0
  %v291 = vpop.f32.mrb[0].mxu0
  %v292 = vadd.f32 %v84, %v291
  %v293 = vpop.f32.mrb[0].mxu0
  %294 = vdwg.mxu0
  %295 = vst [vmem:[%s3] sm:$0xff] %v169
  %296 = vst [vmem:[%s3 + $0x8] sm:$0xff] %v172
  %297 = vst [vmem:[%s3 + $0x10] sm:$0xff] %v177
  %298 = vst [vmem:[%s3 + $0x18] sm:$0xff] %v180
  %299 = vst [vmem:[%s3 + $0x20] sm:$0xff] %v185
  %300 = vst [vmem:[%s3 + $0x28] sm:$0xff] %v188
  %301 = vst [vmem:[%s3 + $0x30] sm:$0xff] %v193
  %302 = vst [vmem:[%s3 + $0x38] sm:$0xff] %v196
  %303 = vst [vmem:[%s3 + $0x40] sm:$0xff] %v201
  %304 = vst [vmem:[%s3 + $0x48] sm:$0xff] %v204
  %305 = vst [vmem:[%s3 + $0x50] sm:$0xff] %v209
  %306 = vst [vmem:[%s3 + $0x58] sm:$0xff] %v212
  %307 = vst [vmem:[%s3 + $0x60] sm:$0xff] %v217
  %308 = vst [vmem:[%s3 + $0x68] sm:$0xff] %v220
  %309 = vst [vmem:[%s3 + $0x70] sm:$0xff] %v225
  %310 = vst [vmem:[%s3 + $0x78] sm:$0xff] %v228
  %311 = vst [vmem:[%s3 + $0x80] sm:$0xff] %v233
  %312 = vst [vmem:[%s3 + $0x88] sm:$0xff] %v236
  %313 = vst [vmem:[%s3 + $0x90] sm:$0xff] %v241
  %314 = vst [vmem:[%s3 + $0x98] sm:$0xff] %v244
  %315 = vst [vmem:[%s3 + $0xa0] sm:$0xff] %v249
  %316 = vst [vmem:[%s3 + $0xa8] sm:$0xff] %v252
  %317 = vst [vmem:[%s3 + $0xb0] sm:$0xff] %v257
  %318 = vst [vmem:[%s3 + $0xb8] sm:$0xff] %v260
  %319 = vst [vmem:[%s3 + $0xc0] sm:$0xff] %v265
  %320 = vst [vmem:[%s3 + $0xc8] sm:$0xff] %v268
  %321 = vst [vmem:[%s3 + $0xd0] sm:$0xff] %v273
  %322 = vst [vmem:[%s3 + $0xd8] sm:$0xff] %v276
  %323 = vst [vmem:[%s3 + $0xe0] sm:$0xff] %v281
  %324 = vst [vmem:[%s3 + $0xe8] sm:$0xff] %v284
  %325 = vst [vmem:[%s3 + $0xf0] sm:$0xff] %v289
  %326 = vst [vmem:[%s3 + $0xf8] sm:$0xff] %v292
  // Predicated region
  $region14: #{g2_gnn_forward.11} parent=0 // pred_check
    _
  $region15: #{g2_gnn_forward.11} parent=0 // pred_check_branch
    %328 = sbr.rel (0) target = $region17
  $region16: #{g2_gnn_forward.11} parent=0 // pred_region
    _
  $region17: #{g2_gnn_forward.11} parent=0 // pred_fallthru
    _
  // Predicated region
  $region18: #{g2_gnn_forward.11} parent=0 // pred_check
    _
  $region19: #{g2_gnn_forward.11} parent=0 // pred_check_branch
    %330 = sbr.rel (0) target = $region21
  $region20: #{g2_gnn_forward.11} parent=0 // pred_region
    _
  $region21: #{g2_gnn_forward.11} parent=0 // pred_fallthru
    _

// kernel: g2_gnn_forward.8
$region0: #{g2_gnn_forward.8}
  #allocation0 [shape = 'u32[]', space=smem, size = 0x4, offset = 0x4, fixed_abs, tag = 'smem constant byte address 0x4 - core index']
  #allocation1 [shape = 'u32[144,128]{1,0:T(1,128)}', space=vmem, size = 0x12000, scoped, tag = 'internal scratch']
  #allocation2 [shape = 'f32[256,256]{1,0:T(8,128)}', space=vmem, size = 0x40000, scoped, tag = 'scratch operand']
  %s0 = inlined_call_operand.vmem [shape: s8[256,256], index: 0, kind: input, shape index: {}]
  %s1 = inlined_call_operand.vmem [shape: bf16[256,256], index: 1, kind: input, shape index: {}]
  %s2 = inlined_call_operand.vmem [shape: f32[256,128], index: 2, kind: input, shape index: {}]
  %s3 = inlined_call_operand.vmem [shape: f32[256,8], index: 3, kind: input, shape index: {}]
  %s4 = inlined_call_operand.vmem [shape: f32[1,128], index: 4, kind: input, shape index: {}]
  %s5 = inlined_call_operand.vmem [shape: f32[256,128], index: 5, kind: output, shape index: {}]
  %s6 = sld [smem:[#allocation0]]
  $region38: #{g2_gnn_forward.8} parent=0
    _
  %s8 = ssub.s32 1, %s6
  %s9 = scalar_select 0, %s8, %s6
  // Predicated region
  $region2: #{g2_gnn_forward.8} parent=0 // pred_check
    _
  $region3: #{g2_gnn_forward.8} parent=0 // pred_check_branch
    %11 = sbr.rel (0) target = $region5
  $region4: #{g2_gnn_forward.8} parent=0 // pred_region
    _
  $region5: #{g2_gnn_forward.8} parent=0 // pred_fallthru
    _
  // Predicated region
  $region6: #{g2_gnn_forward.8} parent=0 // pred_check
    _
  $region7: #{g2_gnn_forward.8} parent=0 // pred_check_branch
    %13 = sbr.rel (0) target = $region9
  $region8: #{g2_gnn_forward.8} parent=0 // pred_region
    _
  $region9: #{g2_gnn_forward.8} parent=0 // pred_fallthru
    _
  // Predicated region
  $region10: #{g2_gnn_forward.8} parent=0 // pred_check
    _
  $region11: #{g2_gnn_forward.8} parent=0 // pred_check_branch
    %15 = sbr.rel (0) target = $region13
  $region12: #{g2_gnn_forward.8} parent=0 // pred_region
    _
  $region13: #{g2_gnn_forward.8} parent=0 // pred_fallthru
    _
  // Predicated region
  $region14: #{g2_gnn_forward.8} parent=0 // pred_check
    _
  $region15: #{g2_gnn_forward.8} parent=0 // pred_check_branch
    %17 = sbr.rel (0) target = $region17
  $region16: #{g2_gnn_forward.8} parent=0 // pred_region
    _
  $region17: #{g2_gnn_forward.8} parent=0 // pred_fallthru
    _
  // Predicated region
  $region18: #{g2_gnn_forward.8} parent=0 // pred_check
    _
  $region19: #{g2_gnn_forward.8} parent=0 // pred_check_branch
    %19 = sbr.rel (0) target = $region21
  $region20: #{g2_gnn_forward.8} parent=0 // pred_region
    _
  $region21: #{g2_gnn_forward.8} parent=0 // pred_fallthru
    _
  %p20 = scmp.eq.s32.totalorder 0, 0
  // Predicated region
  $region22: #{g2_gnn_forward.8} parent=0 // pred_check
    %p21 = pneg %p20
  $region23: #{g2_gnn_forward.8} parent=0 // pred_check_branch
    %23 = sbr.rel (%p21) target = $region25
  $region24: #{g2_gnn_forward.8} parent=0 // pred_region
    %24 = vst [vmem:[#allocation2] sm:$0xff] 0.0
    %25 = vst [vmem:[#allocation2 + $0x8] sm:$0xff] 0.0
    %26 = vst [vmem:[#allocation2 + $0x10] sm:$0xff] 0.0
    %27 = vst [vmem:[#allocation2 + $0x18] sm:$0xff] 0.0
    %28 = vst [vmem:[#allocation2 + $0x20] sm:$0xff] 0.0
    %29 = vst [vmem:[#allocation2 + $0x28] sm:$0xff] 0.0
    %30 = vst [vmem:[#allocation2 + $0x30] sm:$0xff] 0.0
    %31 = vst [vmem:[#allocation2 + $0x38] sm:$0xff] 0.0
    %32 = vst [vmem:[#allocation2 + $0x40] sm:$0xff] 0.0
    %33 = vst [vmem:[#allocation2 + $0x48] sm:$0xff] 0.0
    %34 = vst [vmem:[#allocation2 + $0x50] sm:$0xff] 0.0
    %35 = vst [vmem:[#allocation2 + $0x58] sm:$0xff] 0.0
    %36 = vst [vmem:[#allocation2 + $0x60] sm:$0xff] 0.0
    %37 = vst [vmem:[#allocation2 + $0x68] sm:$0xff] 0.0
    %38 = vst [vmem:[#allocation2 + $0x70] sm:$0xff] 0.0
    %39 = vst [vmem:[#allocation2 + $0x78] sm:$0xff] 0.0
    %40 = vst [vmem:[#allocation2 + $0x80] sm:$0xff] 0.0
    %41 = vst [vmem:[#allocation2 + $0x88] sm:$0xff] 0.0
    %42 = vst [vmem:[#allocation2 + $0x90] sm:$0xff] 0.0
    %43 = vst [vmem:[#allocation2 + $0x98] sm:$0xff] 0.0
    %44 = vst [vmem:[#allocation2 + $0xa0] sm:$0xff] 0.0
    %45 = vst [vmem:[#allocation2 + $0xa8] sm:$0xff] 0.0
    %46 = vst [vmem:[#allocation2 + $0xb0] sm:$0xff] 0.0
    %47 = vst [vmem:[#allocation2 + $0xb8] sm:$0xff] 0.0
    %48 = vst [vmem:[#allocation2 + $0xc0] sm:$0xff] 0.0
    %49 = vst [vmem:[#allocation2 + $0xc8] sm:$0xff] 0.0
    %50 = vst [vmem:[#allocation2 + $0xd0] sm:$0xff] 0.0
    %51 = vst [vmem:[#allocation2 + $0xd8] sm:$0xff] 0.0
    %52 = vst [vmem:[#allocation2 + $0xe0] sm:$0xff] 0.0
    %53 = vst [vmem:[#allocation2 + $0xe8] sm:$0xff] 0.0
    %54 = vst [vmem:[#allocation2 + $0xf0] sm:$0xff] 0.0
    %55 = vst [vmem:[#allocation2 + $0xf8] sm:$0xff] 0.0
    %56 = vst [vmem:[#allocation2 + $0x100] sm:$0xff] 0.0
    %57 = vst [vmem:[#allocation2 + $0x108] sm:$0xff] 0.0
    %58 = vst [vmem:[#allocation2 + $0x110] sm:$0xff] 0.0
    %59 = vst [vmem:[#allocation2 + $0x118] sm:$0xff] 0.0
    %60 = vst [vmem:[#allocation2 + $0x120] sm:$0xff] 0.0
    %61 = vst [vmem:[#allocation2 + $0x128] sm:$0xff] 0.0
    %62 = vst [vmem:[#allocation2 + $0x130] sm:$0xff] 0.0
    %63 = vst [vmem:[#allocation2 + $0x138] sm:$0xff] 0.0
    %64 = vst [vmem:[#allocation2 + $0x140] sm:$0xff] 0.0
    %65 = vst [vmem:[#allocation2 + $0x148] sm:$0xff] 0.0
    %66 = vst [vmem:[#allocation2 + $0x150] sm:$0xff] 0.0
    %67 = vst [vmem:[#allocation2 + $0x158] sm:$0xff] 0.0
    %68 = vst [vmem:[#allocation2 + $0x160] sm:$0xff] 0.0
    %69 = vst [vmem:[#allocation2 + $0x168] sm:$0xff] 0.0
    %70 = vst [vmem:[#allocation2 + $0x170] sm:$0xff] 0.0
    %71 = vst [vmem:[#allocation2 + $0x178] sm:$0xff] 0.0
    %72 = vst [vmem:[#allocation2 + $0x180] sm:$0xff] 0.0
    %73 = vst [vmem:[#allocation2 + $0x188] sm:$0xff] 0.0
    %74 = vst [vmem:[#allocation2 + $0x190] sm:$0xff] 0.0
    %75 = vst [vmem:[#allocation2 + $0x198] sm:$0xff] 0.0
    %76 = vst [vmem:[#allocation2 + $0x1a0] sm:$0xff] 0.0
    %77 = vst [vmem:[#allocation2 + $0x1a8] sm:$0xff] 0.0
    %78 = vst [vmem:[#allocation2 + $0x1b0] sm:$0xff] 0.0
    %79 = vst [vmem:[#allocation2 + $0x1b8] sm:$0xff] 0.0
    %80 = vst [vmem:[#allocation2 + $0x1c0] sm:$0xff] 0.0
    %81 = vst [vmem:[#allocation2 + $0x1c8] sm:$0xff] 0.0
    %82 = vst [vmem:[#allocation2 + $0x1d0] sm:$0xff] 0.0
    %83 = vst [vmem:[#allocation2 + $0x1d8] sm:$0xff] 0.0
    %84 = vst [vmem:[#allocation2 + $0x1e0] sm:$0xff] 0.0
    %85 = vst [vmem:[#allocation2 + $0x1e8] sm:$0xff] 0.0
    %86 = vst [vmem:[#allocation2 + $0x1f0] sm:$0xff] 0.0
    %87 = vst [vmem:[#allocation2 + $0x1f8] sm:$0xff] 0.0
  $region25: #{g2_gnn_forward.8} parent=0 // pred_fallthru
    _
  %v88 = vld [vmem:[%s0] sm:$0xff]
  %v89 = vld [vmem:[%s0 + $0x8] sm:$0xff]
  %v90 = vld [vmem:[%s0 + $0x10] sm:$0xff]
  %v91 = vld [vmem:[%s0 + $0x18] sm:$0xff]
  %v92 = vld [vmem:[%s0 + $0x20] sm:$0xff]
  %v93 = vld [vmem:[%s0 + $0x28] sm:$0xff]
  %v94 = vld [vmem:[%s0 + $0x30] sm:$0xff]
  %v95 = vld [vmem:[%s0 + $0x38] sm:$0xff]
  %v96 = vld [vmem:[%s0 + $0x40] sm:$0xff]
  %v97 = vld [vmem:[%s0 + $0x48] sm:$0xff]
  %v98 = vld [vmem:[%s0 + $0x50] sm:$0xff]
  %v99 = vld [vmem:[%s0 + $0x58] sm:$0xff]
  %v100 = vld [vmem:[%s0 + $0x60] sm:$0xff]
  %v101 = vld [vmem:[%s0 + $0x68] sm:$0xff]
  %v102 = vld [vmem:[%s0 + $0x70] sm:$0xff]
  %v103 = vld [vmem:[%s0 + $0x78] sm:$0xff]
  %v104 = vunpack.c.l.s8.bf16 %v88
  %v105 = vunpack.c.l.s8.bf16 %v89
  %v106 = vunpack.c.h.s8.bf16 %v88
  %v107 = vunpack.c.h.s8.bf16 %v89
  %v108 = vunpack.c.l.s8.bf16 %v90
  %v109 = vunpack.c.l.s8.bf16 %v91
  %v110 = vunpack.c.h.s8.bf16 %v90
  %v111 = vunpack.c.h.s8.bf16 %v91
  %v112 = vunpack.c.l.s8.bf16 %v92
  %v113 = vunpack.c.l.s8.bf16 %v93
  %v114 = vunpack.c.h.s8.bf16 %v92
  %v115 = vunpack.c.h.s8.bf16 %v93
  %v116 = vunpack.c.l.s8.bf16 %v94
  %v117 = vunpack.c.l.s8.bf16 %v95
  %v118 = vunpack.c.h.s8.bf16 %v94
  %v119 = vunpack.c.h.s8.bf16 %v95
  %v120 = vunpack.c.l.s8.bf16 %v96
  %v121 = vunpack.c.l.s8.bf16 %v97
  %v122 = vunpack.c.h.s8.bf16 %v96
  %v123 = vunpack.c.h.s8.bf16 %v97
  %v124 = vunpack.c.l.s8.bf16 %v98
  %v125 = vunpack.c.l.s8.bf16 %v99
  %v126 = vunpack.c.h.s8.bf16 %v98
  %v127 = vunpack.c.h.s8.bf16 %v99
  %v128 = vunpack.c.l.s8.bf16 %v100
  %v129 = vunpack.c.l.s8.bf16 %v101
  %v130 = vunpack.c.h.s8.bf16 %v100
  %v131 = vunpack.c.h.s8.bf16 %v101
  %v132 = vunpack.c.l.s8.bf16 %v102
  %v133 = vunpack.c.l.s8.bf16 %v103
  %v134 = vunpack.c.h.s8.bf16 %v102
  %v135 = vunpack.c.h.s8.bf16 %v103
  %v136 = vld [vmem:[#allocation2] sm:$0xff]
  %v137 = vld [vmem:[#allocation2 + $0x8] sm:$0xff]
  %v138 = vld [vmem:[#allocation2 + $0x10] sm:$0xff]
  %v139 = vld [vmem:[#allocation2 + $0x18] sm:$0xff]
  %v140 = vld [vmem:[#allocation2 + $0x20] sm:$0xff]
  %v141 = vld [vmem:[#allocation2 + $0x28] sm:$0xff]
  %v142 = vld [vmem:[#allocation2 + $0x30] sm:$0xff]
  %v143 = vld [vmem:[#allocation2 + $0x38] sm:$0xff]
  %v144 = vld [vmem:[#allocation2 + $0x40] sm:$0xff]
  %v145 = vld [vmem:[#allocation2 + $0x48] sm:$0xff]
  %v146 = vld [vmem:[#allocation2 + $0x50] sm:$0xff]
  %v147 = vld [vmem:[#allocation2 + $0x58] sm:$0xff]
  %v148 = vld [vmem:[#allocation2 + $0x60] sm:$0xff]
  %v149 = vld [vmem:[#allocation2 + $0x68] sm:$0xff]
  %v150 = vld [vmem:[#allocation2 + $0x70] sm:$0xff]
  %v151 = vld [vmem:[#allocation2 + $0x78] sm:$0xff]
  %v152 = vld [vmem:[#allocation2 + $0x80] sm:$0xff]
  %v153 = vld [vmem:[#allocation2 + $0x88] sm:$0xff]
  %v154 = vld [vmem:[#allocation2 + $0x90] sm:$0xff]
  %v155 = vld [vmem:[#allocation2 + $0x98] sm:$0xff]
  %v156 = vld [vmem:[#allocation2 + $0xa0] sm:$0xff]
  %v157 = vld [vmem:[#allocation2 + $0xa8] sm:$0xff]
  %v158 = vld [vmem:[#allocation2 + $0xb0] sm:$0xff]
  %v159 = vld [vmem:[#allocation2 + $0xb8] sm:$0xff]
  %v160 = vld [vmem:[#allocation2 + $0xc0] sm:$0xff]
  %v161 = vld [vmem:[#allocation2 + $0xc8] sm:$0xff]
  %v162 = vld [vmem:[#allocation2 + $0xd0] sm:$0xff]
  %v163 = vld [vmem:[#allocation2 + $0xd8] sm:$0xff]
  %v164 = vld [vmem:[#allocation2 + $0xe0] sm:$0xff]
  %v165 = vld [vmem:[#allocation2 + $0xe8] sm:$0xff]
  %v166 = vld [vmem:[#allocation2 + $0xf0] sm:$0xff]
  %v167 = vld [vmem:[#allocation2 + $0xf8] sm:$0xff]
  %v168 = vld [vmem:[#allocation2 + $0x100] sm:$0xff]
  %v169 = vld [vmem:[#allocation2 + $0x108] sm:$0xff]
  %v170 = vld [vmem:[#allocation2 + $0x110] sm:$0xff]
  %v171 = vld [vmem:[#allocation2 + $0x118] sm:$0xff]
  %v172 = vld [vmem:[#allocation2 + $0x120] sm:$0xff]
  %v173 = vld [vmem:[#allocation2 + $0x128] sm:$0xff]
  %v174 = vld [vmem:[#allocation2 + $0x130] sm:$0xff]
  %v175 = vld [vmem:[#allocation2 + $0x138] sm:$0xff]
  %v176 = vld [vmem:[#allocation2 + $0x140] sm:$0xff]
  %v177 = vld [vmem:[#allocation2 + $0x148] sm:$0xff]
  %v178 = vld [vmem:[#allocation2 + $0x150] sm:$0xff]
  %v179 = vld [vmem:[#allocation2 + $0x158] sm:$0xff]
  %v180 = vld [vmem:[#allocation2 + $0x160] sm:$0xff]
  %v181 = vld [vmem:[#allocation2 + $0x168] sm:$0xff]
  %v182 = vld [vmem:[#allocation2 + $0x170] sm:$0xff]
  %v183 = vld [vmem:[#allocation2 + $0x178] sm:$0xff]
  %v184 = vld [vmem:[#allocation2 + $0x180] sm:$0xff]
  %v185 = vld [vmem:[#allocation2 + $0x188] sm:$0xff]
  %v186 = vld [vmem:[#allocation2 + $0x190] sm:$0xff]
  %v187 = vld [vmem:[#allocation2 + $0x198] sm:$0xff]
  %v188 = vld [vmem:[#allocation2 + $0x1a0] sm:$0xff]
  %v189 = vld [vmem:[#allocation2 + $0x1a8] sm:$0xff]
  %v190 = vld [vmem:[#allocation2 + $0x1b0] sm:$0xff]
  %v191 = vld [vmem:[#allocation2 + $0x1b8] sm:$0xff]
  %v192 = vld [vmem:[#allocation2 + $0x1c0] sm:$0xff]
  %v193 = vld [vmem:[#allocation2 + $0x1c8] sm:$0xff]
  %v194 = vld [vmem:[#allocation2 + $0x1d0] sm:$0xff]
  %v195 = vld [vmem:[#allocation2 + $0x1d8] sm:$0xff]
  %v196 = vld [vmem:[#allocation2 + $0x1e0] sm:$0xff]
  %v197 = vld [vmem:[#allocation2 + $0x1e8] sm:$0xff]
  %v198 = vld [vmem:[#allocation2 + $0x1f0] sm:$0xff]
  %v199 = vld [vmem:[#allocation2 + $0x1f8] sm:$0xff]
  %v200 = vld [vmem:[%s1] sm:$0xff]
  %v201 = vld [vmem:[%s1 + $0x8] sm:$0xff]
  %v202 = vld [vmem:[%s1 + $0x10] sm:$0xff]
  %v203 = vld [vmem:[%s1 + $0x18] sm:$0xff]
  %v204 = vld [vmem:[%s1 + $0x20] sm:$0xff]
  %v205 = vld [vmem:[%s1 + $0x28] sm:$0xff]
  %v206 = vld [vmem:[%s1 + $0x30] sm:$0xff]
  %v207 = vld [vmem:[%s1 + $0x38] sm:$0xff]
  %v208 = vld [vmem:[%s1 + $0x40] sm:$0xff]
  %v209 = vld [vmem:[%s1 + $0x48] sm:$0xff]
  %v210 = vld [vmem:[%s1 + $0x50] sm:$0xff]
  %v211 = vld [vmem:[%s1 + $0x58] sm:$0xff]
  %v212 = vld [vmem:[%s1 + $0x60] sm:$0xff]
  %v213 = vld [vmem:[%s1 + $0x68] sm:$0xff]
  %v214 = vld [vmem:[%s1 + $0x70] sm:$0xff]
  %v215 = vld [vmem:[%s1 + $0x78] sm:$0xff]
  %v216 = vld [vmem:[%s1 + $0x80] sm:$0xff]
  %v217 = vld [vmem:[%s1 + $0x88] sm:$0xff]
  %v218 = vld [vmem:[%s1 + $0x90] sm:$0xff]
  %v219 = vld [vmem:[%s1 + $0x98] sm:$0xff]
  %v220 = vld [vmem:[%s1 + $0xa0] sm:$0xff]
  %v221 = vld [vmem:[%s1 + $0xa8] sm:$0xff]
  %v222 = vld [vmem:[%s1 + $0xb0] sm:$0xff]
  %v223 = vld [vmem:[%s1 + $0xb8] sm:$0xff]
  %v224 = vld [vmem:[%s1 + $0xc0] sm:$0xff]
  %v225 = vld [vmem:[%s1 + $0xc8] sm:$0xff]
  %v226 = vld [vmem:[%s1 + $0xd0] sm:$0xff]
  %v227 = vld [vmem:[%s1 + $0xd8] sm:$0xff]
  %v228 = vld [vmem:[%s1 + $0xe0] sm:$0xff]
  %v229 = vld [vmem:[%s1 + $0xe8] sm:$0xff]
  %v230 = vld [vmem:[%s1 + $0xf0] sm:$0xff]
  %v231 = vld [vmem:[%s1 + $0xf8] sm:$0xff]
  %v264 = vunpack.c.l.b16 %v200
  %v265 = vunpack.c.h.b16 %v200
  %v266 = vunpack.c.l.b16 %v201
  %v267 = vunpack.c.h.b16 %v201
  %v268 = vunpack.c.l.b16 %v202
  %v269 = vunpack.c.h.b16 %v202
  %v270 = vunpack.c.l.b16 %v203
  %v271 = vunpack.c.h.b16 %v203
  %v272 = vunpack.c.l.b16 %v204
  %v273 = vunpack.c.h.b16 %v204
  %v274 = vunpack.c.l.b16 %v205
  %v275 = vunpack.c.h.b16 %v205
  %v276 = vunpack.c.l.b16 %v206
  %v277 = vunpack.c.h.b16 %v206
  %v278 = vunpack.c.l.b16 %v207
  %v279 = vunpack.c.h.b16 %v207
  %v280 = vunpack.c.l.b16 %v208
  %v281 = vunpack.c.h.b16 %v208
  %v282 = vunpack.c.l.b16 %v209
  %v283 = vunpack.c.h.b16 %v209
  %v284 = vunpack.c.l.b16 %v210
  %v285 = vunpack.c.h.b16 %v210
  %v286 = vunpack.c.l.b16 %v211
  %v287 = vunpack.c.h.b16 %v211
  %v288 = vunpack.c.l.b16 %v212
  %v289 = vunpack.c.h.b16 %v212
  %v290 = vunpack.c.l.b16 %v213
  %v291 = vunpack.c.h.b16 %v213
  %v292 = vunpack.c.l.b16 %v214
  %v293 = vunpack.c.h.b16 %v214
  %v294 = vunpack.c.l.b16 %v215
  %v295 = vunpack.c.h.b16 %v215
  %v296 = vunpack.c.l.b16 %v216
  %v297 = vunpack.c.h.b16 %v216
  %v298 = vunpack.c.l.b16 %v217
  %v299 = vunpack.c.h.b16 %v217
  %v300 = vunpack.c.l.b16 %v218
  %v301 = vunpack.c.h.b16 %v218
  %v302 = vunpack.c.l.b16 %v219
  %v303 = vunpack.c.h.b16 %v219
  %v304 = vunpack.c.l.b16 %v220
  %v305 = vunpack.c.h.b16 %v220
  %v306 = vunpack.c.l.b16 %v221
  %v307 = vunpack.c.h.b16 %v221
  %v308 = vunpack.c.l.b16 %v222
  %v309 = vunpack.c.h.b16 %v222
  %v310 = vunpack.c.l.b16 %v223
  %v311 = vunpack.c.h.b16 %v223
  %v312 = vunpack.c.l.b16 %v224
  %v313 = vunpack.c.h.b16 %v224
  %v314 = vunpack.c.l.b16 %v225
  %v315 = vunpack.c.h.b16 %v225
  %v316 = vunpack.c.l.b16 %v226
  %v317 = vunpack.c.h.b16 %v226
  %v318 = vunpack.c.l.b16 %v227
  %v319 = vunpack.c.h.b16 %v227
  %v320 = vunpack.c.l.b16 %v228
  %v321 = vunpack.c.h.b16 %v228
  %v322 = vunpack.c.l.b16 %v229
  %v323 = vunpack.c.h.b16 %v229
  %v324 = vunpack.c.l.b16 %v230
  %v325 = vunpack.c.h.b16 %v230
  %v326 = vunpack.c.l.b16 %v231
  %v327 = vunpack.c.h.b16 %v231
  %v328 = vpack.c.b16 %v266, %v264
  %v329 = vpack.c.b16 %v267, %v265
  %v330 = vpack.c.b16 %v270, %v268
  %v331 = vpack.c.b16 %v271, %v269
  %v332 = vpack.c.b16 %v274, %v272
  %v333 = vpack.c.b16 %v275, %v273
  %v334 = vpack.c.b16 %v278, %v276
  %v335 = vpack.c.b16 %v279, %v277
  %v336 = vpack.c.b16 %v282, %v280
  %v337 = vpack.c.b16 %v283, %v281
  %v338 = vpack.c.b16 %v286, %v284
  %v339 = vpack.c.b16 %v287, %v285
  %v340 = vpack.c.b16 %v290, %v288
  %v341 = vpack.c.b16 %v291, %v289
  %v342 = vpack.c.b16 %v294, %v292
  %v343 = vpack.c.b16 %v295, %v293
  %v344 = vpack.c.b16 %v298, %v296
  %v345 = vpack.c.b16 %v299, %v297
  %v346 = vpack.c.b16 %v302, %v300
  %v347 = vpack.c.b16 %v303, %v301
  %v348 = vpack.c.b16 %v306, %v304
  %v349 = vpack.c.b16 %v307, %v305
  %v350 = vpack.c.b16 %v310, %v308
  %v351 = vpack.c.b16 %v311, %v309
  %v352 = vpack.c.b16 %v314, %v312
  %v353 = vpack.c.b16 %v315, %v313
  %v354 = vpack.c.b16 %v318, %v316
  %v355 = vpack.c.b16 %v319, %v317
  %v356 = vpack.c.b16 %v322, %v320
  %v357 = vpack.c.b16 %v323, %v321
  %v358 = vpack.c.b16 %v326, %v324
  %v359 = vpack.c.b16 %v327, %v325
  %392 = vmatprep.subr.bf16.mxu0 %v329
  %393 = vmatpush1.bf16.msra.mxu0 %v328
  %394 = vmatprep.subr.bf16.mxu0 %v331
  %395 = vmatpush1.bf16.msra.mxu0 %v330
  %396 = vmatprep.subr.bf16.mxu0 %v333
  %397 = vmatpush1.bf16.msra.mxu0 %v332
  %398 = vmatprep.subr.bf16.mxu0 %v335
  %399 = vmatpush1.bf16.msra.mxu0 %v334
  %400 = vmatprep.subr.bf16.mxu0 %v337
  %401 = vmatpush1.bf16.msra.mxu0 %v336
  %402 = vmatprep.subr.bf16.mxu0 %v339
  %403 = vmatpush1.bf16.msra.mxu0 %v338
  %404 = vmatprep.subr.bf16.mxu0 %v341
  %405 = vmatpush1.bf16.msra.mxu0 %v340
  %406 = vmatprep.subr.bf16.mxu0 %v343
  %407 = vmatpush1.bf16.msra.mxu0 %v342
  %408 = vmatprep.subr.bf16.mxu0 %v345
  %409 = vmatpush1.bf16.msra.mxu0 %v344
  %410 = vmatprep.subr.bf16.mxu0 %v347
  %411 = vmatpush1.bf16.msra.mxu0 %v346
  %412 = vmatprep.subr.bf16.mxu0 %v349
  %413 = vmatpush1.bf16.msra.mxu0 %v348
  %414 = vmatprep.subr.bf16.mxu0 %v351
  %415 = vmatpush1.bf16.msra.mxu0 %v350
  %416 = vmatprep.subr.bf16.mxu0 %v353
  %417 = vmatpush1.bf16.msra.mxu0 %v352
  %418 = vmatprep.subr.bf16.mxu0 %v355
  %419 = vmatpush1.bf16.msra.mxu0 %v354
  %420 = vmatprep.subr.bf16.mxu0 %v357
  %421 = vmatpush1.bf16.msra.mxu0 %v356
  %422 = vmatprep.subr.bf16.mxu0 %v359
  %423 = vmatpush1.bf16.msra.mxu0 %v358
  %424 = vmatprep.mubr.bf16.mxu0 %v105
  %425 = vmatmul.mubr.bf16.gmra.mrb[0].mxu0 %v104
  %v426 = vpop.f32.mrb[0].mxu0
  %v427 = vadd.f32 0.0, %v426
  %v428 = vpop.f32.mrb[0].mxu0
  %v429 = vadd.f32 0.0, %v428
  %v430 = vpop.f32.mrb[0].mxu0
  %v431 = vadd.f32 0.0, %v430
  %v432 = vpop.f32.mrb[0].mxu0
  %v433 = vadd.f32 0.0, %v432
  %434 = vmatprep.mubr.bf16.mxu0 %v107
  %435 = vmatmul.mubr.bf16.gmra.mrb[0].mxu0 %v106
  %v436 = vpop.f32.mrb[0].mxu0
  %v437 = vadd.f32 0.0, %v436
  %v438 = vpop.f32.mrb[0].mxu0
  %v439 = vadd.f32 0.0, %v438
  %v440 = vpop.f32.mrb[0].mxu0
  %v441 = vadd.f32 0.0, %v440
  %v442 = vpop.f32.mrb[0].mxu0
  %v443 = vadd.f32 0.0, %v442
  %444 = vmatprep.mubr.bf16.mxu0 %v109
  %445 = vmatmul.mubr.bf16.gmra.mrb[0].mxu0 %v108
  %v446 = vpop.f32.mrb[0].mxu0
  %v447 = vadd.f32 0.0, %v446
  %v448 = vpop.f32.mrb[0].mxu0
  %v449 = vadd.f32 0.0, %v448
  %v450 = vpop.f32.mrb[0].mxu0
  %v451 = vadd.f32 0.0, %v450
  %v452 = vpop.f32.mrb[0].mxu0
  %v453 = vadd.f32 0.0, %v452
  %454 = vmatprep.mubr.bf16.mxu0 %v111
  %455 = vmatmul.mubr.bf16.gmra.mrb[0].mxu0 %v110
  %v456 = vpop.f32.mrb[0].mxu0
  %v457 = vadd.f32 0.0, %v456
  %v458 = vpop.f32.mrb[0].mxu0
  %v459 = vadd.f32 0.0, %v458
  %v460 = vpop.f32.mrb[0].mxu0
  %v461 = vadd.f32 0.0, %v460
  %v462 = vpop.f32.mrb[0].mxu0
  %v463 = vadd.f32 0.0, %v462
  %464 = vmatprep.mubr.bf16.mxu0 %v113
  %465 = vmatmul.mubr.bf16.gmra.mrb[0].mxu0 %v112
  %v466 = vpop.f32.mrb[0].mxu0
  %v467 = vadd.f32 0.0, %v466
  %v468 = vpop.f32.mrb[0].mxu0
  %v469 = vadd.f32 0.0, %v468
  %v470 = vpop.f32.mrb[0].mxu0
  %v471 = vadd.f32 0.0, %v470
  %v472 = vpop.f32.mrb[0].mxu0
  %v473 = vadd.f32 0.0, %v472
  %474 = vmatprep.mubr.bf16.mxu0 %v115
  %475 = vmatmul.mubr.bf16.gmra.mrb[0].mxu0 %v114
  %v476 = vpop.f32.mrb[0].mxu0
  %v477 = vadd.f32 0.0, %v476
  %v478 = vpop.f32.mrb[0].mxu0
  %v479 = vadd.f32 0.0, %v478
  %v480 = vpop.f32.mrb[0].mxu0
  %v481 = vadd.f32 0.0, %v480
  %v482 = vpop.f32.mrb[0].mxu0
  %v483 = vadd.f32 0.0, %v482
  %484 = vmatprep.mubr.bf16.mxu0 %v117
  %485 = vmatmul.mubr.bf16.gmra.mrb[0].mxu0 %v116
  %v486 = vpop.f32.mrb[0].mxu0
  %v487 = vadd.f32 0.0, %v486
  %v488 = vpop.f32.mrb[0].mxu0
  %v489 = vadd.f32 0.0, %v488
  %v490 = vpop.f32.mrb[0].mxu0
  %v491 = vadd.f32 0.0, %v490
  %v492 = vpop.f32.mrb[0].mxu0
  %v493 = vadd.f32 0.0, %v492
  %494 = vmatprep.mubr.bf16.mxu0 %v119
  %495 = vmatmul.mubr.bf16.gmra.mrb[0].mxu0 %v118
  %v496 = vpop.f32.mrb[0].mxu0
  %v497 = vadd.f32 0.0, %v496
  %v498 = vpop.f32.mrb[0].mxu0
  %v499 = vadd.f32 0.0, %v498
  %v500 = vpop.f32.mrb[0].mxu0
  %v501 = vadd.f32 0.0, %v500
  %v502 = vpop.f32.mrb[0].mxu0
  %v503 = vadd.f32 0.0, %v502
  %504 = vmatprep.mubr.bf16.mxu0 %v121
  %505 = vmatmul.mubr.bf16.gmra.mrb[0].mxu0 %v120
  %v506 = vpop.f32.mrb[0].mxu0
  %v507 = vadd.f32 0.0, %v506
  %v508 = vpop.f32.mrb[0].mxu0
  %v509 = vadd.f32 0.0, %v508
  %v510 = vpop.f32.mrb[0].mxu0
  %v511 = vadd.f32 0.0, %v510
  %v512 = vpop.f32.mrb[0].mxu0
  %v513 = vadd.f32 0.0, %v512
  %514 = vmatprep.mubr.bf16.mxu0 %v123
  %515 = vmatmul.mubr.bf16.gmra.mrb[0].mxu0 %v122
  %v516 = vpop.f32.mrb[0].mxu0
  %v517 = vadd.f32 0.0, %v516
  %v518 = vpop.f32.mrb[0].mxu0
  %v519 = vadd.f32 0.0, %v518
  %v520 = vpop.f32.mrb[0].mxu0
  %v521 = vadd.f32 0.0, %v520
  %v522 = vpop.f32.mrb[0].mxu0
  %v523 = vadd.f32 0.0, %v522
  %524 = vmatprep.mubr.bf16.mxu0 %v125
  %525 = vmatmul.mubr.bf16.gmra.mrb[0].mxu0 %v124
  %v526 = vpop.f32.mrb[0].mxu0
  %v527 = vadd.f32 0.0, %v526
  %v528 = vpop.f32.mrb[0].mxu0
  %v529 = vadd.f32 0.0, %v528
  %v530 = vpop.f32.mrb[0].mxu0
  %v531 = vadd.f32 0.0, %v530
  %v532 = vpop.f32.mrb[0].mxu0
  %v533 = vadd.f32 0.0, %v532
  %534 = vmatprep.mubr.bf16.mxu0 %v127
  %535 = vmatmul.mubr.bf16.gmra.mrb[0].mxu0 %v126
  %v536 = vpop.f32.mrb[0].mxu0
  %v537 = vadd.f32 0.0, %v536
  %v538 = vpop.f32.mrb[0].mxu0
  %v539 = vadd.f32 0.0, %v538
  %v540 = vpop.f32.mrb[0].mxu0
  %v541 = vadd.f32 0.0, %v540
  %v542 = vpop.f32.mrb[0].mxu0
  %v543 = vadd.f32 0.0, %v542
  %544 = vmatprep.mubr.bf16.mxu0 %v129
  %545 = vmatmul.mubr.bf16.gmra.mrb[0].mxu0 %v128
  %v546 = vpop.f32.mrb[0].mxu0
  %v547 = vadd.f32 0.0, %v546
  %v548 = vpop.f32.mrb[0].mxu0
  %v549 = vadd.f32 0.0, %v548
  %v550 = vpop.f32.mrb[0].mxu0
  %v551 = vadd.f32 0.0, %v550
  %v552 = vpop.f32.mrb[0].mxu0
  %v553 = vadd.f32 0.0, %v552
  %554 = vmatprep.mubr.bf16.mxu0 %v131
  %555 = vmatmul.mubr.bf16.gmra.mrb[0].mxu0 %v130
  %v556 = vpop.f32.mrb[0].mxu0
  %v557 = vadd.f32 0.0, %v556
  %v558 = vpop.f32.mrb[0].mxu0
  %v559 = vadd.f32 0.0, %v558
  %v560 = vpop.f32.mrb[0].mxu0
  %v561 = vadd.f32 0.0, %v560
  %v562 = vpop.f32.mrb[0].mxu0
  %v563 = vadd.f32 0.0, %v562
  %564 = vmatprep.mubr.bf16.mxu0 %v133
  %565 = vmatmul.mubr.bf16.gmra.mrb[0].mxu0 %v132
  %v566 = vpop.f32.mrb[0].mxu0
  %v567 = vadd.f32 0.0, %v566
  %v568 = vpop.f32.mrb[0].mxu0
  %v569 = vadd.f32 0.0, %v568
  %v570 = vpop.f32.mrb[0].mxu0
  %v571 = vadd.f32 0.0, %v570
  %v572 = vpop.f32.mrb[0].mxu0
  %v573 = vadd.f32 0.0, %v572
  %574 = vmatprep.mubr.bf16.mxu0 %v135
  %575 = vmatmul.mubr.bf16.gmra.mrb[0].mxu0 %v134
  %v576 = vpop.f32.mrb[0].mxu0
  %v577 = vadd.f32 0.0, %v576
  %v578 = vpop.f32.mrb[0].mxu0
  %v579 = vadd.f32 0.0, %v578
  %v580 = vpop.f32.mrb[0].mxu0
  %v581 = vadd.f32 0.0, %v580
  %v582 = vpop.f32.mrb[0].mxu0
  %v583 = vadd.f32 0.0, %v582
  %584 = vdwg.mxu0
  %v585 = vadd.f32 %v136, %v427
  %v586 = vadd.f32 %v137, %v429
  %v587 = vadd.f32 %v138, %v431
  %v588 = vadd.f32 %v139, %v433
  %v589 = vadd.f32 %v140, %v437
  %v590 = vadd.f32 %v141, %v439
  %v591 = vadd.f32 %v142, %v441
  %v592 = vadd.f32 %v143, %v443
  %v593 = vadd.f32 %v144, %v447
  %v594 = vadd.f32 %v145, %v449
  %v595 = vadd.f32 %v146, %v451
  %v596 = vadd.f32 %v147, %v453
  %v597 = vadd.f32 %v148, %v457
  %v598 = vadd.f32 %v149, %v459
  %v599 = vadd.f32 %v150, %v461
  %v600 = vadd.f32 %v151, %v463
  %v601 = vadd.f32 %v152, %v467
  %v602 = vadd.f32 %v153, %v469
  %v603 = vadd.f32 %v154, %v471
  %v604 = vadd.f32 %v155, %v473
  %v605 = vadd.f32 %v156, %v477
  %v606 = vadd.f32 %v157, %v479
  %v607 = vadd.f32 %v158, %v481
  %v608 = vadd.f32 %v159, %v483
  %v609 = vadd.f32 %v160, %v487
  %v610 = vadd.f32 %v161, %v489
  %v611 = vadd.f32 %v162, %v491
  %v612 = vadd.f32 %v163, %v493
  %v613 = vadd.f32 %v164, %v497
  %v614 = vadd.f32 %v165, %v499
  %v615 = vadd.f32 %v166, %v501
  %v616 = vadd.f32 %v167, %v503
  %v617 = vadd.f32 %v168, %v507
  %v618 = vadd.f32 %v169, %v509
  %v619 = vadd.f32 %v170, %v511
  %v620 = vadd.f32 %v171, %v513
  %v621 = vadd.f32 %v172, %v517
  %v622 = vadd.f32 %v173, %v519
  %v623 = vadd.f32 %v174, %v521
  %v624 = vadd.f32 %v175, %v523
  %v625 = vadd.f32 %v176, %v527
  %v626 = vadd.f32 %v177, %v529
  %v627 = vadd.f32 %v178, %v531
  %v628 = vadd.f32 %v179, %v533
  %v629 = vadd.f32 %v180, %v537
  %v630 = vadd.f32 %v181, %v539
  %v631 = vadd.f32 %v182, %v541
  %v632 = vadd.f32 %v183, %v543
  %v633 = vadd.f32 %v184, %v547
  %v634 = vadd.f32 %v185, %v549
  %v635 = vadd.f32 %v186, %v551
  %v636 = vadd.f32 %v187, %v553
  %v637 = vadd.f32 %v188, %v557
  %v638 = vadd.f32 %v189, %v559
  %v639 = vadd.f32 %v190, %v561
  %v640 = vadd.f32 %v191, %v563
  %v641 = vadd.f32 %v192, %v567
  %v642 = vadd.f32 %v193, %v569
  %v643 = vadd.f32 %v194, %v571
  %v644 = vadd.f32 %v195, %v573
  %v645 = vadd.f32 %v196, %v577
  %v646 = vadd.f32 %v197, %v579
  %v647 = vadd.f32 %v198, %v581
  %v648 = vadd.f32 %v199, %v583
  %649 = vst [vmem:[#allocation2] sm:$0xff] %v585
  %650 = vst [vmem:[#allocation2 + $0x8] sm:$0xff] %v586
  %651 = vst [vmem:[#allocation2 + $0x10] sm:$0xff] %v587
  %652 = vst [vmem:[#allocation2 + $0x18] sm:$0xff] %v588
  %653 = vst [vmem:[#allocation2 + $0x20] sm:$0xff] %v589
  %654 = vst [vmem:[#allocation2 + $0x28] sm:$0xff] %v590
  %655 = vst [vmem:[#allocation2 + $0x30] sm:$0xff] %v591
  %656 = vst [vmem:[#allocation2 + $0x38] sm:$0xff] %v592
  %657 = vst [vmem:[#allocation2 + $0x40] sm:$0xff] %v593
  %658 = vst [vmem:[#allocation2 + $0x48] sm:$0xff] %v594
  %659 = vst [vmem:[#allocation2 + $0x50] sm:$0xff] %v595
  %660 = vst [vmem:[#allocation2 + $0x58] sm:$0xff] %v596
  %661 = vst [vmem:[#allocation2 + $0x60] sm:$0xff] %v597
  %662 = vst [vmem:[#allocation2 + $0x68] sm:$0xff] %v598
  %663 = vst [vmem:[#allocation2 + $0x70] sm:$0xff] %v599
  %664 = vst [vmem:[#allocation2 + $0x78] sm:$0xff] %v600
  %665 = vst [vmem:[#allocation2 + $0x80] sm:$0xff] %v601
  %666 = vst [vmem:[#allocation2 + $0x88] sm:$0xff] %v602
  %667 = vst [vmem:[#allocation2 + $0x90] sm:$0xff] %v603
  %668 = vst [vmem:[#allocation2 + $0x98] sm:$0xff] %v604
  %669 = vst [vmem:[#allocation2 + $0xa0] sm:$0xff] %v605
  %670 = vst [vmem:[#allocation2 + $0xa8] sm:$0xff] %v606
  %671 = vst [vmem:[#allocation2 + $0xb0] sm:$0xff] %v607
  %672 = vst [vmem:[#allocation2 + $0xb8] sm:$0xff] %v608
  %673 = vst [vmem:[#allocation2 + $0xc0] sm:$0xff] %v609
  %674 = vst [vmem:[#allocation2 + $0xc8] sm:$0xff] %v610
  %675 = vst [vmem:[#allocation2 + $0xd0] sm:$0xff] %v611
  %676 = vst [vmem:[#allocation2 + $0xd8] sm:$0xff] %v612
  %677 = vst [vmem:[#allocation2 + $0xe0] sm:$0xff] %v613
  %678 = vst [vmem:[#allocation2 + $0xe8] sm:$0xff] %v614
  %679 = vst [vmem:[#allocation2 + $0xf0] sm:$0xff] %v615
  %680 = vst [vmem:[#allocation2 + $0xf8] sm:$0xff] %v616
  %681 = vst [vmem:[#allocation2 + $0x100] sm:$0xff] %v617
  %682 = vst [vmem:[#allocation2 + $0x108] sm:$0xff] %v618
  %683 = vst [vmem:[#allocation2 + $0x110] sm:$0xff] %v619
  %684 = vst [vmem:[#allocation2 + $0x118] sm:$0xff] %v620
  %685 = vst [vmem:[#allocation2 + $0x120] sm:$0xff] %v621
  %686 = vst [vmem:[#allocation2 + $0x128] sm:$0xff] %v622
  %687 = vst [vmem:[#allocation2 + $0x130] sm:$0xff] %v623
  %688 = vst [vmem:[#allocation2 + $0x138] sm:$0xff] %v624
  %689 = vst [vmem:[#allocation2 + $0x140] sm:$0xff] %v625
  %690 = vst [vmem:[#allocation2 + $0x148] sm:$0xff] %v626
  %691 = vst [vmem:[#allocation2 + $0x150] sm:$0xff] %v627
  %692 = vst [vmem:[#allocation2 + $0x158] sm:$0xff] %v628
  %693 = vst [vmem:[#allocation2 + $0x160] sm:$0xff] %v629
  %694 = vst [vmem:[#allocation2 + $0x168] sm:$0xff] %v630
  %695 = vst [vmem:[#allocation2 + $0x170] sm:$0xff] %v631
  %696 = vst [vmem:[#allocation2 + $0x178] sm:$0xff] %v632
  %697 = vst [vmem:[#allocation2 + $0x180] sm:$0xff] %v633
  %698 = vst [vmem:[#allocation2 + $0x188] sm:$0xff] %v634
  %699 = vst [vmem:[#allocation2 + $0x190] sm:$0xff] %v635
  %700 = vst [vmem:[#allocation2 + $0x198] sm:$0xff] %v636
  %701 = vst [vmem:[#allocation2 + $0x1a0] sm:$0xff] %v637
  %702 = vst [vmem:[#allocation2 + $0x1a8] sm:$0xff] %v638
  %703 = vst [vmem:[#allocation2 + $0x1b0] sm:$0xff] %v639
  %704 = vst [vmem:[#allocation2 + $0x1b8] sm:$0xff] %v640
  %705 = vst [vmem:[#allocation2 + $0x1c0] sm:$0xff] %v641
  %706 = vst [vmem:[#allocation2 + $0x1c8] sm:$0xff] %v642
  %707 = vst [vmem:[#allocation2 + $0x1d0] sm:$0xff] %v643
  %708 = vst [vmem:[#allocation2 + $0x1d8] sm:$0xff] %v644
  %709 = vst [vmem:[#allocation2 + $0x1e0] sm:$0xff] %v645
  %710 = vst [vmem:[#allocation2 + $0x1e8] sm:$0xff] %v646
  %711 = vst [vmem:[#allocation2 + $0x1f0] sm:$0xff] %v647
  %712 = vst [vmem:[#allocation2 + $0x1f8] sm:$0xff] %v648
  // Predicated region
  $region26: #{g2_gnn_forward.8} parent=0 // pred_check
    %p713 = pneg %p20
  $region27: #{g2_gnn_forward.8} parent=0 // pred_check_branch
    %715 = sbr.rel (%p713) target = $region29
  $region28: #{g2_gnn_forward.8} parent=0 // pred_region
    %v716 = vld [vmem:[#allocation2] sm:$0xff]
    %v717 = vld [vmem:[#allocation2 + $0x8] sm:$0xff]
    %v718 = vld [vmem:[#allocation2 + $0x10] sm:$0xff]
    %v719 = vld [vmem:[#allocation2 + $0x18] sm:$0xff]
    %v720 = vld [vmem:[#allocation2 + $0x20] sm:$0xff]
    %v721 = vld [vmem:[#allocation2 + $0x28] sm:$0xff]
    %v722 = vld [vmem:[#allocation2 + $0x30] sm:$0xff]
    %v723 = vld [vmem:[#allocation2 + $0x38] sm:$0xff]
    %v724 = vld [vmem:[#allocation2 + $0x40] sm:$0xff]
    %v725 = vld [vmem:[#allocation2 + $0x48] sm:$0xff]
    %v726 = vld [vmem:[#allocation2 + $0x50] sm:$0xff]
    %v727 = vld [vmem:[#allocation2 + $0x58] sm:$0xff]
    %v728 = vld [vmem:[#allocation2 + $0x60] sm:$0xff]
    %v729 = vld [vmem:[#allocation2 + $0x68] sm:$0xff]
    %v730 = vld [vmem:[#allocation2 + $0x70] sm:$0xff]
    %v731 = vld [vmem:[#allocation2 + $0x78] sm:$0xff]
    %v732 = vld [vmem:[#allocation2 + $0x80] sm:$0xff]
    %v733 = vld [vmem:[#allocation2 + $0x88] sm:$0xff]
    %v734 = vld [vmem:[#allocation2 + $0x90] sm:$0xff]
    %v735 = vld [vmem:[#allocation2 + $0x98] sm:$0xff]
    %v736 = vld [vmem:[#allocation2 + $0xa0] sm:$0xff]
    %v737 = vld [vmem:[#allocation2 + $0xa8] sm:$0xff]
    %v738 = vld [vmem:[#allocation2 + $0xb0] sm:$0xff]
    %v739 = vld [vmem:[#allocation2 + $0xb8] sm:$0xff]
    %v740 = vld [vmem:[#allocation2 + $0xc0] sm:$0xff]
    %v741 = vld [vmem:[#allocation2 + $0xc8] sm:$0xff]
    %v742 = vld [vmem:[#allocation2 + $0xd0] sm:$0xff]
    %v743 = vld [vmem:[#allocation2 + $0xd8] sm:$0xff]
    %v744 = vld [vmem:[#allocation2 + $0xe0] sm:$0xff]
    %v745 = vld [vmem:[#allocation2 + $0xe8] sm:$0xff]
    %v746 = vld [vmem:[#allocation2 + $0xf0] sm:$0xff]
    %v747 = vld [vmem:[#allocation2 + $0xf8] sm:$0xff]
    %v748 = vld [vmem:[#allocation2 + $0x100] sm:$0xff]
    %v749 = vld [vmem:[#allocation2 + $0x108] sm:$0xff]
    %v750 = vld [vmem:[#allocation2 + $0x110] sm:$0xff]
    %v751 = vld [vmem:[#allocation2 + $0x118] sm:$0xff]
    %v752 = vld [vmem:[#allocation2 + $0x120] sm:$0xff]
    %v753 = vld [vmem:[#allocation2 + $0x128] sm:$0xff]
    %v754 = vld [vmem:[#allocation2 + $0x130] sm:$0xff]
    %v755 = vld [vmem:[#allocation2 + $0x138] sm:$0xff]
    %v756 = vld [vmem:[#allocation2 + $0x140] sm:$0xff]
    %v757 = vld [vmem:[#allocation2 + $0x148] sm:$0xff]
    %v758 = vld [vmem:[#allocation2 + $0x150] sm:$0xff]
    %v759 = vld [vmem:[#allocation2 + $0x158] sm:$0xff]
    %v760 = vld [vmem:[#allocation2 + $0x160] sm:$0xff]
    %v761 = vld [vmem:[#allocation2 + $0x168] sm:$0xff]
    %v762 = vld [vmem:[#allocation2 + $0x170] sm:$0xff]
    %v763 = vld [vmem:[#allocation2 + $0x178] sm:$0xff]
    %v764 = vld [vmem:[#allocation2 + $0x180] sm:$0xff]
    %v765 = vld [vmem:[#allocation2 + $0x188] sm:$0xff]
    %v766 = vld [vmem:[#allocation2 + $0x190] sm:$0xff]
    %v767 = vld [vmem:[#allocation2 + $0x198] sm:$0xff]
    %v768 = vld [vmem:[#allocation2 + $0x1a0] sm:$0xff]
    %v769 = vld [vmem:[#allocation2 + $0x1a8] sm:$0xff]
    %v770 = vld [vmem:[#allocation2 + $0x1b0] sm:$0xff]
    %v771 = vld [vmem:[#allocation2 + $0x1b8] sm:$0xff]
    %v772 = vld [vmem:[#allocation2 + $0x1c0] sm:$0xff]
    %v773 = vld [vmem:[#allocation2 + $0x1c8] sm:$0xff]
    %v774 = vld [vmem:[#allocation2 + $0x1d0] sm:$0xff]
    %v775 = vld [vmem:[#allocation2 + $0x1d8] sm:$0xff]
    %v776 = vld [vmem:[#allocation2 + $0x1e0] sm:$0xff]
    %v777 = vld [vmem:[#allocation2 + $0x1e8] sm:$0xff]
    %v778 = vld [vmem:[#allocation2 + $0x1f0] sm:$0xff]
    %v779 = vld [vmem:[#allocation2 + $0x1f8] sm:$0xff]
    %v780 = vld [vmem:[%s2] sm:$0xff]
    %v781 = vld [vmem:[%s2 + $0x8] sm:$0xff]
    %v782 = vld [vmem:[%s2 + $0x10] sm:$0xff]
    %v783 = vld [vmem:[%s2 + $0x18] sm:$0xff]
    %v784 = vld [vmem:[%s2 + $0x20] sm:$0xff]
    %v785 = vld [vmem:[%s2 + $0x28] sm:$0xff]
    %v786 = vld [vmem:[%s2 + $0x30] sm:$0xff]
    %v787 = vld [vmem:[%s2 + $0x38] sm:$0xff]
    %v788 = vld [vmem:[%s2 + $0x40] sm:$0xff]
    %v789 = vld [vmem:[%s2 + $0x48] sm:$0xff]
    %v790 = vld [vmem:[%s2 + $0x50] sm:$0xff]
    %v791 = vld [vmem:[%s2 + $0x58] sm:$0xff]
    %v792 = vld [vmem:[%s2 + $0x60] sm:$0xff]
    %v793 = vld [vmem:[%s2 + $0x68] sm:$0xff]
    %v794 = vld [vmem:[%s2 + $0x70] sm:$0xff]
    %v795 = vld [vmem:[%s2 + $0x78] sm:$0xff]
    %v796 = vld [vmem:[%s2 + $0x80] sm:$0xff]
    %v797 = vld [vmem:[%s2 + $0x88] sm:$0xff]
    %v798 = vld [vmem:[%s2 + $0x90] sm:$0xff]
    %v799 = vld [vmem:[%s2 + $0x98] sm:$0xff]
    %v800 = vld [vmem:[%s2 + $0xa0] sm:$0xff]
    %v801 = vld [vmem:[%s2 + $0xa8] sm:$0xff]
    %v802 = vld [vmem:[%s2 + $0xb0] sm:$0xff]
    %v803 = vld [vmem:[%s2 + $0xb8] sm:$0xff]
    %v804 = vld [vmem:[%s2 + $0xc0] sm:$0xff]
    %v805 = vld [vmem:[%s2 + $0xc8] sm:$0xff]
    %v806 = vld [vmem:[%s2 + $0xd0] sm:$0xff]
    %v807 = vld [vmem:[%s2 + $0xd8] sm:$0xff]
    %v808 = vld [vmem:[%s2 + $0xe0] sm:$0xff]
    %v809 = vld [vmem:[%s2 + $0xe8] sm:$0xff]
    %v810 = vld [vmem:[%s2 + $0xf0] sm:$0xff]
    %v811 = vld [vmem:[%s2 + $0xf8] sm:$0xff]
    %v812 = vld [vmem:[%s3] sm:$0xff]
    %v813 = vld [vmem:[%s3 + $0x8] sm:$0xff]
    %v814 = vld [vmem:[%s3 + $0x10] sm:$0xff]
    %v815 = vld [vmem:[%s3 + $0x18] sm:$0xff]
    %v816 = vld [vmem:[%s3 + $0x20] sm:$0xff]
    %v817 = vld [vmem:[%s3 + $0x28] sm:$0xff]
    %v818 = vld [vmem:[%s3 + $0x30] sm:$0xff]
    %v819 = vld [vmem:[%s3 + $0x38] sm:$0xff]
    %v820 = vld [vmem:[%s3 + $0x40] sm:$0xff]
    %v821 = vld [vmem:[%s3 + $0x48] sm:$0xff]
    %v822 = vld [vmem:[%s3 + $0x50] sm:$0xff]
    %v823 = vld [vmem:[%s3 + $0x58] sm:$0xff]
    %v824 = vld [vmem:[%s3 + $0x60] sm:$0xff]
    %v825 = vld [vmem:[%s3 + $0x68] sm:$0xff]
    %v826 = vld [vmem:[%s3 + $0x70] sm:$0xff]
    %v827 = vld [vmem:[%s3 + $0x78] sm:$0xff]
    %v828 = vld [vmem:[%s3 + $0x80] sm:$0xff]
    %v829 = vld [vmem:[%s3 + $0x88] sm:$0xff]
    %v830 = vld [vmem:[%s3 + $0x90] sm:$0xff]
    %v831 = vld [vmem:[%s3 + $0x98] sm:$0xff]
    %v832 = vld [vmem:[%s3 + $0xa0] sm:$0xff]
    %v833 = vld [vmem:[%s3 + $0xa8] sm:$0xff]
    %v834 = vld [vmem:[%s3 + $0xb0] sm:$0xff]
    %v835 = vld [vmem:[%s3 + $0xb8] sm:$0xff]
    %v836 = vld [vmem:[%s3 + $0xc0] sm:$0xff]
    %v837 = vld [vmem:[%s3 + $0xc8] sm:$0xff]
    %v838 = vld [vmem:[%s3 + $0xd0] sm:$0xff]
    %v839 = vld [vmem:[%s3 + $0xd8] sm:$0xff]
    %v840 = vld [vmem:[%s3 + $0xe0] sm:$0xff]
    %v841 = vld [vmem:[%s3 + $0xe8] sm:$0xff]
    %v842 = vld [vmem:[%s3 + $0xf0] sm:$0xff]
    %v843 = vld [vmem:[%s3 + $0xf8] sm:$0xff]
    %845 = vset.pattern.permute.xlu0 0
    %846 = vperm.xlu0 %845, %v812
    %v847 = vpop.permute.xlu0 %846
    %850 = vset.pattern.permute.xlu0 0
    %851 = vperm.xlu0 %850, %v813
    %v852 = vpop.permute.xlu0 %851
    %855 = vset.pattern.permute.xlu0 0
    %856 = vperm.xlu0 %855, %v814
    %v857 = vpop.permute.xlu0 %856
    %860 = vset.pattern.permute.xlu0 0
    %861 = vperm.xlu0 %860, %v815
    %v862 = vpop.permute.xlu0 %861
    %865 = vset.pattern.permute.xlu0 0
    %866 = vperm.xlu0 %865, %v816
    %v867 = vpop.permute.xlu0 %866
    %870 = vset.pattern.permute.xlu0 0
    %871 = vperm.xlu0 %870, %v817
    %v872 = vpop.permute.xlu0 %871
    %875 = vset.pattern.permute.xlu0 0
    %876 = vperm.xlu0 %875, %v818
    %v877 = vpop.permute.xlu0 %876
    %880 = vset.pattern.permute.xlu0 0
    %881 = vperm.xlu0 %880, %v819
    %v882 = vpop.permute.xlu0 %881
    %885 = vset.pattern.permute.xlu0 0
    %886 = vperm.xlu0 %885, %v820
    %v887 = vpop.permute.xlu0 %886
    %890 = vset.pattern.permute.xlu0 0
    %891 = vperm.xlu0 %890, %v821
    %v892 = vpop.permute.xlu0 %891
    %895 = vset.pattern.permute.xlu0 0
    %896 = vperm.xlu0 %895, %v822
    %v897 = vpop.permute.xlu0 %896
    %900 = vset.pattern.permute.xlu0 0
    %901 = vperm.xlu0 %900, %v823
    %v902 = vpop.permute.xlu0 %901
    %905 = vset.pattern.permute.xlu0 0
    %906 = vperm.xlu0 %905, %v824
    %v907 = vpop.permute.xlu0 %906
    %910 = vset.pattern.permute.xlu0 0
    %911 = vperm.xlu0 %910, %v825
    %v912 = vpop.permute.xlu0 %911
    %915 = vset.pattern.permute.xlu0 0
    %916 = vperm.xlu0 %915, %v826
    %v917 = vpop.permute.xlu0 %916
    %920 = vset.pattern.permute.xlu0 0
    %921 = vperm.xlu0 %920, %v827
    %v922 = vpop.permute.xlu0 %921
    %925 = vset.pattern.permute.xlu0 0
    %926 = vperm.xlu0 %925, %v828
    %v927 = vpop.permute.xlu0 %926
    %930 = vset.pattern.permute.xlu0 0
    %931 = vperm.xlu0 %930, %v829
    %v932 = vpop.permute.xlu0 %931
    %935 = vset.pattern.permute.xlu0 0
    %936 = vperm.xlu0 %935, %v830
    %v937 = vpop.permute.xlu0 %936
    %940 = vset.pattern.permute.xlu0 0
    %941 = vperm.xlu0 %940, %v831
    %v942 = vpop.permute.xlu0 %941
    %945 = vset.pattern.permute.xlu0 0
    %946 = vperm.xlu0 %945, %v832
    %v947 = vpop.permute.xlu0 %946
    %950 = vset.pattern.permute.xlu0 0
    %951 = vperm.xlu0 %950, %v833
    %v952 = vpop.permute.xlu0 %951
    %955 = vset.pattern.permute.xlu0 0
    %956 = vperm.xlu0 %955, %v834
    %v957 = vpop.permute.xlu0 %956
    %960 = vset.pattern.permute.xlu0 0
    %961 = vperm.xlu0 %960, %v835
    %v962 = vpop.permute.xlu0 %961
    %965 = vset.pattern.permute.xlu0 0
    %966 = vperm.xlu0 %965, %v836
    %v967 = vpop.permute.xlu0 %966
    %970 = vset.pattern.permute.xlu0 0
    %971 = vperm.xlu0 %970, %v837
    %v972 = vpop.permute.xlu0 %971
    %975 = vset.pattern.permute.xlu0 0
    %976 = vperm.xlu0 %975, %v838
    %v977 = vpop.permute.xlu0 %976
    %980 = vset.pattern.permute.xlu0 0
    %981 = vperm.xlu0 %980, %v839
    %v982 = vpop.permute.xlu0 %981
    %985 = vset.pattern.permute.xlu0 0
    %986 = vperm.xlu0 %985, %v840
    %v987 = vpop.permute.xlu0 %986
    %990 = vset.pattern.permute.xlu0 0
    %991 = vperm.xlu0 %990, %v841
    %v992 = vpop.permute.xlu0 %991
    %995 = vset.pattern.permute.xlu0 0
    %996 = vperm.xlu0 %995, %v842
    %v997 = vpop.permute.xlu0 %996
    %1000 = vset.pattern.permute.xlu0 0
    %1001 = vperm.xlu0 %1000, %v843
    %v1002 = vpop.permute.xlu0 %1001
    %v1004 = vmul.f32 %v847, %v716
    %v1005 = vmul.f32 %v852, %v718
    %v1006 = vmul.f32 %v857, %v720
    %v1007 = vmul.f32 %v862, %v722
    %v1008 = vmul.f32 %v867, %v724
    %v1009 = vmul.f32 %v872, %v726
    %v1010 = vmul.f32 %v877, %v728
    %v1011 = vmul.f32 %v882, %v730
    %v1012 = vmul.f32 %v887, %v732
    %v1013 = vmul.f32 %v892, %v734
    %v1014 = vmul.f32 %v897, %v736
    %v1015 = vmul.f32 %v902, %v738
    %v1016 = vmul.f32 %v907, %v740
    %v1017 = vmul.f32 %v912, %v742
    %v1018 = vmul.f32 %v917, %v744
    %v1019 = vmul.f32 %v922, %v746
    %v1020 = vmul.f32 %v927, %v748
    %v1021 = vmul.f32 %v932, %v750
    %v1022 = vmul.f32 %v937, %v752
    %v1023 = vmul.f32 %v942, %v754
    %v1024 = vmul.f32 %v947, %v756
    %v1025 = vmul.f32 %v952, %v758
    %v1026 = vmul.f32 %v957, %v760
    %v1027 = vmul.f32 %v962, %v762
    %v1028 = vmul.f32 %v967, %v764
    %v1029 = vmul.f32 %v972, %v766
    %v1030 = vmul.f32 %v977, %v768
    %v1031 = vmul.f32 %v982, %v770
    %v1032 = vmul.f32 %v987, %v772
    %v1033 = vmul.f32 %v992, %v774
    %v1034 = vmul.f32 %v997, %v776
    %v1035 = vmul.f32 %v1002, %v778
    %v1036 = vld [vmem:[%s4] sm:$0x1]
    %v1038 = vlaneseq
    %v1039 = vshrl.u32 %v1038, 7
    %v1040 = vsub.s32 0, %v1039
    %v1041 = vrot.slane %v1036, %v1040
    %v1043 = vadd.f32 %v1004, %v1041
    %v1044 = vadd.f32 %v1005, %v1041
    %v1045 = vadd.f32 %v1006, %v1041
    %v1046 = vadd.f32 %v1007, %v1041
    %v1047 = vadd.f32 %v1008, %v1041
    %v1048 = vadd.f32 %v1009, %v1041
    %v1049 = vadd.f32 %v1010, %v1041
    %v1050 = vadd.f32 %v1011, %v1041
    %v1051 = vadd.f32 %v1012, %v1041
    %v1052 = vadd.f32 %v1013, %v1041
    %v1053 = vadd.f32 %v1014, %v1041
    %v1054 = vadd.f32 %v1015, %v1041
    %v1055 = vadd.f32 %v1016, %v1041
    %v1056 = vadd.f32 %v1017, %v1041
    %v1057 = vadd.f32 %v1018, %v1041
    %v1058 = vadd.f32 %v1019, %v1041
    %v1059 = vadd.f32 %v1020, %v1041
    %v1060 = vadd.f32 %v1021, %v1041
    %v1061 = vadd.f32 %v1022, %v1041
    %v1062 = vadd.f32 %v1023, %v1041
    %v1063 = vadd.f32 %v1024, %v1041
    %v1064 = vadd.f32 %v1025, %v1041
    %v1065 = vadd.f32 %v1026, %v1041
    %v1066 = vadd.f32 %v1027, %v1041
    %v1067 = vadd.f32 %v1028, %v1041
    %v1068 = vadd.f32 %v1029, %v1041
    %v1069 = vadd.f32 %v1030, %v1041
    %v1070 = vadd.f32 %v1031, %v1041
    %v1071 = vadd.f32 %v1032, %v1041
    %v1072 = vadd.f32 %v1033, %v1041
    %v1073 = vadd.f32 %v1034, %v1041
    %v1074 = vadd.f32 %v1035, %v1041
    %v1075 = vmax.f32 %v1043, 0.0
    %v1076 = vmax.f32 %v1044, 0.0
    %v1077 = vmax.f32 %v1045, 0.0
    %v1078 = vmax.f32 %v1046, 0.0
    %v1079 = vmax.f32 %v1047, 0.0
    %v1080 = vmax.f32 %v1048, 0.0
    %v1081 = vmax.f32 %v1049, 0.0
    %v1082 = vmax.f32 %v1050, 0.0
    %v1083 = vmax.f32 %v1051, 0.0
    %v1084 = vmax.f32 %v1052, 0.0
    %v1085 = vmax.f32 %v1053, 0.0
    %v1086 = vmax.f32 %v1054, 0.0
    %v1087 = vmax.f32 %v1055, 0.0
    %v1088 = vmax.f32 %v1056, 0.0
    %v1089 = vmax.f32 %v1057, 0.0
    %v1090 = vmax.f32 %v1058, 0.0
    %v1091 = vmax.f32 %v1059, 0.0
    %v1092 = vmax.f32 %v1060, 0.0
    %v1093 = vmax.f32 %v1061, 0.0
    %v1094 = vmax.f32 %v1062, 0.0
    %v1095 = vmax.f32 %v1063, 0.0
    %v1096 = vmax.f32 %v1064, 0.0
    %v1097 = vmax.f32 %v1065, 0.0
    %v1098 = vmax.f32 %v1066, 0.0
    %v1099 = vmax.f32 %v1067, 0.0
    %v1100 = vmax.f32 %v1068, 0.0
    %v1101 = vmax.f32 %v1069, 0.0
    %v1102 = vmax.f32 %v1070, 0.0
    %v1103 = vmax.f32 %v1071, 0.0
    %v1104 = vmax.f32 %v1072, 0.0
    %v1105 = vmax.f32 %v1073, 0.0
    %v1106 = vmax.f32 %v1074, 0.0
    %v1107 = vmul.f32 %v780, %v780
    %v1108 = vmul.f32 %v781, %v781
    %v1109 = vmul.f32 %v782, %v782
    %v1110 = vmul.f32 %v783, %v783
    %v1111 = vmul.f32 %v784, %v784
    %v1112 = vmul.f32 %v785, %v785
    %v1113 = vmul.f32 %v786, %v786
    %v1114 = vmul.f32 %v787, %v787
    %v1115 = vmul.f32 %v788, %v788
    %v1116 = vmul.f32 %v789, %v789
    %v1117 = vmul.f32 %v790, %v790
    %v1118 = vmul.f32 %v791, %v791
    %v1119 = vmul.f32 %v792, %v792
    %v1120 = vmul.f32 %v793, %v793
    %v1121 = vmul.f32 %v794, %v794
    %v1122 = vmul.f32 %v795, %v795
    %v1123 = vmul.f32 %v796, %v796
    %v1124 = vmul.f32 %v797, %v797
    %v1125 = vmul.f32 %v798, %v798
    %v1126 = vmul.f32 %v799, %v799
    %v1127 = vmul.f32 %v800, %v800
    %v1128 = vmul.f32 %v801, %v801
    %v1129 = vmul.f32 %v802, %v802
    %v1130 = vmul.f32 %v803, %v803
    %v1131 = vmul.f32 %v804, %v804
    %v1132 = vmul.f32 %v805, %v805
    %v1133 = vmul.f32 %v806, %v806
    %v1134 = vmul.f32 %v807, %v807
    %v1135 = vmul.f32 %v808, %v808
    %v1136 = vmul.f32 %v809, %v809
    %v1137 = vmul.f32 %v810, %v810
    %v1138 = vmul.f32 %v811, %v811
    %1139 = vadd.xlane.f32.xlu0 %v1107
    %v1140 = vpop.xlane.xlu0 %1139
    %1141 = vadd.xlane.f32.xlu0 %v1108
    %v1142 = vpop.xlane.xlu0 %1141
    %1143 = vadd.xlane.f32.xlu0 %v1109
    %v1144 = vpop.xlane.xlu0 %1143
    %1145 = vadd.xlane.f32.xlu0 %v1110
    %v1146 = vpop.xlane.xlu0 %1145
    %1147 = vadd.xlane.f32.xlu0 %v1111
    %v1148 = vpop.xlane.xlu0 %1147
    %1149 = vadd.xlane.f32.xlu0 %v1112
    %v1150 = vpop.xlane.xlu0 %1149
    %1151 = vadd.xlane.f32.xlu0 %v1113
    %v1152 = vpop.xlane.xlu0 %1151
    %1153 = vadd.xlane.f32.xlu0 %v1114
    %v1154 = vpop.xlane.xlu0 %1153
    %1155 = vadd.xlane.f32.xlu0 %v1115
    %v1156 = vpop.xlane.xlu0 %1155
    %1157 = vadd.xlane.f32.xlu0 %v1116
    %v1158 = vpop.xlane.xlu0 %1157
    %1159 = vadd.xlane.f32.xlu0 %v1117
    %v1160 = vpop.xlane.xlu0 %1159
    %1161 = vadd.xlane.f32.xlu0 %v1118
    %v1162 = vpop.xlane.xlu0 %1161
    %1163 = vadd.xlane.f32.xlu0 %v1119
    %v1164 = vpop.xlane.xlu0 %1163
    %1165 = vadd.xlane.f32.xlu0 %v1120
    %v1166 = vpop.xlane.xlu0 %1165
    %1167 = vadd.xlane.f32.xlu0 %v1121
    %v1168 = vpop.xlane.xlu0 %1167
    %1169 = vadd.xlane.f32.xlu0 %v1122
    %v1170 = vpop.xlane.xlu0 %1169
    %1171 = vadd.xlane.f32.xlu0 %v1123
    %v1172 = vpop.xlane.xlu0 %1171
    %1173 = vadd.xlane.f32.xlu0 %v1124
    %v1174 = vpop.xlane.xlu0 %1173
    %1175 = vadd.xlane.f32.xlu0 %v1125
    %v1176 = vpop.xlane.xlu0 %1175
    %1177 = vadd.xlane.f32.xlu0 %v1126
    %v1178 = vpop.xlane.xlu0 %1177
    %1179 = vadd.xlane.f32.xlu0 %v1127
    %v1180 = vpop.xlane.xlu0 %1179
    %1181 = vadd.xlane.f32.xlu0 %v1128
    %v1182 = vpop.xlane.xlu0 %1181
    %1183 = vadd.xlane.f32.xlu0 %v1129
    %v1184 = vpop.xlane.xlu0 %1183
    %1185 = vadd.xlane.f32.xlu0 %v1130
    %v1186 = vpop.xlane.xlu0 %1185
    %1187 = vadd.xlane.f32.xlu0 %v1131
    %v1188 = vpop.xlane.xlu0 %1187
    %1189 = vadd.xlane.f32.xlu0 %v1132
    %v1190 = vpop.xlane.xlu0 %1189
    %1191 = vadd.xlane.f32.xlu0 %v1133
    %v1192 = vpop.xlane.xlu0 %1191
    %1193 = vadd.xlane.f32.xlu0 %v1134
    %v1194 = vpop.xlane.xlu0 %1193
    %1195 = vadd.xlane.f32.xlu0 %v1135
    %v1196 = vpop.xlane.xlu0 %1195
    %1197 = vadd.xlane.f32.xlu0 %v1136
    %v1198 = vpop.xlane.xlu0 %1197
    %1199 = vadd.xlane.f32.xlu0 %v1137
    %v1200 = vpop.xlane.xlu0 %1199
    %1201 = vadd.xlane.f32.xlu0 %v1138
    %v1202 = vpop.xlane.xlu0 %1201
    %v1203 = vmul.f32 %v780, %v717
    %v1204 = vmul.f32 %v781, %v719
    %v1205 = vmul.f32 %v782, %v721
    %v1206 = vmul.f32 %v783, %v723
    %v1207 = vmul.f32 %v784, %v725
    %v1208 = vmul.f32 %v785, %v727
    %v1209 = vmul.f32 %v786, %v729
    %v1210 = vmul.f32 %v787, %v731
    %v1211 = vmul.f32 %v788, %v733
    %v1212 = vmul.f32 %v789, %v735
    %v1213 = vmul.f32 %v790, %v737
    %v1214 = vmul.f32 %v791, %v739
    %v1215 = vmul.f32 %v792, %v741
    %v1216 = vmul.f32 %v793, %v743
    %v1217 = vmul.f32 %v794, %v745
    %v1218 = vmul.f32 %v795, %v747
    %v1219 = vmul.f32 %v796, %v749
    %v1220 = vmul.f32 %v797, %v751
    %v1221 = vmul.f32 %v798, %v753
    %v1222 = vmul.f32 %v799, %v755
    %v1223 = vmul.f32 %v800, %v757
    %v1224 = vmul.f32 %v801, %v759
    %v1225 = vmul.f32 %v802, %v761
    %v1226 = vmul.f32 %v803, %v763
    %v1227 = vmul.f32 %v804, %v765
    %v1228 = vmul.f32 %v805, %v767
    %v1229 = vmul.f32 %v806, %v769
    %v1230 = vmul.f32 %v807, %v771
    %v1231 = vmul.f32 %v808, %v773
    %v1232 = vmul.f32 %v809, %v775
    %v1233 = vmul.f32 %v810, %v777
    %v1234 = vmul.f32 %v811, %v779
    %1235 = vadd.xlane.f32.xlu0 %v1203
    %v1236 = vpop.xlane.xlu0 %1235
    %1237 = vadd.xlane.f32.xlu0 %v1204
    %v1238 = vpop.xlane.xlu0 %1237
    %1239 = vadd.xlane.f32.xlu0 %v1205
    %v1240 = vpop.xlane.xlu0 %1239
    %1241 = vadd.xlane.f32.xlu0 %v1206
    %v1242 = vpop.xlane.xlu0 %1241
    %1243 = vadd.xlane.f32.xlu0 %v1207
    %v1244 = vpop.xlane.xlu0 %1243
    %1245 = vadd.xlane.f32.xlu0 %v1208
    %v1246 = vpop.xlane.xlu0 %1245
    %1247 = vadd.xlane.f32.xlu0 %v1209
    %v1248 = vpop.xlane.xlu0 %1247
    %1249 = vadd.xlane.f32.xlu0 %v1210
    %v1250 = vpop.xlane.xlu0 %1249
    %1251 = vadd.xlane.f32.xlu0 %v1211
    %v1252 = vpop.xlane.xlu0 %1251
    %1253 = vadd.xlane.f32.xlu0 %v1212
    %v1254 = vpop.xlane.xlu0 %1253
    %1255 = vadd.xlane.f32.xlu0 %v1213
    %v1256 = vpop.xlane.xlu0 %1255
    %1257 = vadd.xlane.f32.xlu0 %v1214
    %v1258 = vpop.xlane.xlu0 %1257
    %1259 = vadd.xlane.f32.xlu0 %v1215
    %v1260 = vpop.xlane.xlu0 %1259
    %1261 = vadd.xlane.f32.xlu0 %v1216
    %v1262 = vpop.xlane.xlu0 %1261
    %1263 = vadd.xlane.f32.xlu0 %v1217
    %v1264 = vpop.xlane.xlu0 %1263
    %1265 = vadd.xlane.f32.xlu0 %v1218
    %v1266 = vpop.xlane.xlu0 %1265
    %1267 = vadd.xlane.f32.xlu0 %v1219
    %v1268 = vpop.xlane.xlu0 %1267
    %1269 = vadd.xlane.f32.xlu0 %v1220
    %v1270 = vpop.xlane.xlu0 %1269
    %1271 = vadd.xlane.f32.xlu0 %v1221
    %v1272 = vpop.xlane.xlu0 %1271
    %1273 = vadd.xlane.f32.xlu0 %v1222
    %v1274 = vpop.xlane.xlu0 %1273
    %1275 = vadd.xlane.f32.xlu0 %v1223
    %v1276 = vpop.xlane.xlu0 %1275
    %1277 = vadd.xlane.f32.xlu0 %v1224
    %v1278 = vpop.xlane.xlu0 %1277
    %1279 = vadd.xlane.f32.xlu0 %v1225
    %v1280 = vpop.xlane.xlu0 %1279
    %1281 = vadd.xlane.f32.xlu0 %v1226
    %v1282 = vpop.xlane.xlu0 %1281
    %1283 = vadd.xlane.f32.xlu0 %v1227
    %v1284 = vpop.xlane.xlu0 %1283
    %1285 = vadd.xlane.f32.xlu0 %v1228
    %v1286 = vpop.xlane.xlu0 %1285
    %1287 = vadd.xlane.f32.xlu0 %v1229
    %v1288 = vpop.xlane.xlu0 %1287
    %1289 = vadd.xlane.f32.xlu0 %v1230
    %v1290 = vpop.xlane.xlu0 %1289
    %1291 = vadd.xlane.f32.xlu0 %v1231
    %v1292 = vpop.xlane.xlu0 %1291
    %1293 = vadd.xlane.f32.xlu0 %v1232
    %v1294 = vpop.xlane.xlu0 %1293
    %1295 = vadd.xlane.f32.xlu0 %v1233
    %v1296 = vpop.xlane.xlu0 %1295
    %1297 = vadd.xlane.f32.xlu0 %v1234
    %v1298 = vpop.xlane.xlu0 %1297
    %v1299 = vadd.f32 %v812, 1.0
    %v1300 = vadd.f32 %v813, 1.0
    %v1301 = vadd.f32 %v814, 1.0
    %v1302 = vadd.f32 %v815, 1.0
    %v1303 = vadd.f32 %v816, 1.0
    %v1304 = vadd.f32 %v817, 1.0
    %v1305 = vadd.f32 %v818, 1.0
    %v1306 = vadd.f32 %v819, 1.0
    %v1307 = vadd.f32 %v820, 1.0
    %v1308 = vadd.f32 %v821, 1.0
    %v1309 = vadd.f32 %v822, 1.0
    %v1310 = vadd.f32 %v823, 1.0
    %v1311 = vadd.f32 %v824, 1.0
    %v1312 = vadd.f32 %v825, 1.0
    %v1313 = vadd.f32 %v826, 1.0
    %v1314 = vadd.f32 %v827, 1.0
    %v1315 = vadd.f32 %v828, 1.0
    %v1316 = vadd.f32 %v829, 1.0
    %v1317 = vadd.f32 %v830, 1.0
    %v1318 = vadd.f32 %v831, 1.0
    %v1319 = vadd.f32 %v832, 1.0
    %v1320 = vadd.f32 %v833, 1.0
    %v1321 = vadd.f32 %v834, 1.0
    %v1322 = vadd.f32 %v835, 1.0
    %v1323 = vadd.f32 %v836, 1.0
    %v1324 = vadd.f32 %v837, 1.0
    %v1325 = vadd.f32 %v838, 1.0
    %v1326 = vadd.f32 %v839, 1.0
    %v1327 = vadd.f32 %v840, 1.0
    %v1328 = vadd.f32 %v841, 1.0
    %v1329 = vadd.f32 %v842, 1.0
    %v1330 = vadd.f32 %v843, 1.0
    %v1331 = vmul.f32 %v1299, %v1140
    %v1332 = vmul.f32 %v1300, %v1142
    %v1333 = vmul.f32 %v1301, %v1144
    %v1334 = vmul.f32 %v1302, %v1146
    %v1335 = vmul.f32 %v1303, %v1148
    %v1336 = vmul.f32 %v1304, %v1150
    %v1337 = vmul.f32 %v1305, %v1152
    %v1338 = vmul.f32 %v1306, %v1154
    %v1339 = vmul.f32 %v1307, %v1156
    %v1340 = vmul.f32 %v1308, %v1158
    %v1341 = vmul.f32 %v1309, %v1160
    %v1342 = vmul.f32 %v1310, %v1162
    %v1343 = vmul.f32 %v1311, %v1164
    %v1344 = vmul.f32 %v1312, %v1166
    %v1345 = vmul.f32 %v1313, %v1168
    %v1346 = vmul.f32 %v1314, %v1170
    %v1347 = vmul.f32 %v1315, %v1172
    %v1348 = vmul.f32 %v1316, %v1174
    %v1349 = vmul.f32 %v1317, %v1176
    %v1350 = vmul.f32 %v1318, %v1178
    %v1351 = vmul.f32 %v1319, %v1180
    %v1352 = vmul.f32 %v1320, %v1182
    %v1353 = vmul.f32 %v1321, %v1184
    %v1354 = vmul.f32 %v1322, %v1186
    %v1355 = vmul.f32 %v1323, %v1188
    %v1356 = vmul.f32 %v1324, %v1190
    %v1357 = vmul.f32 %v1325, %v1192
    %v1358 = vmul.f32 %v1326, %v1194
    %v1359 = vmul.f32 %v1327, %v1196
    %v1360 = vmul.f32 %v1328, %v1198
    %v1361 = vmul.f32 %v1329, %v1200
    %v1362 = vmul.f32 %v1330, %v1202
    %1395 = vrot.lane.b32.xlu0 %v717, 97
    %v1396 = vpop.permute.xlu0 %1395
    %1397 = vrot.lane.b32.xlu0 %v719, 97
    %v1398 = vpop.permute.xlu0 %1397
    %1399 = vrot.lane.b32.xlu0 %v721, 97
    %v1400 = vpop.permute.xlu0 %1399
    %1401 = vrot.lane.b32.xlu0 %v723, 97
    %v1402 = vpop.permute.xlu0 %1401
    %1403 = vrot.lane.b32.xlu0 %v725, 97
    %v1404 = vpop.permute.xlu0 %1403
    %1405 = vrot.lane.b32.xlu0 %v727, 97
    %v1406 = vpop.permute.xlu0 %1405
    %1407 = vrot.lane.b32.xlu0 %v729, 97
    %v1408 = vpop.permute.xlu0 %1407
    %1409 = vrot.lane.b32.xlu0 %v731, 97
    %v1410 = vpop.permute.xlu0 %1409
    %1411 = vrot.lane.b32.xlu0 %v733, 97
    %v1412 = vpop.permute.xlu0 %1411
    %1413 = vrot.lane.b32.xlu0 %v735, 97
    %v1414 = vpop.permute.xlu0 %1413
    %1415 = vrot.lane.b32.xlu0 %v737, 97
    %v1416 = vpop.permute.xlu0 %1415
    %1417 = vrot.lane.b32.xlu0 %v739, 97
    %v1418 = vpop.permute.xlu0 %1417
    %1419 = vrot.lane.b32.xlu0 %v741, 97
    %v1420 = vpop.permute.xlu0 %1419
    %1421 = vrot.lane.b32.xlu0 %v743, 97
    %v1422 = vpop.permute.xlu0 %1421
    %1423 = vrot.lane.b32.xlu0 %v745, 97
    %v1424 = vpop.permute.xlu0 %1423
    %1425 = vrot.lane.b32.xlu0 %v747, 97
    %v1426 = vpop.permute.xlu0 %1425
    %1427 = vrot.lane.b32.xlu0 %v749, 97
    %v1428 = vpop.permute.xlu0 %1427
    %1429 = vrot.lane.b32.xlu0 %v751, 97
    %v1430 = vpop.permute.xlu0 %1429
    %1431 = vrot.lane.b32.xlu0 %v753, 97
    %v1432 = vpop.permute.xlu0 %1431
    %1433 = vrot.lane.b32.xlu0 %v755, 97
    %v1434 = vpop.permute.xlu0 %1433
    %1435 = vrot.lane.b32.xlu0 %v757, 97
    %v1436 = vpop.permute.xlu0 %1435
    %1437 = vrot.lane.b32.xlu0 %v759, 97
    %v1438 = vpop.permute.xlu0 %1437
    %1439 = vrot.lane.b32.xlu0 %v761, 97
    %v1440 = vpop.permute.xlu0 %1439
    %1441 = vrot.lane.b32.xlu0 %v763, 97
    %v1442 = vpop.permute.xlu0 %1441
    %1443 = vrot.lane.b32.xlu0 %v765, 97
    %v1444 = vpop.permute.xlu0 %1443
    %1445 = vrot.lane.b32.xlu0 %v767, 97
    %v1446 = vpop.permute.xlu0 %1445
    %1447 = vrot.lane.b32.xlu0 %v769, 97
    %v1448 = vpop.permute.xlu0 %1447
    %1449 = vrot.lane.b32.xlu0 %v771, 97
    %v1450 = vpop.permute.xlu0 %1449
    %1451 = vrot.lane.b32.xlu0 %v773, 97
    %v1452 = vpop.permute.xlu0 %1451
    %1453 = vrot.lane.b32.xlu0 %v775, 97
    %v1454 = vpop.permute.xlu0 %1453
    %1455 = vrot.lane.b32.xlu0 %v777, 97
    %v1456 = vpop.permute.xlu0 %1455
    %1457 = vrot.lane.b32.xlu0 %v779, 97
    %v1458 = vpop.permute.xlu0 %1457
    %v1491 = vadd.f32 %v1331, %v1396
    %v1492 = vadd.f32 %v1332, %v1398
    %v1493 = vadd.f32 %v1333, %v1400
    %v1494 = vadd.f32 %v1334, %v1402
    %v1495 = vadd.f32 %v1335, %v1404
    %v1496 = vadd.f32 %v1336, %v1406
    %v1497 = vadd.f32 %v1337, %v1408
    %v1498 = vadd.f32 %v1338, %v1410
    %v1499 = vadd.f32 %v1339, %v1412
    %v1500 = vadd.f32 %v1340, %v1414
    %v1501 = vadd.f32 %v1341, %v1416
    %v1502 = vadd.f32 %v1342, %v1418
    %v1503 = vadd.f32 %v1343, %v1420
    %v1504 = vadd.f32 %v1344, %v1422
    %v1505 = vadd.f32 %v1345, %v1424
    %v1506 = vadd.f32 %v1346, %v1426
    %v1507 = vadd.f32 %v1347, %v1428
    %v1508 = vadd.f32 %v1348, %v1430
    %v1509 = vadd.f32 %v1349, %v1432
    %v1510 = vadd.f32 %v1350, %v1434
    %v1511 = vadd.f32 %v1351, %v1436
    %v1512 = vadd.f32 %v1352, %v1438
    %v1513 = vadd.f32 %v1353, %v1440
    %v1514 = vadd.f32 %v1354, %v1442
    %v1515 = vadd.f32 %v1355, %v1444
    %v1516 = vadd.f32 %v1356, %v1446
    %v1517 = vadd.f32 %v1357, %v1448
    %v1518 = vadd.f32 %v1358, %v1450
    %v1519 = vadd.f32 %v1359, %v1452
    %v1520 = vadd.f32 %v1360, %v1454
    %v1521 = vadd.f32 %v1361, %v1456
    %v1522 = vadd.f32 %v1362, %v1458
    %v1523 = vmul.f32 %v1236, 2.0
    %v1524 = vmul.f32 %v1238, 2.0
    %v1525 = vmul.f32 %v1240, 2.0
    %v1526 = vmul.f32 %v1242, 2.0
    %v1527 = vmul.f32 %v1244, 2.0
    %v1528 = vmul.f32 %v1246, 2.0
    %v1529 = vmul.f32 %v1248, 2.0
    %v1530 = vmul.f32 %v1250, 2.0
    %v1531 = vmul.f32 %v1252, 2.0
    %v1532 = vmul.f32 %v1254, 2.0
    %v1533 = vmul.f32 %v1256, 2.0
    %v1534 = vmul.f32 %v1258, 2.0
    %v1535 = vmul.f32 %v1260, 2.0
    %v1536 = vmul.f32 %v1262, 2.0
    %v1537 = vmul.f32 %v1264, 2.0
    %v1538 = vmul.f32 %v1266, 2.0
    %v1539 = vmul.f32 %v1268, 2.0
    %v1540 = vmul.f32 %v1270, 2.0
    %v1541 = vmul.f32 %v1272, 2.0
    %v1542 = vmul.f32 %v1274, 2.0
    %v1543 = vmul.f32 %v1276, 2.0
    %v1544 = vmul.f32 %v1278, 2.0
    %v1545 = vmul.f32 %v1280, 2.0
    %v1546 = vmul.f32 %v1282, 2.0
    %v1547 = vmul.f32 %v1284, 2.0
    %v1548 = vmul.f32 %v1286, 2.0
    %v1549 = vmul.f32 %v1288, 2.0
    %v1550 = vmul.f32 %v1290, 2.0
    %v1551 = vmul.f32 %v1292, 2.0
    %v1552 = vmul.f32 %v1294, 2.0
    %v1553 = vmul.f32 %v1296, 2.0
    %v1554 = vmul.f32 %v1298, 2.0
    %v1555 = vsub.f32 %v1491, %v1523
    %v1556 = vsub.f32 %v1492, %v1524
    %v1557 = vsub.f32 %v1493, %v1525
    %v1558 = vsub.f32 %v1494, %v1526
    %v1559 = vsub.f32 %v1495, %v1527
    %v1560 = vsub.f32 %v1496, %v1528
    %v1561 = vsub.f32 %v1497, %v1529
    %v1562 = vsub.f32 %v1498, %v1530
    %v1563 = vsub.f32 %v1499, %v1531
    %v1564 = vsub.f32 %v1500, %v1532
    %v1565 = vsub.f32 %v1501, %v1533
    %v1566 = vsub.f32 %v1502, %v1534
    %v1567 = vsub.f32 %v1503, %v1535
    %v1568 = vsub.f32 %v1504, %v1536
    %v1569 = vsub.f32 %v1505, %v1537
    %v1570 = vsub.f32 %v1506, %v1538
    %v1571 = vsub.f32 %v1507, %v1539
    %v1572 = vsub.f32 %v1508, %v1540
    %v1573 = vsub.f32 %v1509, %v1541
    %v1574 = vsub.f32 %v1510, %v1542
    %v1575 = vsub.f32 %v1511, %v1543
    %v1576 = vsub.f32 %v1512, %v1544
    %v1577 = vsub.f32 %v1513, %v1545
    %v1578 = vsub.f32 %v1514, %v1546
    %v1579 = vsub.f32 %v1515, %v1547
    %v1580 = vsub.f32 %v1516, %v1548
    %v1581 = vsub.f32 %v1517, %v1549
    %v1582 = vsub.f32 %v1518, %v1550
    %v1583 = vsub.f32 %v1519, %v1551
    %v1584 = vsub.f32 %v1520, %v1552
    %v1585 = vsub.f32 %v1521, %v1553
    %v1586 = vsub.f32 %v1522, %v1554
    %v1587 = vmax.f32 %v1555, 0.0
    %v1588 = vmax.f32 %v1556, 0.0
    %v1589 = vmax.f32 %v1557, 0.0
    %v1590 = vmax.f32 %v1558, 0.0
    %v1591 = vmax.f32 %v1559, 0.0
    %v1592 = vmax.f32 %v1560, 0.0
    %v1593 = vmax.f32 %v1561, 0.0
    %v1594 = vmax.f32 %v1562, 0.0
    %v1595 = vmax.f32 %v1563, 0.0
    %v1596 = vmax.f32 %v1564, 0.0
    %v1597 = vmax.f32 %v1565, 0.0
    %v1598 = vmax.f32 %v1566, 0.0
    %v1599 = vmax.f32 %v1567, 0.0
    %v1600 = vmax.f32 %v1568, 0.0
    %v1601 = vmax.f32 %v1569, 0.0
    %v1602 = vmax.f32 %v1570, 0.0
    %v1603 = vmax.f32 %v1571, 0.0
    %v1604 = vmax.f32 %v1572, 0.0
    %v1605 = vmax.f32 %v1573, 0.0
    %v1606 = vmax.f32 %v1574, 0.0
    %v1607 = vmax.f32 %v1575, 0.0
    %v1608 = vmax.f32 %v1576, 0.0
    %v1609 = vmax.f32 %v1577, 0.0
    %v1610 = vmax.f32 %v1578, 0.0
    %v1611 = vmax.f32 %v1579, 0.0
    %v1612 = vmax.f32 %v1580, 0.0
    %v1613 = vmax.f32 %v1581, 0.0
    %v1614 = vmax.f32 %v1582, 0.0
    %v1615 = vmax.f32 %v1583, 0.0
    %v1616 = vmax.f32 %v1584, 0.0
    %v1617 = vmax.f32 %v1585, 0.0
    %v1618 = vmax.f32 %v1586, 0.0
    %1619 = vrot.lane.b32.xlu0 %v812, 127
    %v1620 = vpop.permute.xlu0 %1619
    %1621 = vrot.lane.b32.xlu0 %v813, 127
    %v1622 = vpop.permute.xlu0 %1621
    %1623 = vrot.lane.b32.xlu0 %v814, 127
    %v1624 = vpop.permute.xlu0 %1623
    %1625 = vrot.lane.b32.xlu0 %v815, 127
    %v1626 = vpop.permute.xlu0 %1625
    %1627 = vrot.lane.b32.xlu0 %v816, 127
    %v1628 = vpop.permute.xlu0 %1627
    %1629 = vrot.lane.b32.xlu0 %v817, 127
    %v1630 = vpop.permute.xlu0 %1629
    %1631 = vrot.lane.b32.xlu0 %v818, 127
    %v1632 = vpop.permute.xlu0 %1631
    %1633 = vrot.lane.b32.xlu0 %v819, 127
    %v1634 = vpop.permute.xlu0 %1633
    %1635 = vrot.lane.b32.xlu0 %v820, 127
    %v1636 = vpop.permute.xlu0 %1635
    %1637 = vrot.lane.b32.xlu0 %v821, 127
    %v1638 = vpop.permute.xlu0 %1637
    %1639 = vrot.lane.b32.xlu0 %v822, 127
    %v1640 = vpop.permute.xlu0 %1639
    %1641 = vrot.lane.b32.xlu0 %v823, 127
    %v1642 = vpop.permute.xlu0 %1641
    %1643 = vrot.lane.b32.xlu0 %v824, 127
    %v1644 = vpop.permute.xlu0 %1643
    %1645 = vrot.lane.b32.xlu0 %v825, 127
    %v1646 = vpop.permute.xlu0 %1645
    %1647 = vrot.lane.b32.xlu0 %v826, 127
    %v1648 = vpop.permute.xlu0 %1647
    %1649 = vrot.lane.b32.xlu0 %v827, 127
    %v1650 = vpop.permute.xlu0 %1649
    %1651 = vrot.lane.b32.xlu0 %v828, 127
    %v1652 = vpop.permute.xlu0 %1651
    %1653 = vrot.lane.b32.xlu0 %v829, 127
    %v1654 = vpop.permute.xlu0 %1653
    %1655 = vrot.lane.b32.xlu0 %v830, 127
    %v1656 = vpop.permute.xlu0 %1655
    %1657 = vrot.lane.b32.xlu0 %v831, 127
    %v1658 = vpop.permute.xlu0 %1657
    %1659 = vrot.lane.b32.xlu0 %v832, 127
    %v1660 = vpop.permute.xlu0 %1659
    %1661 = vrot.lane.b32.xlu0 %v833, 127
    %v1662 = vpop.permute.xlu0 %1661
    %1663 = vrot.lane.b32.xlu0 %v834, 127
    %v1664 = vpop.permute.xlu0 %1663
    %1665 = vrot.lane.b32.xlu0 %v835, 127
    %v1666 = vpop.permute.xlu0 %1665
    %1667 = vrot.lane.b32.xlu0 %v836, 127
    %v1668 = vpop.permute.xlu0 %1667
    %1669 = vrot.lane.b32.xlu0 %v837, 127
    %v1670 = vpop.permute.xlu0 %1669
    %1671 = vrot.lane.b32.xlu0 %v838, 127
    %v1672 = vpop.permute.xlu0 %1671
    %1673 = vrot.lane.b32.xlu0 %v839, 127
    %v1674 = vpop.permute.xlu0 %1673
    %1675 = vrot.lane.b32.xlu0 %v840, 127
    %v1676 = vpop.permute.xlu0 %1675
    %1677 = vrot.lane.b32.xlu0 %v841, 127
    %v1678 = vpop.permute.xlu0 %1677
    %1679 = vrot.lane.b32.xlu0 %v842, 127
    %v1680 = vpop.permute.xlu0 %1679
    %1681 = vrot.lane.b32.xlu0 %v843, 127
    %v1682 = vpop.permute.xlu0 %1681
    %v1715 = vmul.f32 %v1587, %v1620
    %v1716 = vmul.f32 %v1588, %v1622
    %v1717 = vmul.f32 %v1589, %v1624
    %v1718 = vmul.f32 %v1590, %v1626
    %v1719 = vmul.f32 %v1591, %v1628
    %v1720 = vmul.f32 %v1592, %v1630
    %v1721 = vmul.f32 %v1593, %v1632
    %v1722 = vmul.f32 %v1594, %v1634
    %v1723 = vmul.f32 %v1595, %v1636
    %v1724 = vmul.f32 %v1596, %v1638
    %v1725 = vmul.f32 %v1597, %v1640
    %v1726 = vmul.f32 %v1598, %v1642
    %v1727 = vmul.f32 %v1599, %v1644
    %v1728 = vmul.f32 %v1600, %v1646
    %v1729 = vmul.f32 %v1601, %v1648
    %v1730 = vmul.f32 %v1602, %v1650
    %v1731 = vmul.f32 %v1603, %v1652
    %v1732 = vmul.f32 %v1604, %v1654
    %v1733 = vmul.f32 %v1605, %v1656
    %v1734 = vmul.f32 %v1606, %v1658
    %v1735 = vmul.f32 %v1607, %v1660
    %v1736 = vmul.f32 %v1608, %v1662
    %v1737 = vmul.f32 %v1609, %v1664
    %v1738 = vmul.f32 %v1610, %v1666
    %v1739 = vmul.f32 %v1611, %v1668
    %v1740 = vmul.f32 %v1612, %v1670
    %v1741 = vmul.f32 %v1613, %v1672
    %v1742 = vmul.f32 %v1614, %v1674
    %v1743 = vmul.f32 %v1615, %v1676
    %v1744 = vmul.f32 %v1616, %v1678
    %v1745 = vmul.f32 %v1617, %v1680
    %v1746 = vmul.f32 %v1618, %v1682
    %v1747 = vtanh.pop %v1715
    %v1748 = vtanh.pop %v1716
    %v1749 = vtanh.pop %v1717
    %v1750 = vtanh.pop %v1718
    %v1751 = vtanh.pop %v1719
    %v1752 = vtanh.pop %v1720
    %v1753 = vtanh.pop %v1721
    %v1754 = vtanh.pop %v1722
    %v1755 = vtanh.pop %v1723
    %v1756 = vtanh.pop %v1724
    %v1757 = vtanh.pop %v1725
    %v1758 = vtanh.pop %v1726
    %v1759 = vtanh.pop %v1727
    %v1760 = vtanh.pop %v1728
    %v1761 = vtanh.pop %v1729
    %v1762 = vtanh.pop %v1730
    %v1763 = vtanh.pop %v1731
    %v1764 = vtanh.pop %v1732
    %v1765 = vtanh.pop %v1733
    %v1766 = vtanh.pop %v1734
    %v1767 = vtanh.pop %v1735
    %v1768 = vtanh.pop %v1736
    %v1769 = vtanh.pop %v1737
    %v1770 = vtanh.pop %v1738
    %v1771 = vtanh.pop %v1739
    %v1772 = vtanh.pop %v1740
    %v1773 = vtanh.pop %v1741
    %v1774 = vtanh.pop %v1742
    %v1775 = vtanh.pop %v1743
    %v1776 = vtanh.pop %v1744
    %v1777 = vtanh.pop %v1745
    %v1778 = vtanh.pop %v1746
    %v1779 = vsub.f32 1.0, %v1747
    %v1780 = vsub.f32 1.0, %v1748
    %v1781 = vsub.f32 1.0, %v1749
    %v1782 = vsub.f32 1.0, %v1750
    %v1783 = vsub.f32 1.0, %v1751
    %v1784 = vsub.f32 1.0, %v1752
    %v1785 = vsub.f32 1.0, %v1753
    %v1786 = vsub.f32 1.0, %v1754
    %v1787 = vsub.f32 1.0, %v1755
    %v1788 = vsub.f32 1.0, %v1756
    %v1789 = vsub.f32 1.0, %v1757
    %v1790 = vsub.f32 1.0, %v1758
    %v1791 = vsub.f32 1.0, %v1759
    %v1792 = vsub.f32 1.0, %v1760
    %v1793 = vsub.f32 1.0, %v1761
    %v1794 = vsub.f32 1.0, %v1762
    %v1795 = vsub.f32 1.0, %v1763
    %v1796 = vsub.f32 1.0, %v1764
    %v1797 = vsub.f32 1.0, %v1765
    %v1798 = vsub.f32 1.0, %v1766
    %v1799 = vsub.f32 1.0, %v1767
    %v1800 = vsub.f32 1.0, %v1768
    %v1801 = vsub.f32 1.0, %v1769
    %v1802 = vsub.f32 1.0, %v1770
    %v1803 = vsub.f32 1.0, %v1771
    %v1804 = vsub.f32 1.0, %v1772
    %v1805 = vsub.f32 1.0, %v1773
    %v1806 = vsub.f32 1.0, %v1774
    %v1807 = vsub.f32 1.0, %v1775
    %v1808 = vsub.f32 1.0, %v1776
    %v1809 = vsub.f32 1.0, %v1777
    %v1810 = vsub.f32 1.0, %v1778
    %1812 = vset.pattern.permute.xlu0 1
    %1813 = vperm.xlu0 %1812, %v1779
    %v1814 = vpop.permute.xlu0 %1813
    %1817 = vset.pattern.permute.xlu0 1
    %1818 = vperm.xlu0 %1817, %v1780
    %v1819 = vpop.permute.xlu0 %1818
    %1822 = vset.pattern.permute.xlu0 1
    %1823 = vperm.xlu0 %1822, %v1781
    %v1824 = vpop.permute.xlu0 %1823
    %1827 = vset.pattern.permute.xlu0 1
    %1828 = vperm.xlu0 %1827, %v1782
    %v1829 = vpop.permute.xlu0 %1828
    %1832 = vset.pattern.permute.xlu0 1
    %1833 = vperm.xlu0 %1832, %v1783
    %v1834 = vpop.permute.xlu0 %1833
    %1837 = vset.pattern.permute.xlu0 1
    %1838 = vperm.xlu0 %1837, %v1784
    %v1839 = vpop.permute.xlu0 %1838
    %1842 = vset.pattern.permute.xlu0 1
    %1843 = vperm.xlu0 %1842, %v1785
    %v1844 = vpop.permute.xlu0 %1843
    %1847 = vset.pattern.permute.xlu0 1
    %1848 = vperm.xlu0 %1847, %v1786
    %v1849 = vpop.permute.xlu0 %1848
    %1852 = vset.pattern.permute.xlu0 1
    %1853 = vperm.xlu0 %1852, %v1787
    %v1854 = vpop.permute.xlu0 %1853
    %1857 = vset.pattern.permute.xlu0 1
    %1858 = vperm.xlu0 %1857, %v1788
    %v1859 = vpop.permute.xlu0 %1858
    %1862 = vset.pattern.permute.xlu0 1
    %1863 = vperm.xlu0 %1862, %v1789
    %v1864 = vpop.permute.xlu0 %1863
    %1867 = vset.pattern.permute.xlu0 1
    %1868 = vperm.xlu0 %1867, %v1790
    %v1869 = vpop.permute.xlu0 %1868
    %1872 = vset.pattern.permute.xlu0 1
    %1873 = vperm.xlu0 %1872, %v1791
    %v1874 = vpop.permute.xlu0 %1873
    %1877 = vset.pattern.permute.xlu0 1
    %1878 = vperm.xlu0 %1877, %v1792
    %v1879 = vpop.permute.xlu0 %1878
    %1882 = vset.pattern.permute.xlu0 1
    %1883 = vperm.xlu0 %1882, %v1793
    %v1884 = vpop.permute.xlu0 %1883
    %1887 = vset.pattern.permute.xlu0 1
    %1888 = vperm.xlu0 %1887, %v1794
    %v1889 = vpop.permute.xlu0 %1888
    %1892 = vset.pattern.permute.xlu0 1
    %1893 = vperm.xlu0 %1892, %v1795
    %v1894 = vpop.permute.xlu0 %1893
    %1897 = vset.pattern.permute.xlu0 1
    %1898 = vperm.xlu0 %1897, %v1796
    %v1899 = vpop.permute.xlu0 %1898
    %1902 = vset.pattern.permute.xlu0 1
    %1903 = vperm.xlu0 %1902, %v1797
    %v1904 = vpop.permute.xlu0 %1903
    %1907 = vset.pattern.permute.xlu0 1
    %1908 = vperm.xlu0 %1907, %v1798
    %v1909 = vpop.permute.xlu0 %1908
    %1912 = vset.pattern.permute.xlu0 1
    %1913 = vperm.xlu0 %1912, %v1799
    %v1914 = vpop.permute.xlu0 %1913
    %1917 = vset.pattern.permute.xlu0 1
    %1918 = vperm.xlu0 %1917, %v1800
    %v1919 = vpop.permute.xlu0 %1918
    %1922 = vset.pattern.permute.xlu0 1
    %1923 = vperm.xlu0 %1922, %v1801
    %v1924 = vpop.permute.xlu0 %1923
    %1927 = vset.pattern.permute.xlu0 1
    %1928 = vperm.xlu0 %1927, %v1802
    %v1929 = vpop.permute.xlu0 %1928
    %1932 = vset.pattern.permute.xlu0 1
    %1933 = vperm.xlu0 %1932, %v1803
    %v1934 = vpop.permute.xlu0 %1933
    %1937 = vset.pattern.permute.xlu0 1
    %1938 = vperm.xlu0 %1937, %v1804
    %v1939 = vpop.permute.xlu0 %1938
    %1942 = vset.pattern.permute.xlu0 1
    %1943 = vperm.xlu0 %1942, %v1805
    %v1944 = vpop.permute.xlu0 %1943
    %1947 = vset.pattern.permute.xlu0 1
    %1948 = vperm.xlu0 %1947, %v1806
    %v1949 = vpop.permute.xlu0 %1948
    %1952 = vset.pattern.permute.xlu0 1
    %1953 = vperm.xlu0 %1952, %v1807
    %v1954 = vpop.permute.xlu0 %1953
    %1957 = vset.pattern.permute.xlu0 1
    %1958 = vperm.xlu0 %1957, %v1808
    %v1959 = vpop.permute.xlu0 %1958
    %1962 = vset.pattern.permute.xlu0 1
    %1963 = vperm.xlu0 %1962, %v1809
    %v1964 = vpop.permute.xlu0 %1963
    %1967 = vset.pattern.permute.xlu0 1
    %1968 = vperm.xlu0 %1967, %v1810
    %v1969 = vpop.permute.xlu0 %1968
    %v1971 = vmul.f32 %v1814, %v780
    %v1972 = vmul.f32 %v1819, %v781
    %v1973 = vmul.f32 %v1824, %v782
    %v1974 = vmul.f32 %v1829, %v783
    %v1975 = vmul.f32 %v1834, %v784
    %v1976 = vmul.f32 %v1839, %v785
    %v1977 = vmul.f32 %v1844, %v786
    %v1978 = vmul.f32 %v1849, %v787
    %v1979 = vmul.f32 %v1854, %v788
    %v1980 = vmul.f32 %v1859, %v789
    %v1981 = vmul.f32 %v1864, %v790
    %v1982 = vmul.f32 %v1869, %v791
    %v1983 = vmul.f32 %v1874, %v792
    %v1984 = vmul.f32 %v1879, %v793
    %v1985 = vmul.f32 %v1884, %v794
    %v1986 = vmul.f32 %v1889, %v795
    %v1987 = vmul.f32 %v1894, %v796
    %v1988 = vmul.f32 %v1899, %v797
    %v1989 = vmul.f32 %v1904, %v798
    %v1990 = vmul.f32 %v1909, %v799
    %v1991 = vmul.f32 %v1914, %v800
    %v1992 = vmul.f32 %v1919, %v801
    %v1993 = vmul.f32 %v1924, %v802
    %v1994 = vmul.f32 %v1929, %v803
    %v1995 = vmul.f32 %v1934, %v804
    %v1996 = vmul.f32 %v1939, %v805
    %v1997 = vmul.f32 %v1944, %v806
    %v1998 = vmul.f32 %v1949, %v807
    %v1999 = vmul.f32 %v1954, %v808
    %v2000 = vmul.f32 %v1959, %v809
    %v2001 = vmul.f32 %v1964, %v810
    %v2002 = vmul.f32 %v1969, %v811
    %2004 = vset.pattern.permute.xlu0 1
    %2005 = vperm.xlu0 %2004, %v1747
    %v2006 = vpop.permute.xlu0 %2005
    %2009 = vset.pattern.permute.xlu0 1
    %2010 = vperm.xlu0 %2009, %v1748
    %v2011 = vpop.permute.xlu0 %2010
    %2014 = vset.pattern.permute.xlu0 1
    %2015 = vperm.xlu0 %2014, %v1749
    %v2016 = vpop.permute.xlu0 %2015
    %2019 = vset.pattern.permute.xlu0 1
    %2020 = vperm.xlu0 %2019, %v1750
    %v2021 = vpop.permute.xlu0 %2020
    %2024 = vset.pattern.permute.xlu0 1
    %2025 = vperm.xlu0 %2024, %v1751
    %v2026 = vpop.permute.xlu0 %2025
    %2029 = vset.pattern.permute.xlu0 1
    %2030 = vperm.xlu0 %2029, %v1752
    %v2031 = vpop.permute.xlu0 %2030
    %2034 = vset.pattern.permute.xlu0 1
    %2035 = vperm.xlu0 %2034, %v1753
    %v2036 = vpop.permute.xlu0 %2035
    %2039 = vset.pattern.permute.xlu0 1
    %2040 = vperm.xlu0 %2039, %v1754
    %v2041 = vpop.permute.xlu0 %2040
    %2044 = vset.pattern.permute.xlu0 1
    %2045 = vperm.xlu0 %2044, %v1755
    %v2046 = vpop.permute.xlu0 %2045
    %2049 = vset.pattern.permute.xlu0 1
    %2050 = vperm.xlu0 %2049, %v1756
    %v2051 = vpop.permute.xlu0 %2050
    %2054 = vset.pattern.permute.xlu0 1
    %2055 = vperm.xlu0 %2054, %v1757
    %v2056 = vpop.permute.xlu0 %2055
    %2059 = vset.pattern.permute.xlu0 1
    %2060 = vperm.xlu0 %2059, %v1758
    %v2061 = vpop.permute.xlu0 %2060
    %2064 = vset.pattern.permute.xlu0 1
    %2065 = vperm.xlu0 %2064, %v1759
    %v2066 = vpop.permute.xlu0 %2065
    %2069 = vset.pattern.permute.xlu0 1
    %2070 = vperm.xlu0 %2069, %v1760
    %v2071 = vpop.permute.xlu0 %2070
    %2074 = vset.pattern.permute.xlu0 1
    %2075 = vperm.xlu0 %2074, %v1761
    %v2076 = vpop.permute.xlu0 %2075
    %2079 = vset.pattern.permute.xlu0 1
    %2080 = vperm.xlu0 %2079, %v1762
    %v2081 = vpop.permute.xlu0 %2080
    %2084 = vset.pattern.permute.xlu0 1
    %2085 = vperm.xlu0 %2084, %v1763
    %v2086 = vpop.permute.xlu0 %2085
    %2089 = vset.pattern.permute.xlu0 1
    %2090 = vperm.xlu0 %2089, %v1764
    %v2091 = vpop.permute.xlu0 %2090
    %2094 = vset.pattern.permute.xlu0 1
    %2095 = vperm.xlu0 %2094, %v1765
    %v2096 = vpop.permute.xlu0 %2095
    %2099 = vset.pattern.permute.xlu0 1
    %2100 = vperm.xlu0 %2099, %v1766
    %v2101 = vpop.permute.xlu0 %2100
    %2104 = vset.pattern.permute.xlu0 1
    %2105 = vperm.xlu0 %2104, %v1767
    %v2106 = vpop.permute.xlu0 %2105
    %2109 = vset.pattern.permute.xlu0 1
    %2110 = vperm.xlu0 %2109, %v1768
    %v2111 = vpop.permute.xlu0 %2110
    %2114 = vset.pattern.permute.xlu0 1
    %2115 = vperm.xlu0 %2114, %v1769
    %v2116 = vpop.permute.xlu0 %2115
    %2119 = vset.pattern.permute.xlu0 1
    %2120 = vperm.xlu0 %2119, %v1770
    %v2121 = vpop.permute.xlu0 %2120
    %2124 = vset.pattern.permute.xlu0 1
    %2125 = vperm.xlu0 %2124, %v1771
    %v2126 = vpop.permute.xlu0 %2125
    %2129 = vset.pattern.permute.xlu0 1
    %2130 = vperm.xlu0 %2129, %v1772
    %v2131 = vpop.permute.xlu0 %2130
    %2134 = vset.pattern.permute.xlu0 1
    %2135 = vperm.xlu0 %2134, %v1773
    %v2136 = vpop.permute.xlu0 %2135
    %2139 = vset.pattern.permute.xlu0 1
    %2140 = vperm.xlu0 %2139, %v1774
    %v2141 = vpop.permute.xlu0 %2140
    %2144 = vset.pattern.permute.xlu0 1
    %2145 = vperm.xlu0 %2144, %v1775
    %v2146 = vpop.permute.xlu0 %2145
    %2149 = vset.pattern.permute.xlu0 1
    %2150 = vperm.xlu0 %2149, %v1776
    %v2151 = vpop.permute.xlu0 %2150
    %2154 = vset.pattern.permute.xlu0 1
    %2155 = vperm.xlu0 %2154, %v1777
    %v2156 = vpop.permute.xlu0 %2155
    %2159 = vset.pattern.permute.xlu0 1
    %2160 = vperm.xlu0 %2159, %v1778
    %v2161 = vpop.permute.xlu0 %2160
    %v2163 = vmul.f32 %v2006, %v1075
    %v2164 = vmul.f32 %v2011, %v1076
    %v2165 = vmul.f32 %v2016, %v1077
    %v2166 = vmul.f32 %v2021, %v1078
    %v2167 = vmul.f32 %v2026, %v1079
    %v2168 = vmul.f32 %v2031, %v1080
    %v2169 = vmul.f32 %v2036, %v1081
    %v2170 = vmul.f32 %v2041, %v1082
    %v2171 = vmul.f32 %v2046, %v1083
    %v2172 = vmul.f32 %v2051, %v1084
    %v2173 = vmul.f32 %v2056, %v1085
    %v2174 = vmul.f32 %v2061, %v1086
    %v2175 = vmul.f32 %v2066, %v1087
    %v2176 = vmul.f32 %v2071, %v1088
    %v2177 = vmul.f32 %v2076, %v1089
    %v2178 = vmul.f32 %v2081, %v1090
    %v2179 = vmul.f32 %v2086, %v1091
    %v2180 = vmul.f32 %v2091, %v1092
    %v2181 = vmul.f32 %v2096, %v1093
    %v2182 = vmul.f32 %v2101, %v1094
    %v2183 = vmul.f32 %v2106, %v1095
    %v2184 = vmul.f32 %v2111, %v1096
    %v2185 = vmul.f32 %v2116, %v1097
    %v2186 = vmul.f32 %v2121, %v1098
    %v2187 = vmul.f32 %v2126, %v1099
    %v2188 = vmul.f32 %v2131, %v1100
    %v2189 = vmul.f32 %v2136, %v1101
    %v2190 = vmul.f32 %v2141, %v1102
    %v2191 = vmul.f32 %v2146, %v1103
    %v2192 = vmul.f32 %v2151, %v1104
    %v2193 = vmul.f32 %v2156, %v1105
    %v2194 = vmul.f32 %v2161, %v1106
    %v2195 = vadd.f32 %v1971, %v2163
    %v2196 = vadd.f32 %v1972, %v2164
    %v2197 = vadd.f32 %v1973, %v2165
    %v2198 = vadd.f32 %v1974, %v2166
    %v2199 = vadd.f32 %v1975, %v2167
    %v2200 = vadd.f32 %v1976, %v2168
    %v2201 = vadd.f32 %v1977, %v2169
    %v2202 = vadd.f32 %v1978, %v2170
    %v2203 = vadd.f32 %v1979, %v2171
    %v2204 = vadd.f32 %v1980, %v2172
    %v2205 = vadd.f32 %v1981, %v2173
    %v2206 = vadd.f32 %v1982, %v2174
    %v2207 = vadd.f32 %v1983, %v2175
    %v2208 = vadd.f32 %v1984, %v2176
    %v2209 = vadd.f32 %v1985, %v2177
    %v2210 = vadd.f32 %v1986, %v2178
    %v2211 = vadd.f32 %v1987, %v2179
    %v2212 = vadd.f32 %v1988, %v2180
    %v2213 = vadd.f32 %v1989, %v2181
    %v2214 = vadd.f32 %v1990, %v2182
    %v2215 = vadd.f32 %v1991, %v2183
    %v2216 = vadd.f32 %v1992, %v2184
    %v2217 = vadd.f32 %v1993, %v2185
    %v2218 = vadd.f32 %v1994, %v2186
    %v2219 = vadd.f32 %v1995, %v2187
    %v2220 = vadd.f32 %v1996, %v2188
    %v2221 = vadd.f32 %v1997, %v2189
    %v2222 = vadd.f32 %v1998, %v2190
    %v2223 = vadd.f32 %v1999, %v2191
    %v2224 = vadd.f32 %v2000, %v2192
    %v2225 = vadd.f32 %v2001, %v2193
    %v2226 = vadd.f32 %v2002, %v2194
    %2227 = vst [vmem:[%s5] sm:$0xff] %v2195
    %2228 = vst [vmem:[%s5 + $0x8] sm:$0xff] %v2196
    %2229 = vst [vmem:[%s5 + $0x10] sm:$0xff] %v2197
    %2230 = vst [vmem:[%s5 + $0x18] sm:$0xff] %v2198
    %2231 = vst [vmem:[%s5 + $0x20] sm:$0xff] %v2199
    %2232 = vst [vmem:[%s5 + $0x28] sm:$0xff] %v2200
    %2233 = vst [vmem:[%s5 + $0x30] sm:$0xff] %v2201
    %2234 = vst [vmem:[%s5 + $0x38] sm:$0xff] %v2202
    %2235 = vst [vmem:[%s5 + $0x40] sm:$0xff] %v2203
    %2236 = vst [vmem:[%s5 + $0x48] sm:$0xff] %v2204
    %2237 = vst [vmem:[%s5 + $0x50] sm:$0xff] %v2205
    %2238 = vst [vmem:[%s5 + $0x58] sm:$0xff] %v2206
    %2239 = vst [vmem:[%s5 + $0x60] sm:$0xff] %v2207
    %2240 = vst [vmem:[%s5 + $0x68] sm:$0xff] %v2208
    %2241 = vst [vmem:[%s5 + $0x70] sm:$0xff] %v2209
    %2242 = vst [vmem:[%s5 + $0x78] sm:$0xff] %v2210
    %2243 = vst [vmem:[%s5 + $0x80] sm:$0xff] %v2211
    %2244 = vst [vmem:[%s5 + $0x88] sm:$0xff] %v2212
    %2245 = vst [vmem:[%s5 + $0x90] sm:$0xff] %v2213
    %2246 = vst [vmem:[%s5 + $0x98] sm:$0xff] %v2214
    %2247 = vst [vmem:[%s5 + $0xa0] sm:$0xff] %v2215
    %2248 = vst [vmem:[%s5 + $0xa8] sm:$0xff] %v2216
    %2249 = vst [vmem:[%s5 + $0xb0] sm:$0xff] %v2217
    %2250 = vst [vmem:[%s5 + $0xb8] sm:$0xff] %v2218
    %2251 = vst [vmem:[%s5 + $0xc0] sm:$0xff] %v2219
    %2252 = vst [vmem:[%s5 + $0xc8] sm:$0xff] %v2220
    %2253 = vst [vmem:[%s5 + $0xd0] sm:$0xff] %v2221
    %2254 = vst [vmem:[%s5 + $0xd8] sm:$0xff] %v2222
    %2255 = vst [vmem:[%s5 + $0xe0] sm:$0xff] %v2223
    %2256 = vst [vmem:[%s5 + $0xe8] sm:$0xff] %v2224
    %2257 = vst [vmem:[%s5 + $0xf0] sm:$0xff] %v2225
    %2258 = vst [vmem:[%s5 + $0xf8] sm:$0xff] %v2226
  $region29: #{g2_gnn_forward.8} parent=0 // pred_fallthru
    _
  // Predicated region
  $region30: #{g2_gnn_forward.8} parent=0 // pred_check
    _
  $region31: #{g2_gnn_forward.8} parent=0 // pred_check_branch
    %2260 = sbr.rel (0) target = $region33
  $region32: #{g2_gnn_forward.8} parent=0 // pred_region
    _
  $region33: #{g2_gnn_forward.8} parent=0 // pred_fallthru
    _
  // Predicated region
  $region34: #{g2_gnn_forward.8} parent=0 // pred_check
    _
  $region35: #{g2_gnn_forward.8} parent=0 // pred_check_branch
    %2262 = sbr.rel (0) target = $region37
  $region36: #{g2_gnn_forward.8} parent=0 // pred_region
    _
  $region37: #{g2_gnn_forward.8} parent=0 // pred_fallthru
    _

</llo_original>
